<compile_context>
chip_gen: v5e
topology: v5e:2x2
jax: 0.10.0
libtpu: 0.0.40
codegen_flags: <defaults>
</compile_context>

<pallas_src>
import jax
import jax.numpy as jnp
from jax.experimental import pallas as pl
from jax.experimental.pallas import tpu as pltpu

# Hyperparameters implied by the module (state_space / action_space are free
# in the original script; pick small deterministic values).
STATE_SPACE = 8
ACTION_SPACE = 4
IN_CAT = 2 * STATE_SPACE + ACTION_SPACE   # 20 = width of cat([x, goal, a])
H_EMB = 128                               # obs / goal / act embedding width
H_CAT = 3 * H_EMB                         # 384
H_FC = 720                                # logical hidden width (module spec)
H_FC_PAD = 768                            # lane-aligned padded width (6*128)
OUT_LANES = 128                           # lane-dense output slab; col 0 is q
SLAB_ROWS = 5                             # emb bias / b1 / w2 scale / b2 / bq
BATCH = 2
ROW_PACK = 16                             # bf16 sublane packing for batch rows
MAX_TILE_B = 256                          # MXU-sized batch tile for big calls


def qnet_kernel(xga_ref, w_emb_ref, w1_ref, w2q_ref, wq_ref, slab_ref, out_ref):
    f32 = jnp.float32
    bf16 = jnp.bfloat16

    b_emb = slab_ref[0:1, :H_CAT]        # (1, 384) f32
    b1 = slab_ref[1:2, :]                # (1, 768) f32
    w2_scale = slab_ref[2:3, :]          # (1, 768) f32 per-column dequant scale
    b2 = slab_ref[3:4, :]                # (1, 768) f32
    bq = slab_ref[4:5, :OUT_LANES]       # (1, 128) f32

    # Fused obs/goal/act embeddings: one (tile_b,20) x (20,384) matmul against
    # the block-diagonal embedding weight (== the three separate Linears).
    xga = xga_ref[...].astype(bf16)
    h = jnp.dot(xga, w_emb_ref[...], preferred_element_type=f32)
    h = jnp.maximum(h + b_emb, 0.0)      # (tile_b, 384) == [h_obs|h_goal|h_act]

    # fc1 (384 x 768, zero-padded from 384 x 720); f32 accumulation.
    h1 = jnp.dot(h.astype(bf16), w1_ref[...], preferred_element_type=f32)
    h1 = jnp.maximum(h1 + b1, 0.0)

    # fc2: int8 weight dequantized on the VPU (int8 values are exact in bf16);
    # the per-column scale is folded into the f32 epilogue, so the int8 never
    # touches the MXU -> generation-agnostic (v5e / v6e / v7x).
    w2 = w2q_ref[...].astype(bf16)
    h2 = jnp.dot(h1.astype(bf16), w2, preferred_element_type=f32)
    h2 = jnp.maximum(h2 * w2_scale + b2, 0.0)

    # Final (720 -> 1) projection as VPU multiply + lane reduce (wq kept f32;
    # a degenerate N=1 MXU matmul would waste the systolic array).
    q = jnp.sum(h2 * wq_ref[...], axis=-1, keepdims=True)    # (tile_b, 1) f32

    # Lane-dense output slab: q broadcast across 128 lanes + bias; the caller
    # slices [:, :1].  Avoids masked (tile_b, 1) partial stores.
    out_ref[...] = jnp.broadcast_to(q, out_ref.shape) + bq


def init_params(key):
    """Logical f32 parameters mimicking nn.Linear default (uniform) init.

    Weights stored as (in_features, out_features) so y = x @ W + b, which is
    equivalent to PyTorch's x @ W_torch.T + b.  Biases stored as (1, out).
    """
    def linear(key, fan_in, fan_out):
        kw, kb = jax.random.split(key)
        bound = 1.0 / jnp.sqrt(fan_in)
        w = jax.random.uniform(kw, (fan_in, fan_out), jnp.float32, -bound, bound)
        b = jax.random.uniform(kb, (1, fan_out), jnp.float32, -bound, bound)
        return w, b

    keys = jax.random.split(key, 6)
    w_obs, b_obs = linear(keys[0], STATE_SPACE, H_EMB)
    w_goal, b_goal = linear(keys[1], STATE_SPACE, H_EMB)
    w_act, b_act = linear(keys[2], ACTION_SPACE, H_EMB)
    w1, b1 = linear(keys[3], H_CAT, H_FC)
    w2, b2 = linear(keys[4], H_FC, H_FC)
    wq, bq = linear(keys[5], H_FC, 1)
    return (w_obs, b_obs, w_goal, b_goal, w_act, b_act,
            w1, b1, w2, b2, wq, bq)


def prepare_params(params):
    """One-time conversion of logical f32 params to kernel layout.

    - three embedding Linears fused into one block-diagonal (20, 384) bf16
      weight; biases concatenated.
    - 720-wide dims zero-padded to 768 (exact: padded units are relu(0)=0 and
      padded contraction rows/cols are zero).
    - w1 cast bf16; w2 quantized to int8 with per-column symmetric scales
      (dequantized on the VPU in-kernel); wq kept f32 for the VPU head.
    - all biases + w2 scales packed into one (5, 768) f32 slab.
    """
    (w_obs, b_obs, w_goal, b_goal, w_act, b_act,
     w1, b1, w2, b2, wq, bq) = params
    pad = H_FC_PAD - H_FC
    bf16 = jnp.bfloat16

    # Block-diagonal fused embedding weight.
    w_emb = jnp.zeros((IN_CAT, H_CAT), jnp.float32)
    w_emb = w_emb.at[0:STATE_SPACE, 0:H_EMB].set(w_obs)
    w_emb = w_emb.at[STATE_SPACE:2 * STATE_SPACE, H_EMB:2 * H_EMB].set(w_goal)
    w_emb = w_emb.at[2 * STATE_SPACE:, 2 * H_EMB:].set(w_act)
    b_emb = jnp.concatenate([b_obs, b_goal, b_act], axis=1)        # (1, 384)

    w1p = jnp.pad(w1, ((0, 0), (0, pad)))                          # (384, 768)
    b1p = jnp.pad(b1, ((0, 0), (0, pad)))                          # (1, 768)
    w2p = jnp.pad(w2, ((0, pad), (0, pad)))                        # (768, 768)
    b2p = jnp.pad(b2, ((0, 0), (0, pad)))                          # (1, 768)
    wqp = jnp.pad(wq.reshape(1, H_FC), ((0, 0), (0, pad)))         # (1, 768) f32

    # int8 per-column symmetric quantization of w2 (storage / DMA only).
    col_max = jnp.max(jnp.abs(w2p), axis=0, keepdims=True)         # (1, 768)
    w2_scale = jnp.where(col_max > 0, col_max / 127.0, 1.0)
    w2q = jnp.round(w2p / w2_scale).astype(jnp.int8)               # (768, 768)

    # Bias / scale slab (f32).
    slab = jnp.zeros((SLAB_ROWS, H_FC_PAD), jnp.float32)
    slab = slab.at[0, :H_CAT].set(b_emb[0])
    slab = slab.at[1, :].set(b1p[0])
    slab = slab.at[2, :].set(w2_scale[0])
    slab = slab.at[3, :].set(b2p[0])
    slab = slab.at[4, :OUT_LANES].set(bq[0, 0])

    return (w_emb.astype(bf16), w1p.astype(bf16), w2q, wqp, slab)


@jax.jit
def qnet_forward(x, goal, a, kparams):
    """Fused QNet forward. Returns (batch, 1) f32 Q-values."""
    w_emb, w1p, w2q, wqp, slab = kparams
    batch = x.shape[0]
    if batch >= MAX_TILE_B:
        tile_b = MAX_TILE_B
    else:
        tile_b = ((batch + ROW_PACK - 1) // ROW_PACK) * ROW_PACK
    b_pad = ((batch + tile_b - 1) // tile_b) * tile_b

    xga = jnp.concatenate([x, goal, a], axis=1)                    # (batch, 20)
    xga = jnp.pad(xga, ((0, b_pad - batch), (0, 0)))               # (b_pad, 20)

    grid = (b_pad // tile_b,)
    const = lambda i: (0, 0)   # same block every step -> weight DMA'd once

    out = pl.pallas_call(
        qnet_kernel,
        out_shape=jax.ShapeDtypeStruct((b_pad, OUT_LANES), jnp.float32),
        grid=grid,
        in_specs=[
            pl.BlockSpec((tile_b, IN_CAT), lambda i: (i, 0)),      # activations
            pl.BlockSpec((IN_CAT, H_CAT), const),                  # w_emb (resident)
            pl.BlockSpec((H_CAT, H_FC_PAD), const),                # w1 (resident)
            pl.BlockSpec((H_FC_PAD, H_FC_PAD), const),             # w2 int8 (resident)
            pl.BlockSpec((1, H_FC_PAD), const),                    # wq f32 (resident)
            pl.BlockSpec((SLAB_ROWS, H_FC_PAD), const),            # biases + scales
        ],
        out_specs=pl.BlockSpec((tile_b, OUT_LANES), lambda i: (i, 0)),
        compiler_params=pltpu.CompilerParams(
            dimension_semantics=("parallel",)),
    )(xga, w_emb, w1p, w2q, wqp, slab)
    return out[:batch, :1]


def qnet_reference(x, goal, a, params):
    """Pure-JAX f32 reference matching the PyTorch module semantics."""
    (w_obs, b_obs, w_goal, b_goal, w_act, b_act,
     w1, b1, w2, b2, wq, bq) = params
    h_obs = jnp.maximum(x @ w_obs + b_obs, 0.0)
    h_goal = jnp.maximum(goal @ w_goal + b_goal, 0.0)
    h_act = jnp.maximum(a @ w_act + b_act, 0.0)
    h = jnp.concatenate([h_obs, h_goal, h_act], axis=1)
    h = jnp.maximum(h @ w1 + b1, 0.0)
    h = jnp.maximum(h @ w2 + b2, 0.0)
    return h @ wq + bq


if __name__ == "__main__":
    key = jax.random.PRNGKey(0)
    k_params, k_x, k_g, k_a = jax.random.split(key, 4)

    params = init_params(k_params)
    kparams = prepare_params(params)   # one-time setup, outside the hot path

    x = jax.random.normal(k_x, (BATCH, STATE_SPACE), jnp.float32)
    goal = jax.random.normal(k_g, (BATCH, STATE_SPACE), jnp.float32)
    a = jax.random.normal(k_a, (BATCH, ACTION_SPACE), jnp.float32)

    out = qnet_forward(x, goal, a, kparams)
    jax.block_until_ready(out)
    ref = qnet_reference(x, goal, a, params)
    assert out.shape == (BATCH, 1), out.shape
    # bf16 activations + int8 w2 inside the kernel -> loose tolerance vs the
    # full-f32 reference (measured error is ~1e-3 level).
    assert jnp.allclose(out, ref, atol=5e-2, rtol=5e-2), (out, ref)

    # Exercise the row-padding path with a non-multiple-of-16 batch as well.
    k_x2, k_g2, k_a2 = jax.random.split(k_a, 3)
    x2 = jax.random.normal(k_x2, (20, STATE_SPACE), jnp.float32)
    g2 = jax.random.normal(k_g2, (20, STATE_SPACE), jnp.float32)
    a2 = jax.random.normal(k_a2, (20, ACTION_SPACE), jnp.float32)
    out2 = qnet_forward(x2, g2, a2, kparams)
    jax.block_until_ready(out2)
    ref2 = qnet_reference(x2, g2, a2, params)
    assert out2.shape == (20, 1), out2.shape
    assert jnp.allclose(out2, ref2, atol=5e-2, rtol=5e-2), (out2, ref2)

    print("KERNEL_OK")
</pallas_src>

<mosaic_0001>
module attributes {stable_mosaic.version = 11 : i64} {
  func.func @qnet_kernel(%arg0: i32, %arg1: memref<16x20xf32, #tpu.memory_space<vmem>>, %arg2: memref<20x384xbf16, #tpu.memory_space<vmem>>, %arg3: memref<384x768xbf16, #tpu.memory_space<vmem>>, %arg4: memref<768x768xi8, #tpu.memory_space<vmem>>, %arg5: memref<1x768xf32, #tpu.memory_space<vmem>>, %arg6: memref<5x768xf32, #tpu.memory_space<vmem>>, %arg7: memref<16x128xf32, #tpu.memory_space<vmem>>) attributes {dimension_semantics = [#tpu.dimension_semantics<parallel>], iteration_bounds = array<i64: 1>, scalar_prefetch = 0 : i64, scratch_operands = 0 : i64, tpu.core_type = #tpu.core_type<tc>, window_params = [{transform_indices = @transform_0, window_bounds = array<i64: 16, 20>}, {pipeline_mode = #tpu.pipeline_mode<synchronous>, transform_indices = @transform_1, window_bounds = array<i64: 20, 384>}, {pipeline_mode = #tpu.pipeline_mode<synchronous>, transform_indices = @transform_2, window_bounds = array<i64: 384, 768>}, {pipeline_mode = #tpu.pipeline_mode<synchronous>, transform_indices = @transform_3, window_bounds = array<i64: 768, 768>}, {pipeline_mode = #tpu.pipeline_mode<synchronous>, transform_indices = @transform_4, window_bounds = array<i64: 1, 768>}, {pipeline_mode = #tpu.pipeline_mode<synchronous>, transform_indices = @transform_5, window_bounds = array<i64: 5, 768>}, {transform_indices = @transform_6, window_bounds = array<i64: 16, 128>}]} {
    %c0 = arith.constant 0 : index
    %c0_0 = arith.constant 0 : index
    %0 = vector.load %arg6[%c0, %c0_0] : memref<5x768xf32, #tpu.memory_space<vmem>>, vector<1x384xf32>
    %c1 = arith.constant 1 : index
    %c0_1 = arith.constant 0 : index
    %1 = vector.load %arg6[%c1, %c0_1] : memref<5x768xf32, #tpu.memory_space<vmem>>, vector<1x768xf32>
    %c2 = arith.constant 2 : index
    %c0_2 = arith.constant 0 : index
    %2 = vector.load %arg6[%c2, %c0_2] : memref<5x768xf32, #tpu.memory_space<vmem>>, vector<1x768xf32>
    %c3 = arith.constant 3 : index
    %c0_3 = arith.constant 0 : index
    %3 = vector.load %arg6[%c3, %c0_3] : memref<5x768xf32, #tpu.memory_space<vmem>>, vector<1x768xf32>
    %c4 = arith.constant 4 : index
    %c0_4 = arith.constant 0 : index
    %4 = vector.load %arg6[%c4, %c0_4] : memref<5x768xf32, #tpu.memory_space<vmem>>, vector<1x128xf32>
    %c0_5 = arith.constant 0 : index
    %c0_6 = arith.constant 0 : index
    %5 = vector.load %arg1[%c0_5, %c0_6] : memref<16x20xf32, #tpu.memory_space<vmem>>, vector<16x20xf32>
    %6 = arith.truncf %5 : vector<16x20xf32> to vector<16x20xbf16>
    %c0_7 = arith.constant 0 : index
    %c0_8 = arith.constant 0 : index
    %7 = vector.load %arg2[%c0_7, %c0_8] : memref<20x384xbf16, #tpu.memory_space<vmem>>, vector<20x384xbf16>
    %cst = arith.constant dense<0.000000e+00> : vector<16x384xf32>
    %8 = tpu.matmul %6, %7, %cst {dimension_numbers = #tpu.dot_dimension_numbers<[1], [0], [0], [1], [0, 0, 1, 1], [], []>} : vector<16x20xbf16>, vector<20x384xbf16>, vector<16x384xf32> -> vector<16x384xf32>
    %9 = vector.broadcast %0 : vector<1x384xf32> to vector<16x384xf32>
    %10 = arith.addf %8, %9 : vector<16x384xf32>
    %cst_9 = arith.constant 0.000000e+00 : f32
    %11 = vector.broadcast %cst_9 : f32 to vector<16x384xf32>
    %12 = arith.maximumf %10, %11 : vector<16x384xf32>
    %13 = arith.truncf %12 : vector<16x384xf32> to vector<16x384xbf16>
    %c0_10 = arith.constant 0 : index
    %c0_11 = arith.constant 0 : index
    %14 = vector.load %arg3[%c0_10, %c0_11] : memref<384x768xbf16, #tpu.memory_space<vmem>>, vector<384x768xbf16>
    %cst_12 = arith.constant dense<0.000000e+00> : vector<16x768xf32>
    %15 = tpu.matmul %13, %14, %cst_12 {dimension_numbers = #tpu.dot_dimension_numbers<[1], [0], [0], [1], [0, 0, 1, 1], [], []>} : vector<16x384xbf16>, vector<384x768xbf16>, vector<16x768xf32> -> vector<16x768xf32>
    %16 = vector.broadcast %1 : vector<1x768xf32> to vector<16x768xf32>
    %17 = arith.addf %15, %16 : vector<16x768xf32>
    %cst_13 = arith.constant 0.000000e+00 : f32
    %18 = vector.broadcast %cst_13 : f32 to vector<16x768xf32>
    %19 = arith.maximumf %17, %18 : vector<16x768xf32>
    %c0_14 = arith.constant 0 : index
    %c0_15 = arith.constant 0 : index
    %20 = vector.load %arg4[%c0_14, %c0_15] : memref<768x768xi8, #tpu.memory_space<vmem>>, vector<768x768xi8>
    %21 = arith.sitofp %20 : vector<768x768xi8> to vector<768x768xbf16>
    %22 = arith.truncf %19 : vector<16x768xf32> to vector<16x768xbf16>
    %cst_16 = arith.constant dense<0.000000e+00> : vector<16x768xf32>
    %23 = tpu.matmul %22, %21, %cst_16 {dimension_numbers = #tpu.dot_dimension_numbers<[1], [0], [0], [1], [0, 0, 1, 1], [], []>} : vector<16x768xbf16>, vector<768x768xbf16>, vector<16x768xf32> -> vector<16x768xf32>
    %24 = vector.broadcast %2 : vector<1x768xf32> to vector<16x768xf32>
    %25 = arith.mulf %23, %24 : vector<16x768xf32>
    %26 = vector.broadcast %3 : vector<1x768xf32> to vector<16x768xf32>
    %27 = arith.addf %25, %26 : vector<16x768xf32>
    %cst_17 = arith.constant 0.000000e+00 : f32
    %28 = vector.broadcast %cst_17 : f32 to vector<16x768xf32>
    %29 = arith.maximumf %27, %28 : vector<16x768xf32>
    %c0_18 = arith.constant 0 : index
    %c0_19 = arith.constant 0 : index
    %30 = vector.load %arg5[%c0_18, %c0_19] : memref<1x768xf32, #tpu.memory_space<vmem>>, vector<1x768xf32>
    %31 = vector.broadcast %30 : vector<1x768xf32> to vector<16x768xf32>
    %32 = arith.mulf %29, %31 : vector<16x768xf32>
    %cst_20 = arith.constant dense<0.000000e+00> : vector<16xf32>
    %33 = vector.multi_reduction <add>, %32, %cst_20 [1] : vector<16x768xf32> to vector<16xf32>
    %34 = vector.shape_cast %33 : vector<16xf32> to vector<16x1xf32>
    %35 = vector.shape_cast %34 : vector<16x1xf32> to vector<16x1xf32>
    %36 = vector.broadcast %35 : vector<16x1xf32> to vector<16x128xf32>
    %37 = vector.broadcast %4 : vector<1x128xf32> to vector<16x128xf32>
    %38 = arith.addf %36, %37 : vector<16x128xf32>
    %c0_21 = arith.constant 0 : index
    %c0_22 = arith.constant 0 : index
    %39 = vector.load %arg7[%c0_21, %c0_22] : memref<16x128xf32, #tpu.memory_space<vmem>>, vector<16x128xf32>
    tpu.vector_store %arg7[%c0_21, %c0_22], %38 {strides = array<i32>} : memref<16x128xf32, #tpu.memory_space<vmem>>, vector<16x128xf32>,
    return
  }
  func.func @transform_0(%arg0: i32) -> (i32, i32) {
    %c0_i32 = arith.constant 0 : i32
    %c0_i32_0 = arith.constant 0 : i32
    return %arg0, %c0_i32 : i32, i32
  }
  func.func @transform_1(%arg0: i32) -> (i32, i32) {
    %c0_i32 = arith.constant 0 : i32
    %c0_i32_0 = arith.constant 0 : i32
    %c0_i32_1 = arith.constant 0 : i32
    return %c0_i32, %c0_i32_0 : i32, i32
  }
  func.func @transform_2(%arg0: i32) -> (i32, i32) {
    %c0_i32 = arith.constant 0 : i32
    %c0_i32_0 = arith.constant 0 : i32
    %c0_i32_1 = arith.constant 0 : i32
    return %c0_i32, %c0_i32_0 : i32, i32
  }
  func.func @transform_3(%arg0: i32) -> (i32, i32) {
    %c0_i32 = arith.constant 0 : i32
    %c0_i32_0 = arith.constant 0 : i32
    %c0_i32_1 = arith.constant 0 : i32
    return %c0_i32, %c0_i32_0 : i32, i32
  }
  func.func @transform_4(%arg0: i32) -> (i32, i32) {
    %c0_i32 = arith.constant 0 : i32
    %c0_i32_0 = arith.constant 0 : i32
    %c0_i32_1 = arith.constant 0 : i32
    return %c0_i32, %c0_i32_0 : i32, i32
  }
  func.func @transform_5(%arg0: i32) -> (i32, i32) {
    %c0_i32 = arith.constant 0 : i32
    %c0_i32_0 = arith.constant 0 : i32
    %c0_i32_1 = arith.constant 0 : i32
    return %c0_i32, %c0_i32_0 : i32, i32
  }
  func.func @transform_6(%arg0: i32) -> (i32, i32) {
    %c0_i32 = arith.constant 0 : i32
    %c0_i32_0 = arith.constant 0 : i32
    return %arg0, %c0_i32 : i32, i32
  }
}

</mosaic_0001>

<llo_original>
// kernel: qnet_forward.1
$region0: #{qnet_forward.1}
  #allocation0 [shape = 'u32[]', space=smem, size = 0x4, offset = 0x4, fixed_abs, tag = 'smem constant byte address 0x4 - core index']
  #allocation1 [shape = 'u32[72,128]{1,0:T(1,128)}', space=vmem, size = 0x9000, scoped, tag = 'internal scratch']
  %s0 = inlined_call_operand.vmem [shape: f32[16,20], index: 0, kind: input, shape index: {}]
  %s1 = inlined_call_operand.hbm [shape: bf16[20,384], index: 1, kind: input, shape index: {}]
  %s2 = inlined_call_operand.hbm [shape: bf16[384,768], index: 2, kind: input, shape index: {}]
  %s3 = inlined_call_operand.hbm [shape: s8[768,768], index: 3, kind: input, shape index: {}]
  %s4 = inlined_call_operand.vmem [shape: f32[1,768], index: 4, kind: input, shape index: {}]
  %s5 = inlined_call_operand.hbm [shape: f32[5,768], index: 5, kind: input, shape index: {}]
  %s6 = inlined_call_operand.vmem [shape: f32[16,128], index: 6, kind: output, shape index: {}]
  %s7 = sld [smem:[#allocation0]]
  $region50: #{qnet_forward.1} parent=0
    _
  %s9 = ssub.s32 1, %s7
  %s10 = scalar_select 0, %s9, %s7
  $region1: #{qnet_forward.1} parent=0
    #allocation2 [shape = 'u8[18432]{0}', space=vmem, size = 0x4800, scoped, tag = 'input window, operand 1, single buffered']
    #allocation3 [shape = 's32[1]{0}', space=sflag, size = 0x4, scoped, tag = 'scoped memory for qnet_forward.1']
    #allocation4 [shape = 'u8[589824]{0}', space=vmem, size = 0x90000, scoped, tag = 'input window, operand 2, single buffered']
    #allocation5 [shape = 's32[1]{0}', space=sflag, size = 0x4, scoped, tag = 'scoped memory for qnet_forward.1']
    #allocation6 [shape = 'u8[589824]{0}', space=vmem, size = 0x90000, scoped, tag = 'input window, operand 3, single buffered']
    #allocation7 [shape = 'u8[24576]{0}', space=vmem, size = 0x6000, scoped, tag = 'input window, operand 5, single buffered']
    #allocation8 [shape = 's32[1]{0}', space=sflag, size = 0x4, scoped, tag = 'scoped memory for qnet_forward.1']
    %11 = vsyncpa [#allocation3], 0
    %12 = vsyncpa [#allocation5], 0
    %13 = vsyncpa [#allocation8], 0
    // Predicated region
    $region2: #{qnet_forward.1} parent=1 // pred_check
      _
    $region3: #{qnet_forward.1} parent=1 // pred_check_branch
      %15 = sbr.rel (0) target = $region5
    $region4: #{qnet_forward.1} parent=1 // pred_region
      _
    $region5: #{qnet_forward.1} parent=1 // pred_fallthru
      _
    // Predicated region
    $region6: #{qnet_forward.1} parent=1 // pred_check
      _
    $region7: #{qnet_forward.1} parent=1 // pred_check_branch
      %17 = sbr.rel (0) target = $region9
    $region8: #{qnet_forward.1} parent=1 // pred_region
      %19 = vsyncadd [#allocation3], 0
      %s20 = sshll.u32 %s1, 4
      %s21 = int_to_ptr.hbm [resolvable:$true] %s20
      %s22 = sshll.u32 [#allocation2], 4
      %s23 = int_to_ptr.vmem [resolvable:$true] %s22
      %28 = dma.hbm_to_vmem [thread:$0]  %s21, 576, %s23, [#allocation3], 192, 192, 12
    $region9: #{qnet_forward.1} parent=1 // pred_fallthru
      _
    // Predicated region
    $region10: #{qnet_forward.1} parent=1 // pred_check
      _
    $region11: #{qnet_forward.1} parent=1 // pred_check_branch
      %30 = sbr.rel (0) target = $region13
    $region12: #{qnet_forward.1} parent=1 // pred_region
      %32 = vsyncadd [#allocation5], 0
      %s33 = sshll.u32 %s2, 4
      %s34 = int_to_ptr.hbm [resolvable:$true] %s33
      %s35 = sshll.u32 [#allocation4], 4
      %s36 = int_to_ptr.vmem [resolvable:$true] %s35
      %41 = dma.hbm_to_vmem [thread:$0]  %s34, 18432, %s36, [#allocation5], 384, 384, 24
    $region13: #{qnet_forward.1} parent=1 // pred_fallthru
      _
    // Predicated region
    $region14: #{qnet_forward.1} parent=1 // pred_check
      _
    $region15: #{qnet_forward.1} parent=1 // pred_check_branch
      %43 = sbr.rel (0) target = $region17
    $region16: #{qnet_forward.1} parent=1 // pred_region
      %45 = vsyncadd [#allocation5], 0
      %s46 = sshll.u32 %s3, 4
      %s47 = int_to_ptr.hbm [resolvable:$true] %s46
      %s48 = sshll.u32 [#allocation6], 4
      %s49 = int_to_ptr.vmem [resolvable:$true] %s48
      %54 = dma.hbm_to_vmem [thread:$0]  %s47, 18432, %s49, [#allocation5], 768, 768, 48
    $region17: #{qnet_forward.1} parent=1 // pred_fallthru
      _
    // Predicated region
    $region18: #{qnet_forward.1} parent=1 // pred_check
      _
    $region19: #{qnet_forward.1} parent=1 // pred_check_branch
      %56 = sbr.rel (0) target = $region21
    $region20: #{qnet_forward.1} parent=1 // pred_region
      _
    $region21: #{qnet_forward.1} parent=1 // pred_fallthru
      _
    // Predicated region
    $region22: #{qnet_forward.1} parent=1 // pred_check
      _
    $region23: #{qnet_forward.1} parent=1 // pred_check_branch
      %58 = sbr.rel (0) target = $region25
    $region24: #{qnet_forward.1} parent=1 // pred_region
      %60 = vsyncadd [#allocation8], 0
      %s62 = sshll.u32 %s5, 4
      %s63 = int_to_ptr.hbm [resolvable:$true] %s62
      %s64 = sshll.u32 [#allocation7], 4
      %s65 = int_to_ptr.vmem [resolvable:$true] %s64
      %67 = dma.hbm_to_vmem [thread:$0]  %s63, 768, %s65, [#allocation8]
    $region25: #{qnet_forward.1} parent=1 // pred_fallthru
      _
    // Predicated region
    $region26: #{qnet_forward.1} parent=1 // pred_check
      _
    $region27: #{qnet_forward.1} parent=1 // pred_check_branch
      %69 = sbr.rel (0) target = $region29
    $region28: #{qnet_forward.1} parent=1 // pred_region
      %71 = dma.done [#allocation3], 576
    $region29: #{qnet_forward.1} parent=1 // pred_fallthru
      _
    // Predicated region
    $region30: #{qnet_forward.1} parent=1 // pred_check
      _
    $region31: #{qnet_forward.1} parent=1 // pred_check_branch
      %73 = sbr.rel (0) target = $region33
    $region32: #{qnet_forward.1} parent=1 // pred_region
      %75 = dma.done [#allocation5], 18432
    $region33: #{qnet_forward.1} parent=1 // pred_fallthru
      _
    // Predicated region
    $region34: #{qnet_forward.1} parent=1 // pred_check
      _
    $region35: #{qnet_forward.1} parent=1 // pred_check_branch
      %77 = sbr.rel (0) target = $region37
    $region36: #{qnet_forward.1} parent=1 // pred_region
      %79 = dma.done [#allocation5], 18432
    $region37: #{qnet_forward.1} parent=1 // pred_fallthru
      _
    // Predicated region
    $region38: #{qnet_forward.1} parent=1 // pred_check
      _
    $region39: #{qnet_forward.1} parent=1 // pred_check_branch
      %81 = sbr.rel (0) target = $region41
    $region40: #{qnet_forward.1} parent=1 // pred_region
      %83 = dma.done [#allocation8], 768
    $region41: #{qnet_forward.1} parent=1 // pred_fallthru
      _
    %v85 = vld [vmem:[#allocation7] ss:$8 sm:$0x7]
    %s86 = scalar_lea.vmem [#allocation7], 1
    %v87 = vld [vmem:[%s86] ss:$8 sm:$0xf]
    %v88 = vld [vmem:[%s86] ss:$8 sm:$0x30]
    %v89 = vor.u32 %v87, %v88
    %s90 = scalar_lea.vmem [#allocation7], 2
    %v91 = vld [vmem:[%s90] ss:$8 sm:$0xf]
    %v92 = vld [vmem:[%s90] ss:$8 sm:$0x30]
    %v93 = vor.u32 %v91, %v92
    %s94 = scalar_lea.vmem [#allocation7], 3
    %v95 = vld [vmem:[%s94] ss:$8 sm:$0xf]
    %v96 = vld [vmem:[%s94] ss:$8 sm:$0x30]
    %v97 = vor.u32 %v95, %v96
    %v98 = vld [vmem:[#allocation7 + $0x4] ss:$0 sm:$0xff]
    %v99 = vld [vmem:[%s0] sm:$0xff]
    %v100 = vld [vmem:[%s0 + $0x8] sm:$0xff]
    %v101 = vpack.c.bf16 %v100, %v99
    %v102 = vld [vmem:[#allocation2] sm:$0xff]
    %v103 = vld [vmem:[#allocation2 + $0x8] sm:$0xf]
    %v104 = vld [vmem:[#allocation2 + $0xc] sm:$0xff]
    %v105 = vld [vmem:[#allocation2 + $0x14] sm:$0xf]
    %v106 = vld [vmem:[#allocation2 + $0x18] sm:$0x33]
    %v107 = vld [vmem:[#allocation2 + $0x20] sm:$0x3]
    %v109 = vperm.slane %v85, 0
    %v110 = vperm.slane %v85, 1
    %v111 = vperm.slane %v85, 2
    %v121 = vunpack.c.l.b16 %v102
    %v122 = vunpack.c.h.b16 %v102
    %v123 = vunpack.c.l.b16 %v103
    %v124 = vunpack.c.l.b16 %v104
    %v125 = vunpack.c.h.b16 %v104
    %v126 = vunpack.c.l.b16 %v105
    %v127 = vunpack.c.l.b16 %v106
    %v128 = vunpack.c.h.b16 %v106
    %v129 = vunpack.c.l.b16 %v107
    %v130 = vpack.c.b16 %v124, %v121
    %v131 = vpack.c.b16 %v125, %v122
    %v132 = vpack.c.b16 %v126, %v123
    %v133 = vpack.c.b16 %v127, %v127
    %v134 = vpack.c.b16 %v128, %v128
    %v135 = vpack.c.b16 %v129, %v129
    %vm139 = vcmask 162816
    %v141 = vsel %vm139, %v101, 0
    %vm143 = vcmask 1041408
    %v145 = vsel %vm143, %v133, 0
    %v148 = vsel %vm143, %v134, 0
    %v151 = vsel %vm143, %v135, 0
    %153 = vmatpush.bf16.msra.mxu0 0
    %154 = vmatpush.bf16.msra.mxu0 0
    %155 = vmatpush.bf16.msra.mxu0 0
    %156 = vmatpush.bf16.msra.mxu0 0
    %157 = vmatpush.bf16.msra.mxu0 0
    %158 = vmatpush.bf16.msra.mxu0 0
    %159 = vmatpush.bf16.msra.mxu0 %v145
    %160 = vmatpush.bf16.msra.mxu0 %v130
    %161 = vmatmul.bf16.gmra.mxu0 %v141
    %v162 = vpop.f32.mrf.mxu0
    %v163 = vadd.f32 %v109, %v162
    %v164 = vpop.f32.mrf.mxu0
    %v165 = vadd.f32 %v109, %v164
    %166 = vdwg.mxu0
    %167 = vmatpush.bf16.msra.mxu0 0
    %168 = vmatpush.bf16.msra.mxu0 0
    %169 = vmatpush.bf16.msra.mxu0 0
    %170 = vmatpush.bf16.msra.mxu0 0
    %171 = vmatpush.bf16.msra.mxu0 0
    %172 = vmatpush.bf16.msra.mxu0 0
    %173 = vmatpush.bf16.msra.mxu0 %v148
    %174 = vmatpush.bf16.msra.mxu0 %v131
    %175 = vmatmul.bf16.gmra.mxu0 %v141
    %v176 = vpop.f32.mrf.mxu0
    %v177 = vadd.f32 %v110, %v176
    %v178 = vpop.f32.mrf.mxu0
    %v179 = vadd.f32 %v110, %v178
    %180 = vdwg.mxu0
    %181 = vmatpush.bf16.msra.mxu0 0
    %182 = vmatpush.bf16.msra.mxu0 0
    %183 = vmatpush.bf16.msra.mxu0 0
    %184 = vmatpush.bf16.msra.mxu0 0
    %185 = vmatpush.bf16.msra.mxu0 0
    %186 = vmatpush.bf16.msra.mxu0 0
    %187 = vmatpush.bf16.msra.mxu0 %v151
    %188 = vmatpush.bf16.msra.mxu0 %v132
    %189 = vmatmul.bf16.gmra.mxu0 %v141
    %v190 = vpop.f32.mrf.mxu0
    %v191 = vadd.f32 %v111, %v190
    %v192 = vpop.f32.mrf.mxu0
    %v193 = vadd.f32 %v111, %v192
    %194 = vdwg.mxu0
    %v195 = vmax.f32 %v163, 0.0
    %v196 = vmax.f32 %v177, 0.0
    %v197 = vmax.f32 %v191, 0.0
    %v198 = vmax.f32 %v165, 0.0
    %v199 = vmax.f32 %v179, 0.0
    %v200 = vmax.f32 %v193, 0.0
    %v201 = vpack.c.bf16 %v198, %v195
    %v202 = vpack.c.bf16 %v199, %v196
    %v203 = vpack.c.bf16 %v200, %v197
    %v204 = vld [vmem:[#allocation4] sm:$0xff]
    %v205 = vld [vmem:[#allocation4 + $0x8] sm:$0xff]
    %v206 = vld [vmem:[#allocation4 + $0x10] sm:$0xff]
    %v207 = vld [vmem:[#allocation4 + $0x18] sm:$0xff]
    %v208 = vld [vmem:[#allocation4 + $0x20] sm:$0xff]
    %v209 = vld [vmem:[#allocation4 + $0x28] sm:$0xff]
    %v210 = vld [vmem:[#allocation4 + $0x30] sm:$0xff]
    %v211 = vld [vmem:[#allocation4 + $0x38] sm:$0xff]
    %v212 = vld [vmem:[#allocation4 + $0x40] sm:$0xff]
    %v213 = vld [vmem:[#allocation4 + $0x48] sm:$0xff]
    %v214 = vld [vmem:[#allocation4 + $0x50] sm:$0xff]
    %v215 = vld [vmem:[#allocation4 + $0x58] sm:$0xff]
    %v216 = vld [vmem:[#allocation4 + $0x60] sm:$0xff]
    %v217 = vld [vmem:[#allocation4 + $0x68] sm:$0xff]
    %v218 = vld [vmem:[#allocation4 + $0x70] sm:$0xff]
    %v219 = vld [vmem:[#allocation4 + $0x78] sm:$0xff]
    %v220 = vld [vmem:[#allocation4 + $0x80] sm:$0xff]
    %v221 = vld [vmem:[#allocation4 + $0x88] sm:$0xff]
    %v222 = vld [vmem:[#allocation4 + $0x90] sm:$0xff]
    %v223 = vld [vmem:[#allocation4 + $0x98] sm:$0xff]
    %v224 = vld [vmem:[#allocation4 + $0xa0] sm:$0xff]
    %v225 = vld [vmem:[#allocation4 + $0xa8] sm:$0xff]
    %v226 = vld [vmem:[#allocation4 + $0xb0] sm:$0xff]
    %v227 = vld [vmem:[#allocation4 + $0xb8] sm:$0xff]
    %v228 = vld [vmem:[#allocation4 + $0xc0] sm:$0xff]
    %v229 = vld [vmem:[#allocation4 + $0xc8] sm:$0xff]
    %v230 = vld [vmem:[#allocation4 + $0xd0] sm:$0xff]
    %v231 = vld [vmem:[#allocation4 + $0xd8] sm:$0xff]
    %v232 = vld [vmem:[#allocation4 + $0xe0] sm:$0xff]
    %v233 = vld [vmem:[#allocation4 + $0xe8] sm:$0xff]
    %v234 = vld [vmem:[#allocation4 + $0xf0] sm:$0xff]
    %v235 = vld [vmem:[#allocation4 + $0xf8] sm:$0xff]
    %v236 = vld [vmem:[#allocation4 + $0x100] sm:$0xff]
    %v237 = vld [vmem:[#allocation4 + $0x108] sm:$0xff]
    %v238 = vld [vmem:[#allocation4 + $0x110] sm:$0xff]
    %v239 = vld [vmem:[#allocation4 + $0x118] sm:$0xff]
    %v240 = vld [vmem:[#allocation4 + $0x120] sm:$0xff]
    %v241 = vld [vmem:[#allocation4 + $0x128] sm:$0xff]
    %v242 = vld [vmem:[#allocation4 + $0x130] sm:$0xff]
    %v243 = vld [vmem:[#allocation4 + $0x138] sm:$0xff]
    %v244 = vld [vmem:[#allocation4 + $0x140] sm:$0xff]
    %v245 = vld [vmem:[#allocation4 + $0x148] sm:$0xff]
    %v246 = vld [vmem:[#allocation4 + $0x150] sm:$0xff]
    %v247 = vld [vmem:[#allocation4 + $0x158] sm:$0xff]
    %v248 = vld [vmem:[#allocation4 + $0x160] sm:$0xff]
    %v249 = vld [vmem:[#allocation4 + $0x168] sm:$0xff]
    %v250 = vld [vmem:[#allocation4 + $0x170] sm:$0xff]
    %v251 = vld [vmem:[#allocation4 + $0x178] sm:$0xff]
    %v252 = vld [vmem:[#allocation4 + $0x180] sm:$0xff]
    %v253 = vld [vmem:[#allocation4 + $0x188] sm:$0xff]
    %v254 = vld [vmem:[#allocation4 + $0x190] sm:$0xff]
    %v255 = vld [vmem:[#allocation4 + $0x198] sm:$0xff]
    %v256 = vld [vmem:[#allocation4 + $0x1a0] sm:$0xff]
    %v257 = vld [vmem:[#allocation4 + $0x1a8] sm:$0xff]
    %v258 = vld [vmem:[#allocation4 + $0x1b0] sm:$0xff]
    %v259 = vld [vmem:[#allocation4 + $0x1b8] sm:$0xff]
    %v260 = vld [vmem:[#allocation4 + $0x1c0] sm:$0xff]
    %v261 = vld [vmem:[#allocation4 + $0x1c8] sm:$0xff]
    %v262 = vld [vmem:[#allocation4 + $0x1d0] sm:$0xff]
    %v263 = vld [vmem:[#allocation4 + $0x1d8] sm:$0xff]
    %v264 = vld [vmem:[#allocation4 + $0x1e0] sm:$0xff]
    %v265 = vld [vmem:[#allocation4 + $0x1e8] sm:$0xff]
    %v266 = vld [vmem:[#allocation4 + $0x1f0] sm:$0xff]
    %v267 = vld [vmem:[#allocation4 + $0x1f8] sm:$0xff]
    %v268 = vld [vmem:[#allocation4 + $0x200] sm:$0xff]
    %v269 = vld [vmem:[#allocation4 + $0x208] sm:$0xff]
    %v270 = vld [vmem:[#allocation4 + $0x210] sm:$0xff]
    %v271 = vld [vmem:[#allocation4 + $0x218] sm:$0xff]
    %v272 = vld [vmem:[#allocation4 + $0x220] sm:$0xff]
    %v273 = vld [vmem:[#allocation4 + $0x228] sm:$0xff]
    %v274 = vld [vmem:[#allocation4 + $0x230] sm:$0xff]
    %v275 = vld [vmem:[#allocation4 + $0x238] sm:$0xff]
    %v276 = vld [vmem:[#allocation4 + $0x240] sm:$0xff]
    %v277 = vld [vmem:[#allocation4 + $0x248] sm:$0xff]
    %v278 = vld [vmem:[#allocation4 + $0x250] sm:$0xff]
    %v279 = vld [vmem:[#allocation4 + $0x258] sm:$0xff]
    %v280 = vld [vmem:[#allocation4 + $0x260] sm:$0xff]
    %v281 = vld [vmem:[#allocation4 + $0x268] sm:$0xff]
    %v282 = vld [vmem:[#allocation4 + $0x270] sm:$0xff]
    %v283 = vld [vmem:[#allocation4 + $0x278] sm:$0xff]
    %v284 = vld [vmem:[#allocation4 + $0x280] sm:$0xff]
    %v285 = vld [vmem:[#allocation4 + $0x288] sm:$0xff]
    %v286 = vld [vmem:[#allocation4 + $0x290] sm:$0xff]
    %v287 = vld [vmem:[#allocation4 + $0x298] sm:$0xff]
    %v288 = vld [vmem:[#allocation4 + $0x2a0] sm:$0xff]
    %v289 = vld [vmem:[#allocation4 + $0x2a8] sm:$0xff]
    %v290 = vld [vmem:[#allocation4 + $0x2b0] sm:$0xff]
    %v291 = vld [vmem:[#allocation4 + $0x2b8] sm:$0xff]
    %v292 = vld [vmem:[#allocation4 + $0x2c0] sm:$0xff]
    %v293 = vld [vmem:[#allocation4 + $0x2c8] sm:$0xff]
    %v294 = vld [vmem:[#allocation4 + $0x2d0] sm:$0xff]
    %v295 = vld [vmem:[#allocation4 + $0x2d8] sm:$0xff]
    %v296 = vld [vmem:[#allocation4 + $0x2e0] sm:$0xff]
    %v297 = vld [vmem:[#allocation4 + $0x2e8] sm:$0xff]
    %v298 = vld [vmem:[#allocation4 + $0x2f0] sm:$0xff]
    %v299 = vld [vmem:[#allocation4 + $0x2f8] sm:$0xff]
    %v300 = vld [vmem:[#allocation4 + $0x300] sm:$0xff]
    %v301 = vld [vmem:[#allocation4 + $0x308] sm:$0xff]
    %v302 = vld [vmem:[#allocation4 + $0x310] sm:$0xff]
    %v303 = vld [vmem:[#allocation4 + $0x318] sm:$0xff]
    %v304 = vld [vmem:[#allocation4 + $0x320] sm:$0xff]
    %v305 = vld [vmem:[#allocation4 + $0x328] sm:$0xff]
    %v306 = vld [vmem:[#allocation4 + $0x330] sm:$0xff]
    %v307 = vld [vmem:[#allocation4 + $0x338] sm:$0xff]
    %v308 = vld [vmem:[#allocation4 + $0x340] sm:$0xff]
    %v309 = vld [vmem:[#allocation4 + $0x348] sm:$0xff]
    %v310 = vld [vmem:[#allocation4 + $0x350] sm:$0xff]
    %v311 = vld [vmem:[#allocation4 + $0x358] sm:$0xff]
    %v312 = vld [vmem:[#allocation4 + $0x360] sm:$0xff]
    %v313 = vld [vmem:[#allocation4 + $0x368] sm:$0xff]
    %v314 = vld [vmem:[#allocation4 + $0x370] sm:$0xff]
    %v315 = vld [vmem:[#allocation4 + $0x378] sm:$0xff]
    %v316 = vld [vmem:[#allocation4 + $0x380] sm:$0xff]
    %v317 = vld [vmem:[#allocation4 + $0x388] sm:$0xff]
    %v318 = vld [vmem:[#allocation4 + $0x390] sm:$0xff]
    %v319 = vld [vmem:[#allocation4 + $0x398] sm:$0xff]
    %v320 = vld [vmem:[#allocation4 + $0x3a0] sm:$0xff]
    %v321 = vld [vmem:[#allocation4 + $0x3a8] sm:$0xff]
    %v322 = vld [vmem:[#allocation4 + $0x3b0] sm:$0xff]
    %v323 = vld [vmem:[#allocation4 + $0x3b8] sm:$0xff]
    %v324 = vld [vmem:[#allocation4 + $0x3c0] sm:$0xff]
    %v325 = vld [vmem:[#allocation4 + $0x3c8] sm:$0xff]
    %v326 = vld [vmem:[#allocation4 + $0x3d0] sm:$0xff]
    %v327 = vld [vmem:[#allocation4 + $0x3d8] sm:$0xff]
    %v328 = vld [vmem:[#allocation4 + $0x3e0] sm:$0xff]
    %v329 = vld [vmem:[#allocation4 + $0x3e8] sm:$0xff]
    %v330 = vld [vmem:[#allocation4 + $0x3f0] sm:$0xff]
    %v331 = vld [vmem:[#allocation4 + $0x3f8] sm:$0xff]
    %v332 = vld [vmem:[#allocation4 + $0x400] sm:$0xff]
    %v333 = vld [vmem:[#allocation4 + $0x408] sm:$0xff]
    %v334 = vld [vmem:[#allocation4 + $0x410] sm:$0xff]
    %v335 = vld [vmem:[#allocation4 + $0x418] sm:$0xff]
    %v336 = vld [vmem:[#allocation4 + $0x420] sm:$0xff]
    %v337 = vld [vmem:[#allocation4 + $0x428] sm:$0xff]
    %v338 = vld [vmem:[#allocation4 + $0x430] sm:$0xff]
    %v339 = vld [vmem:[#allocation4 + $0x438] sm:$0xff]
    %v340 = vld [vmem:[#allocation4 + $0x440] sm:$0xff]
    %v341 = vld [vmem:[#allocation4 + $0x448] sm:$0xff]
    %v342 = vld [vmem:[#allocation4 + $0x450] sm:$0xff]
    %v343 = vld [vmem:[#allocation4 + $0x458] sm:$0xff]
    %v344 = vld [vmem:[#allocation4 + $0x460] sm:$0xff]
    %v345 = vld [vmem:[#allocation4 + $0x468] sm:$0xff]
    %v346 = vld [vmem:[#allocation4 + $0x470] sm:$0xff]
    %v347 = vld [vmem:[#allocation4 + $0x478] sm:$0xff]
    %v349 = vperm.slane %v89, 0
    %v350 = vperm.slane %v89, 1
    %v351 = vperm.slane %v89, 2
    %v352 = vperm.slane %v89, 3
    %v353 = vperm.slane %v89, 4
    %v354 = vperm.slane %v89, 5
    %v505 = vunpack.c.l.b16 %v204
    %v506 = vunpack.c.h.b16 %v204
    %v507 = vunpack.c.l.b16 %v205
    %v508 = vunpack.c.h.b16 %v205
    %v509 = vunpack.c.l.b16 %v206
    %v510 = vunpack.c.h.b16 %v206
    %v511 = vunpack.c.l.b16 %v207
    %v512 = vunpack.c.h.b16 %v207
    %v513 = vunpack.c.l.b16 %v208
    %v514 = vunpack.c.h.b16 %v208
    %v515 = vunpack.c.l.b16 %v209
    %v516 = vunpack.c.h.b16 %v209
    %v517 = vunpack.c.l.b16 %v210
    %v518 = vunpack.c.h.b16 %v210
    %v519 = vunpack.c.l.b16 %v211
    %v520 = vunpack.c.h.b16 %v211
    %v521 = vunpack.c.l.b16 %v212
    %v522 = vunpack.c.h.b16 %v212
    %v523 = vunpack.c.l.b16 %v213
    %v524 = vunpack.c.h.b16 %v213
    %v525 = vunpack.c.l.b16 %v214
    %v526 = vunpack.c.h.b16 %v214
    %v527 = vunpack.c.l.b16 %v215
    %v528 = vunpack.c.h.b16 %v215
    %v529 = vunpack.c.l.b16 %v216
    %v530 = vunpack.c.h.b16 %v216
    %v531 = vunpack.c.l.b16 %v217
    %v532 = vunpack.c.h.b16 %v217
    %v533 = vunpack.c.l.b16 %v218
    %v534 = vunpack.c.h.b16 %v218
    %v535 = vunpack.c.l.b16 %v219
    %v536 = vunpack.c.h.b16 %v219
    %v537 = vunpack.c.l.b16 %v220
    %v538 = vunpack.c.h.b16 %v220
    %v539 = vunpack.c.l.b16 %v221
    %v540 = vunpack.c.h.b16 %v221
    %v541 = vunpack.c.l.b16 %v222
    %v542 = vunpack.c.h.b16 %v222
    %v543 = vunpack.c.l.b16 %v223
    %v544 = vunpack.c.h.b16 %v223
    %v545 = vunpack.c.l.b16 %v224
    %v546 = vunpack.c.h.b16 %v224
    %v547 = vunpack.c.l.b16 %v225
    %v548 = vunpack.c.h.b16 %v225
    %v549 = vunpack.c.l.b16 %v226
    %v550 = vunpack.c.h.b16 %v226
    %v551 = vunpack.c.l.b16 %v227
    %v552 = vunpack.c.h.b16 %v227
    %v553 = vunpack.c.l.b16 %v228
    %v554 = vunpack.c.h.b16 %v228
    %v555 = vunpack.c.l.b16 %v229
    %v556 = vunpack.c.h.b16 %v229
    %v557 = vunpack.c.l.b16 %v230
    %v558 = vunpack.c.h.b16 %v230
    %v559 = vunpack.c.l.b16 %v231
    %v560 = vunpack.c.h.b16 %v231
    %v561 = vunpack.c.l.b16 %v232
    %v562 = vunpack.c.h.b16 %v232
    %v563 = vunpack.c.l.b16 %v233
    %v564 = vunpack.c.h.b16 %v233
    %v565 = vunpack.c.l.b16 %v234
    %v566 = vunpack.c.h.b16 %v234
    %v567 = vunpack.c.l.b16 %v235
    %v568 = vunpack.c.h.b16 %v235
    %v569 = vunpack.c.l.b16 %v236
    %v570 = vunpack.c.h.b16 %v236
    %v571 = vunpack.c.l.b16 %v237
    %v572 = vunpack.c.h.b16 %v237
    %v573 = vunpack.c.l.b16 %v238
    %v574 = vunpack.c.h.b16 %v238
    %v575 = vunpack.c.l.b16 %v239
    %v576 = vunpack.c.h.b16 %v239
    %v577 = vunpack.c.l.b16 %v240
    %v578 = vunpack.c.h.b16 %v240
    %v579 = vunpack.c.l.b16 %v241
    %v580 = vunpack.c.h.b16 %v241
    %v581 = vunpack.c.l.b16 %v242
    %v582 = vunpack.c.h.b16 %v242
    %v583 = vunpack.c.l.b16 %v243
    %v584 = vunpack.c.h.b16 %v243
    %v585 = vunpack.c.l.b16 %v244
    %v586 = vunpack.c.h.b16 %v244
    %v587 = vunpack.c.l.b16 %v245
    %v588 = vunpack.c.h.b16 %v245
    %v589 = vunpack.c.l.b16 %v246
    %v590 = vunpack.c.h.b16 %v246
    %v591 = vunpack.c.l.b16 %v247
    %v592 = vunpack.c.h.b16 %v247
    %v593 = vunpack.c.l.b16 %v248
    %v594 = vunpack.c.h.b16 %v248
    %v595 = vunpack.c.l.b16 %v249
    %v596 = vunpack.c.h.b16 %v249
    %v597 = vunpack.c.l.b16 %v250
    %v598 = vunpack.c.h.b16 %v250
    %v599 = vunpack.c.l.b16 %v251
    %v600 = vunpack.c.h.b16 %v251
    %v601 = vunpack.c.l.b16 %v252
    %v602 = vunpack.c.h.b16 %v252
    %v603 = vunpack.c.l.b16 %v253
    %v604 = vunpack.c.h.b16 %v253
    %v605 = vunpack.c.l.b16 %v254
    %v606 = vunpack.c.h.b16 %v254
    %v607 = vunpack.c.l.b16 %v255
    %v608 = vunpack.c.h.b16 %v255
    %v609 = vunpack.c.l.b16 %v256
    %v610 = vunpack.c.h.b16 %v256
    %v611 = vunpack.c.l.b16 %v257
    %v612 = vunpack.c.h.b16 %v257
    %v613 = vunpack.c.l.b16 %v258
    %v614 = vunpack.c.h.b16 %v258
    %v615 = vunpack.c.l.b16 %v259
    %v616 = vunpack.c.h.b16 %v259
    %v617 = vunpack.c.l.b16 %v260
    %v618 = vunpack.c.h.b16 %v260
    %v619 = vunpack.c.l.b16 %v261
    %v620 = vunpack.c.h.b16 %v261
    %v621 = vunpack.c.l.b16 %v262
    %v622 = vunpack.c.h.b16 %v262
    %v623 = vunpack.c.l.b16 %v263
    %v624 = vunpack.c.h.b16 %v263
    %v625 = vunpack.c.l.b16 %v264
    %v626 = vunpack.c.h.b16 %v264
    %v627 = vunpack.c.l.b16 %v265
    %v628 = vunpack.c.h.b16 %v265
    %v629 = vunpack.c.l.b16 %v266
    %v630 = vunpack.c.h.b16 %v266
    %v631 = vunpack.c.l.b16 %v267
    %v632 = vunpack.c.h.b16 %v267
    %v633 = vunpack.c.l.b16 %v268
    %v634 = vunpack.c.h.b16 %v268
    %v635 = vunpack.c.l.b16 %v269
    %v636 = vunpack.c.h.b16 %v269
    %v637 = vunpack.c.l.b16 %v270
    %v638 = vunpack.c.h.b16 %v270
    %v639 = vunpack.c.l.b16 %v271
    %v640 = vunpack.c.h.b16 %v271
    %v641 = vunpack.c.l.b16 %v272
    %v642 = vunpack.c.h.b16 %v272
    %v643 = vunpack.c.l.b16 %v273
    %v644 = vunpack.c.h.b16 %v273
    %v645 = vunpack.c.l.b16 %v274
    %v646 = vunpack.c.h.b16 %v274
    %v647 = vunpack.c.l.b16 %v275
    %v648 = vunpack.c.h.b16 %v275
    %v649 = vunpack.c.l.b16 %v276
    %v650 = vunpack.c.h.b16 %v276
    %v651 = vunpack.c.l.b16 %v277
    %v652 = vunpack.c.h.b16 %v277
    %v653 = vunpack.c.l.b16 %v278
    %v654 = vunpack.c.h.b16 %v278
    %v655 = vunpack.c.l.b16 %v279
    %v656 = vunpack.c.h.b16 %v279
    %v657 = vunpack.c.l.b16 %v280
    %v658 = vunpack.c.h.b16 %v280
    %v659 = vunpack.c.l.b16 %v281
    %v660 = vunpack.c.h.b16 %v281
    %v661 = vunpack.c.l.b16 %v282
    %v662 = vunpack.c.h.b16 %v282
    %v663 = vunpack.c.l.b16 %v283
    %v664 = vunpack.c.h.b16 %v283
    %v665 = vunpack.c.l.b16 %v284
    %v666 = vunpack.c.h.b16 %v284
    %v667 = vunpack.c.l.b16 %v285
    %v668 = vunpack.c.h.b16 %v285
    %v669 = vunpack.c.l.b16 %v286
    %v670 = vunpack.c.h.b16 %v286
    %v671 = vunpack.c.l.b16 %v287
    %v672 = vunpack.c.h.b16 %v287
    %v673 = vunpack.c.l.b16 %v288
    %v674 = vunpack.c.h.b16 %v288
    %v675 = vunpack.c.l.b16 %v289
    %v676 = vunpack.c.h.b16 %v289
    %v677 = vunpack.c.l.b16 %v290
    %v678 = vunpack.c.h.b16 %v290
    %v679 = vunpack.c.l.b16 %v291
    %v680 = vunpack.c.h.b16 %v291
    %v681 = vunpack.c.l.b16 %v292
    %v682 = vunpack.c.h.b16 %v292
    %v683 = vunpack.c.l.b16 %v293
    %v684 = vunpack.c.h.b16 %v293
    %v685 = vunpack.c.l.b16 %v294
    %v686 = vunpack.c.h.b16 %v294
    %v687 = vunpack.c.l.b16 %v295
    %v688 = vunpack.c.h.b16 %v295
    %v689 = vunpack.c.l.b16 %v296
    %v690 = vunpack.c.h.b16 %v296
    %v691 = vunpack.c.l.b16 %v297
    %v692 = vunpack.c.h.b16 %v297
    %v693 = vunpack.c.l.b16 %v298
    %v694 = vunpack.c.h.b16 %v298
    %v695 = vunpack.c.l.b16 %v299
    %v696 = vunpack.c.h.b16 %v299
    %v697 = vunpack.c.l.b16 %v300
    %v698 = vunpack.c.h.b16 %v300
    %v699 = vunpack.c.l.b16 %v301
    %v700 = vunpack.c.h.b16 %v301
    %v701 = vunpack.c.l.b16 %v302
    %v702 = vunpack.c.h.b16 %v302
    %v703 = vunpack.c.l.b16 %v303
    %v704 = vunpack.c.h.b16 %v303
    %v705 = vunpack.c.l.b16 %v304
    %v706 = vunpack.c.h.b16 %v304
    %v707 = vunpack.c.l.b16 %v305
    %v708 = vunpack.c.h.b16 %v305
    %v709 = vunpack.c.l.b16 %v306
    %v710 = vunpack.c.h.b16 %v306
    %v711 = vunpack.c.l.b16 %v307
    %v712 = vunpack.c.h.b16 %v307
    %v713 = vunpack.c.l.b16 %v308
    %v714 = vunpack.c.h.b16 %v308
    %v715 = vunpack.c.l.b16 %v309
    %v716 = vunpack.c.h.b16 %v309
    %v717 = vunpack.c.l.b16 %v310
    %v718 = vunpack.c.h.b16 %v310
    %v719 = vunpack.c.l.b16 %v311
    %v720 = vunpack.c.h.b16 %v311
    %v721 = vunpack.c.l.b16 %v312
    %v722 = vunpack.c.h.b16 %v312
    %v723 = vunpack.c.l.b16 %v313
    %v724 = vunpack.c.h.b16 %v313
    %v725 = vunpack.c.l.b16 %v314
    %v726 = vunpack.c.h.b16 %v314
    %v727 = vunpack.c.l.b16 %v315
    %v728 = vunpack.c.h.b16 %v315
    %v729 = vunpack.c.l.b16 %v316
    %v730 = vunpack.c.h.b16 %v316
    %v731 = vunpack.c.l.b16 %v317
    %v732 = vunpack.c.h.b16 %v317
    %v733 = vunpack.c.l.b16 %v318
    %v734 = vunpack.c.h.b16 %v318
    %v735 = vunpack.c.l.b16 %v319
    %v736 = vunpack.c.h.b16 %v319
    %v737 = vunpack.c.l.b16 %v320
    %v738 = vunpack.c.h.b16 %v320
    %v739 = vunpack.c.l.b16 %v321
    %v740 = vunpack.c.h.b16 %v321
    %v741 = vunpack.c.l.b16 %v322
    %v742 = vunpack.c.h.b16 %v322
    %v743 = vunpack.c.l.b16 %v323
    %v744 = vunpack.c.h.b16 %v323
    %v745 = vunpack.c.l.b16 %v324
    %v746 = vunpack.c.h.b16 %v324
    %v747 = vunpack.c.l.b16 %v325
    %v748 = vunpack.c.h.b16 %v325
    %v749 = vunpack.c.l.b16 %v326
    %v750 = vunpack.c.h.b16 %v326
    %v751 = vunpack.c.l.b16 %v327
    %v752 = vunpack.c.h.b16 %v327
    %v753 = vunpack.c.l.b16 %v328
    %v754 = vunpack.c.h.b16 %v328
    %v755 = vunpack.c.l.b16 %v329
    %v756 = vunpack.c.h.b16 %v329
    %v757 = vunpack.c.l.b16 %v330
    %v758 = vunpack.c.h.b16 %v330
    %v759 = vunpack.c.l.b16 %v331
    %v760 = vunpack.c.h.b16 %v331
    %v761 = vunpack.c.l.b16 %v332
    %v762 = vunpack.c.h.b16 %v332
    %v763 = vunpack.c.l.b16 %v333
    %v764 = vunpack.c.h.b16 %v333
    %v765 = vunpack.c.l.b16 %v334
    %v766 = vunpack.c.h.b16 %v334
    %v767 = vunpack.c.l.b16 %v335
    %v768 = vunpack.c.h.b16 %v335
    %v769 = vunpack.c.l.b16 %v336
    %v770 = vunpack.c.h.b16 %v336
    %v771 = vunpack.c.l.b16 %v337
    %v772 = vunpack.c.h.b16 %v337
    %v773 = vunpack.c.l.b16 %v338
    %v774 = vunpack.c.h.b16 %v338
    %v775 = vunpack.c.l.b16 %v339
    %v776 = vunpack.c.h.b16 %v339
    %v777 = vunpack.c.l.b16 %v340
    %v778 = vunpack.c.h.b16 %v340
    %v779 = vunpack.c.l.b16 %v341
    %v780 = vunpack.c.h.b16 %v341
    %v781 = vunpack.c.l.b16 %v342
    %v782 = vunpack.c.h.b16 %v342
    %v783 = vunpack.c.l.b16 %v343
    %v784 = vunpack.c.h.b16 %v343
    %v785 = vunpack.c.l.b16 %v344
    %v786 = vunpack.c.h.b16 %v344
    %v787 = vunpack.c.l.b16 %v345
    %v788 = vunpack.c.h.b16 %v345
    %v789 = vunpack.c.l.b16 %v346
    %v790 = vunpack.c.h.b16 %v346
    %v791 = vunpack.c.l.b16 %v347
    %v792 = vunpack.c.h.b16 %v347
    %v793 = vpack.c.b16 %v511, %v505
    %v794 = vpack.c.b16 %v512, %v506
    %v795 = vpack.c.b16 %v513, %v507
    %v796 = vpack.c.b16 %v514, %v508
    %v797 = vpack.c.b16 %v515, %v509
    %v798 = vpack.c.b16 %v516, %v510
    %v799 = vpack.c.b16 %v523, %v517
    %v800 = vpack.c.b16 %v524, %v518
    %v801 = vpack.c.b16 %v525, %v519
    %v802 = vpack.c.b16 %v526, %v520
    %v803 = vpack.c.b16 %v527, %v521
    %v804 = vpack.c.b16 %v528, %v522
    %v805 = vpack.c.b16 %v535, %v529
    %v806 = vpack.c.b16 %v536, %v530
    %v807 = vpack.c.b16 %v537, %v531
    %v808 = vpack.c.b16 %v538, %v532
    %v809 = vpack.c.b16 %v539, %v533
    %v810 = vpack.c.b16 %v540, %v534
    %v811 = vpack.c.b16 %v547, %v541
    %v812 = vpack.c.b16 %v548, %v542
    %v813 = vpack.c.b16 %v549, %v543
    %v814 = vpack.c.b16 %v550, %v544
    %v815 = vpack.c.b16 %v551, %v545
    %v816 = vpack.c.b16 %v552, %v546
    %v817 = vpack.c.b16 %v559, %v553
    %v818 = vpack.c.b16 %v560, %v554
    %v819 = vpack.c.b16 %v561, %v555
    %v820 = vpack.c.b16 %v562, %v556
    %v821 = vpack.c.b16 %v563, %v557
    %v822 = vpack.c.b16 %v564, %v558
    %v823 = vpack.c.b16 %v571, %v565
    %v824 = vpack.c.b16 %v572, %v566
    %v825 = vpack.c.b16 %v573, %v567
    %v826 = vpack.c.b16 %v574, %v568
    %v827 = vpack.c.b16 %v575, %v569
    %v828 = vpack.c.b16 %v576, %v570
    %v829 = vpack.c.b16 %v583, %v577
    %v830 = vpack.c.b16 %v584, %v578
    %v831 = vpack.c.b16 %v585, %v579
    %v832 = vpack.c.b16 %v586, %v580
    %v833 = vpack.c.b16 %v587, %v581
    %v834 = vpack.c.b16 %v588, %v582
    %v835 = vpack.c.b16 %v595, %v589
    %v836 = vpack.c.b16 %v596, %v590
    %v837 = vpack.c.b16 %v597, %v591
    %v838 = vpack.c.b16 %v598, %v592
    %v839 = vpack.c.b16 %v599, %v593
    %v840 = vpack.c.b16 %v600, %v594
    %v841 = vpack.c.b16 %v607, %v601
    %v842 = vpack.c.b16 %v608, %v602
    %v843 = vpack.c.b16 %v609, %v603
    %v844 = vpack.c.b16 %v610, %v604
    %v845 = vpack.c.b16 %v611, %v605
    %v846 = vpack.c.b16 %v612, %v606
    %v847 = vpack.c.b16 %v619, %v613
    %v848 = vpack.c.b16 %v620, %v614
    %v849 = vpack.c.b16 %v621, %v615
    %v850 = vpack.c.b16 %v622, %v616
    %v851 = vpack.c.b16 %v623, %v617
    %v852 = vpack.c.b16 %v624, %v618
    %v853 = vpack.c.b16 %v631, %v625
    %v854 = vpack.c.b16 %v632, %v626
    %v855 = vpack.c.b16 %v633, %v627
    %v856 = vpack.c.b16 %v634, %v628
    %v857 = vpack.c.b16 %v635, %v629
    %v858 = vpack.c.b16 %v636, %v630
    %v859 = vpack.c.b16 %v643, %v637
    %v860 = vpack.c.b16 %v644, %v638
    %v861 = vpack.c.b16 %v645, %v639
    %v862 = vpack.c.b16 %v646, %v640
    %v863 = vpack.c.b16 %v647, %v641
    %v864 = vpack.c.b16 %v648, %v642
    %v865 = vpack.c.b16 %v655, %v649
    %v866 = vpack.c.b16 %v656, %v650
    %v867 = vpack.c.b16 %v657, %v651
    %v868 = vpack.c.b16 %v658, %v652
    %v869 = vpack.c.b16 %v659, %v653
    %v870 = vpack.c.b16 %v660, %v654
    %v871 = vpack.c.b16 %v667, %v661
    %v872 = vpack.c.b16 %v668, %v662
    %v873 = vpack.c.b16 %v669, %v663
    %v874 = vpack.c.b16 %v670, %v664
    %v875 = vpack.c.b16 %v671, %v665
    %v876 = vpack.c.b16 %v672, %v666
    %v877 = vpack.c.b16 %v679, %v673
    %v878 = vpack.c.b16 %v680, %v674
    %v879 = vpack.c.b16 %v681, %v675
    %v880 = vpack.c.b16 %v682, %v676
    %v881 = vpack.c.b16 %v683, %v677
    %v882 = vpack.c.b16 %v684, %v678
    %v883 = vpack.c.b16 %v691, %v685
    %v884 = vpack.c.b16 %v692, %v686
    %v885 = vpack.c.b16 %v693, %v687
    %v886 = vpack.c.b16 %v694, %v688
    %v887 = vpack.c.b16 %v695, %v689
    %v888 = vpack.c.b16 %v696, %v690
    %v889 = vpack.c.b16 %v703, %v697
    %v890 = vpack.c.b16 %v704, %v698
    %v891 = vpack.c.b16 %v705, %v699
    %v892 = vpack.c.b16 %v706, %v700
    %v893 = vpack.c.b16 %v707, %v701
    %v894 = vpack.c.b16 %v708, %v702
    %v895 = vpack.c.b16 %v715, %v709
    %v896 = vpack.c.b16 %v716, %v710
    %v897 = vpack.c.b16 %v717, %v711
    %v898 = vpack.c.b16 %v718, %v712
    %v899 = vpack.c.b16 %v719, %v713
    %v900 = vpack.c.b16 %v720, %v714
    %v901 = vpack.c.b16 %v727, %v721
    %v902 = vpack.c.b16 %v728, %v722
    %v903 = vpack.c.b16 %v729, %v723
    %v904 = vpack.c.b16 %v730, %v724
    %v905 = vpack.c.b16 %v731, %v725
    %v906 = vpack.c.b16 %v732, %v726
    %v907 = vpack.c.b16 %v739, %v733
    %v908 = vpack.c.b16 %v740, %v734
    %v909 = vpack.c.b16 %v741, %v735
    %v910 = vpack.c.b16 %v742, %v736
    %v911 = vpack.c.b16 %v743, %v737
    %v912 = vpack.c.b16 %v744, %v738
    %v913 = vpack.c.b16 %v751, %v745
    %v914 = vpack.c.b16 %v752, %v746
    %v915 = vpack.c.b16 %v753, %v747
    %v916 = vpack.c.b16 %v754, %v748
    %v917 = vpack.c.b16 %v755, %v749
    %v918 = vpack.c.b16 %v756, %v750
    %v919 = vpack.c.b16 %v763, %v757
    %v920 = vpack.c.b16 %v764, %v758
    %v921 = vpack.c.b16 %v765, %v759
    %v922 = vpack.c.b16 %v766, %v760
    %v923 = vpack.c.b16 %v767, %v761
    %v924 = vpack.c.b16 %v768, %v762
    %v925 = vpack.c.b16 %v775, %v769
    %v926 = vpack.c.b16 %v776, %v770
    %v927 = vpack.c.b16 %v777, %v771
    %v928 = vpack.c.b16 %v778, %v772
    %v929 = vpack.c.b16 %v779, %v773
    %v930 = vpack.c.b16 %v780, %v774
    %v931 = vpack.c.b16 %v787, %v781
    %v932 = vpack.c.b16 %v788, %v782
    %v933 = vpack.c.b16 %v789, %v783
    %v934 = vpack.c.b16 %v790, %v784
    %v935 = vpack.c.b16 %v791, %v785
    %v936 = vpack.c.b16 %v792, %v786
    %1081 = vmatpush.bf16.msra.mxu0 %v835
    %1082 = vmatpush.bf16.msra.mxu0 %v829
    %1083 = vmatpush.bf16.msra.mxu0 %v823
    %1084 = vmatpush.bf16.msra.mxu0 %v817
    %1085 = vmatpush.bf16.msra.mxu0 %v811
    %1086 = vmatpush.bf16.msra.mxu0 %v805
    %1087 = vmatpush.bf16.msra.mxu0 %v799
    %1088 = vmatpush.bf16.msra.mxu0 %v793
    %1089 = vmatmul.bf16.gmra.mxu0 %v201
    %v1090 = vpop.f32.mrf.mxu0
    %v1091 = vadd.f32 %v349, %v1090
    %v1092 = vpop.f32.mrf.mxu0
    %v1093 = vadd.f32 %v349, %v1092
    %1094 = vdwg.mxu0
    %1095 = vmatpush.bf16.msra.mxu0 %v883
    %1096 = vmatpush.bf16.msra.mxu0 %v877
    %1097 = vmatpush.bf16.msra.mxu0 %v871
    %1098 = vmatpush.bf16.msra.mxu0 %v865
    %1099 = vmatpush.bf16.msra.mxu0 %v859
    %1100 = vmatpush.bf16.msra.mxu0 %v853
    %1101 = vmatpush.bf16.msra.mxu0 %v847
    %1102 = vmatpush.bf16.msra.mxu0 %v841
    %1103 = vmatmul.bf16.gmra.mxu0 %v202
    %v1104 = vpop.f32.mrf.mxu0
    %v1105 = vadd.f32 %v1091, %v1104
    %v1106 = vpop.f32.mrf.mxu0
    %v1107 = vadd.f32 %v1093, %v1106
    %1108 = vdwg.mxu0
    %1109 = vmatpush.bf16.msra.mxu0 %v931
    %1110 = vmatpush.bf16.msra.mxu0 %v925
    %1111 = vmatpush.bf16.msra.mxu0 %v919
    %1112 = vmatpush.bf16.msra.mxu0 %v913
    %1113 = vmatpush.bf16.msra.mxu0 %v907
    %1114 = vmatpush.bf16.msra.mxu0 %v901
    %1115 = vmatpush.bf16.msra.mxu0 %v895
    %1116 = vmatpush.bf16.msra.mxu0 %v889
    %1117 = vmatmul.bf16.gmra.mxu0 %v203
    %v1118 = vpop.f32.mrf.mxu0
    %v1119 = vadd.f32 %v1105, %v1118
    %v1120 = vpop.f32.mrf.mxu0
    %v1121 = vadd.f32 %v1107, %v1120
    %1122 = vdwg.mxu0
    %1123 = vmatpush.bf16.msra.mxu0 %v836
    %1124 = vmatpush.bf16.msra.mxu0 %v830
    %1125 = vmatpush.bf16.msra.mxu0 %v824
    %1126 = vmatpush.bf16.msra.mxu0 %v818
    %1127 = vmatpush.bf16.msra.mxu0 %v812
    %1128 = vmatpush.bf16.msra.mxu0 %v806
    %1129 = vmatpush.bf16.msra.mxu0 %v800
    %1130 = vmatpush.bf16.msra.mxu0 %v794
    %1131 = vmatmul.bf16.gmra.mxu0 %v201
    %v1132 = vpop.f32.mrf.mxu0
    %v1133 = vadd.f32 %v350, %v1132
    %v1134 = vpop.f32.mrf.mxu0
    %v1135 = vadd.f32 %v350, %v1134
    %1136 = vdwg.mxu0
    %1137 = vmatpush.bf16.msra.mxu0 %v884
    %1138 = vmatpush.bf16.msra.mxu0 %v878
    %1139 = vmatpush.bf16.msra.mxu0 %v872
    %1140 = vmatpush.bf16.msra.mxu0 %v866
    %1141 = vmatpush.bf16.msra.mxu0 %v860
    %1142 = vmatpush.bf16.msra.mxu0 %v854
    %1143 = vmatpush.bf16.msra.mxu0 %v848
    %1144 = vmatpush.bf16.msra.mxu0 %v842
    %1145 = vmatmul.bf16.gmra.mxu0 %v202
    %v1146 = vpop.f32.mrf.mxu0
    %v1147 = vadd.f32 %v1133, %v1146
    %v1148 = vpop.f32.mrf.mxu0
    %v1149 = vadd.f32 %v1135, %v1148
    %1150 = vdwg.mxu0
    %1151 = vmatpush.bf16.msra.mxu0 %v932
    %1152 = vmatpush.bf16.msra.mxu0 %v926
    %1153 = vmatpush.bf16.msra.mxu0 %v920
    %1154 = vmatpush.bf16.msra.mxu0 %v914
    %1155 = vmatpush.bf16.msra.mxu0 %v908
    %1156 = vmatpush.bf16.msra.mxu0 %v902
    %1157 = vmatpush.bf16.msra.mxu0 %v896
    %1158 = vmatpush.bf16.msra.mxu0 %v890
    %1159 = vmatmul.bf16.gmra.mxu0 %v203
    %v1160 = vpop.f32.mrf.mxu0
    %v1161 = vadd.f32 %v1147, %v1160
    %v1162 = vpop.f32.mrf.mxu0
    %v1163 = vadd.f32 %v1149, %v1162
    %1164 = vdwg.mxu0
    %1165 = vmatpush.bf16.msra.mxu0 %v837
    %1166 = vmatpush.bf16.msra.mxu0 %v831
    %1167 = vmatpush.bf16.msra.mxu0 %v825
    %1168 = vmatpush.bf16.msra.mxu0 %v819
    %1169 = vmatpush.bf16.msra.mxu0 %v813
    %1170 = vmatpush.bf16.msra.mxu0 %v807
    %1171 = vmatpush.bf16.msra.mxu0 %v801
    %1172 = vmatpush.bf16.msra.mxu0 %v795
    %1173 = vmatmul.bf16.gmra.mxu0 %v201
    %v1174 = vpop.f32.mrf.mxu0
    %v1175 = vadd.f32 %v351, %v1174
    %v1176 = vpop.f32.mrf.mxu0
    %v1177 = vadd.f32 %v351, %v1176
    %1178 = vdwg.mxu0
    %1179 = vmatpush.bf16.msra.mxu0 %v885
    %1180 = vmatpush.bf16.msra.mxu0 %v879
    %1181 = vmatpush.bf16.msra.mxu0 %v873
    %1182 = vmatpush.bf16.msra.mxu0 %v867
    %1183 = vmatpush.bf16.msra.mxu0 %v861
    %1184 = vmatpush.bf16.msra.mxu0 %v855
    %1185 = vmatpush.bf16.msra.mxu0 %v849
    %1186 = vmatpush.bf16.msra.mxu0 %v843
    %1187 = vmatmul.bf16.gmra.mxu0 %v202
    %v1188 = vpop.f32.mrf.mxu0
    %v1189 = vadd.f32 %v1175, %v1188
    %v1190 = vpop.f32.mrf.mxu0
    %v1191 = vadd.f32 %v1177, %v1190
    %1192 = vdwg.mxu0
    %1193 = vmatpush.bf16.msra.mxu0 %v933
    %1194 = vmatpush.bf16.msra.mxu0 %v927
    %1195 = vmatpush.bf16.msra.mxu0 %v921
    %1196 = vmatpush.bf16.msra.mxu0 %v915
    %1197 = vmatpush.bf16.msra.mxu0 %v909
    %1198 = vmatpush.bf16.msra.mxu0 %v903
    %1199 = vmatpush.bf16.msra.mxu0 %v897
    %1200 = vmatpush.bf16.msra.mxu0 %v891
    %1201 = vmatmul.bf16.gmra.mxu0 %v203
    %v1202 = vpop.f32.mrf.mxu0
    %v1203 = vadd.f32 %v1189, %v1202
    %v1204 = vpop.f32.mrf.mxu0
    %v1205 = vadd.f32 %v1191, %v1204
    %1206 = vdwg.mxu0
    %1207 = vmatpush.bf16.msra.mxu0 %v838
    %1208 = vmatpush.bf16.msra.mxu0 %v832
    %1209 = vmatpush.bf16.msra.mxu0 %v826
    %1210 = vmatpush.bf16.msra.mxu0 %v820
    %1211 = vmatpush.bf16.msra.mxu0 %v814
    %1212 = vmatpush.bf16.msra.mxu0 %v808
    %1213 = vmatpush.bf16.msra.mxu0 %v802
    %1214 = vmatpush.bf16.msra.mxu0 %v796
    %1215 = vmatmul.bf16.gmra.mxu0 %v201
    %v1216 = vpop.f32.mrf.mxu0
    %v1217 = vadd.f32 %v352, %v1216
    %v1218 = vpop.f32.mrf.mxu0
    %v1219 = vadd.f32 %v352, %v1218
    %1220 = vdwg.mxu0
    %1221 = vmatpush.bf16.msra.mxu0 %v886
    %1222 = vmatpush.bf16.msra.mxu0 %v880
    %1223 = vmatpush.bf16.msra.mxu0 %v874
    %1224 = vmatpush.bf16.msra.mxu0 %v868
    %1225 = vmatpush.bf16.msra.mxu0 %v862
    %1226 = vmatpush.bf16.msra.mxu0 %v856
    %1227 = vmatpush.bf16.msra.mxu0 %v850
    %1228 = vmatpush.bf16.msra.mxu0 %v844
    %1229 = vmatmul.bf16.gmra.mxu0 %v202
    %v1230 = vpop.f32.mrf.mxu0
    %v1231 = vadd.f32 %v1217, %v1230
    %v1232 = vpop.f32.mrf.mxu0
    %v1233 = vadd.f32 %v1219, %v1232
    %1234 = vdwg.mxu0
    %1235 = vmatpush.bf16.msra.mxu0 %v934
    %1236 = vmatpush.bf16.msra.mxu0 %v928
    %1237 = vmatpush.bf16.msra.mxu0 %v922
    %1238 = vmatpush.bf16.msra.mxu0 %v916
    %1239 = vmatpush.bf16.msra.mxu0 %v910
    %1240 = vmatpush.bf16.msra.mxu0 %v904
    %1241 = vmatpush.bf16.msra.mxu0 %v898
    %1242 = vmatpush.bf16.msra.mxu0 %v892
    %1243 = vmatmul.bf16.gmra.mxu0 %v203
    %v1244 = vpop.f32.mrf.mxu0
    %v1245 = vadd.f32 %v1231, %v1244
    %v1246 = vpop.f32.mrf.mxu0
    %v1247 = vadd.f32 %v1233, %v1246
    %1248 = vdwg.mxu0
    %1249 = vmatpush.bf16.msra.mxu0 %v839
    %1250 = vmatpush.bf16.msra.mxu0 %v833
    %1251 = vmatpush.bf16.msra.mxu0 %v827
    %1252 = vmatpush.bf16.msra.mxu0 %v821
    %1253 = vmatpush.bf16.msra.mxu0 %v815
    %1254 = vmatpush.bf16.msra.mxu0 %v809
    %1255 = vmatpush.bf16.msra.mxu0 %v803
    %1256 = vmatpush.bf16.msra.mxu0 %v797
    %1257 = vmatmul.bf16.gmra.mxu0 %v201
    %v1258 = vpop.f32.mrf.mxu0
    %v1259 = vadd.f32 %v353, %v1258
    %v1260 = vpop.f32.mrf.mxu0
    %v1261 = vadd.f32 %v353, %v1260
    %1262 = vdwg.mxu0
    %1263 = vmatpush.bf16.msra.mxu0 %v887
    %1264 = vmatpush.bf16.msra.mxu0 %v881
    %1265 = vmatpush.bf16.msra.mxu0 %v875
    %1266 = vmatpush.bf16.msra.mxu0 %v869
    %1267 = vmatpush.bf16.msra.mxu0 %v863
    %1268 = vmatpush.bf16.msra.mxu0 %v857
    %1269 = vmatpush.bf16.msra.mxu0 %v851
    %1270 = vmatpush.bf16.msra.mxu0 %v845
    %1271 = vmatmul.bf16.gmra.mxu0 %v202
    %v1272 = vpop.f32.mrf.mxu0
    %v1273 = vadd.f32 %v1259, %v1272
    %v1274 = vpop.f32.mrf.mxu0
    %v1275 = vadd.f32 %v1261, %v1274
    %1276 = vdwg.mxu0
    %1277 = vmatpush.bf16.msra.mxu0 %v935
    %1278 = vmatpush.bf16.msra.mxu0 %v929
    %1279 = vmatpush.bf16.msra.mxu0 %v923
    %1280 = vmatpush.bf16.msra.mxu0 %v917
    %1281 = vmatpush.bf16.msra.mxu0 %v911
    %1282 = vmatpush.bf16.msra.mxu0 %v905
    %1283 = vmatpush.bf16.msra.mxu0 %v899
    %1284 = vmatpush.bf16.msra.mxu0 %v893
    %1285 = vmatmul.bf16.gmra.mxu0 %v203
    %v1286 = vpop.f32.mrf.mxu0
    %v1287 = vadd.f32 %v1273, %v1286
    %v1288 = vpop.f32.mrf.mxu0
    %v1289 = vadd.f32 %v1275, %v1288
    %1290 = vdwg.mxu0
    %1291 = vmatpush.bf16.msra.mxu0 %v840
    %1292 = vmatpush.bf16.msra.mxu0 %v834
    %1293 = vmatpush.bf16.msra.mxu0 %v828
    %1294 = vmatpush.bf16.msra.mxu0 %v822
    %1295 = vmatpush.bf16.msra.mxu0 %v816
    %1296 = vmatpush.bf16.msra.mxu0 %v810
    %1297 = vmatpush.bf16.msra.mxu0 %v804
    %1298 = vmatpush.bf16.msra.mxu0 %v798
    %1299 = vmatmul.bf16.gmra.mxu0 %v201
    %v1300 = vpop.f32.mrf.mxu0
    %v1301 = vadd.f32 %v354, %v1300
    %v1302 = vpop.f32.mrf.mxu0
    %v1303 = vadd.f32 %v354, %v1302
    %1304 = vdwg.mxu0
    %1305 = vmatpush.bf16.msra.mxu0 %v888
    %1306 = vmatpush.bf16.msra.mxu0 %v882
    %1307 = vmatpush.bf16.msra.mxu0 %v876
    %1308 = vmatpush.bf16.msra.mxu0 %v870
    %1309 = vmatpush.bf16.msra.mxu0 %v864
    %1310 = vmatpush.bf16.msra.mxu0 %v858
    %1311 = vmatpush.bf16.msra.mxu0 %v852
    %1312 = vmatpush.bf16.msra.mxu0 %v846
    %1313 = vmatmul.bf16.gmra.mxu0 %v202
    %v1314 = vpop.f32.mrf.mxu0
    %v1315 = vadd.f32 %v1301, %v1314
    %v1316 = vpop.f32.mrf.mxu0
    %v1317 = vadd.f32 %v1303, %v1316
    %1318 = vdwg.mxu0
    %1319 = vmatpush.bf16.msra.mxu0 %v936
    %1320 = vmatpush.bf16.msra.mxu0 %v930
    %1321 = vmatpush.bf16.msra.mxu0 %v924
    %1322 = vmatpush.bf16.msra.mxu0 %v918
    %1323 = vmatpush.bf16.msra.mxu0 %v912
    %1324 = vmatpush.bf16.msra.mxu0 %v906
    %1325 = vmatpush.bf16.msra.mxu0 %v900
    %1326 = vmatpush.bf16.msra.mxu0 %v894
    %1327 = vmatmul.bf16.gmra.mxu0 %v203
    %v1328 = vpop.f32.mrf.mxu0
    %v1329 = vadd.f32 %v1315, %v1328
    %v1330 = vpop.f32.mrf.mxu0
    %v1331 = vadd.f32 %v1317, %v1330
    %1332 = vdwg.mxu0
    %v1333 = vmax.f32 %v1119, 0.0
    %v1334 = vmax.f32 %v1161, 0.0
    %v1335 = vmax.f32 %v1203, 0.0
    %v1336 = vmax.f32 %v1245, 0.0
    %v1337 = vmax.f32 %v1287, 0.0
    %v1338 = vmax.f32 %v1329, 0.0
    %v1339 = vmax.f32 %v1121, 0.0
    %v1340 = vmax.f32 %v1163, 0.0
    %v1341 = vmax.f32 %v1205, 0.0
    %v1342 = vmax.f32 %v1247, 0.0
    %v1343 = vmax.f32 %v1289, 0.0
    %v1344 = vmax.f32 %v1331, 0.0
    %v1345 = vld [vmem:[#allocation6] sm:$0xff]
    %v1346 = vld [vmem:[#allocation6 + $0x8] sm:$0xff]
    %v1347 = vld [vmem:[#allocation6 + $0x10] sm:$0xff]
    %v1348 = vld [vmem:[#allocation6 + $0x18] sm:$0xff]
    %v1349 = vld [vmem:[#allocation6 + $0x20] sm:$0xff]
    %v1350 = vld [vmem:[#allocation6 + $0x28] sm:$0xff]
    %v1351 = vld [vmem:[#allocation6 + $0x30] sm:$0xff]
    %v1352 = vld [vmem:[#allocation6 + $0x38] sm:$0xff]
    %v1353 = vld [vmem:[#allocation6 + $0x40] sm:$0xff]
    %v1354 = vld [vmem:[#allocation6 + $0x48] sm:$0xff]
    %v1355 = vld [vmem:[#allocation6 + $0x50] sm:$0xff]
    %v1356 = vld [vmem:[#allocation6 + $0x58] sm:$0xff]
    %v1357 = vld [vmem:[#allocation6 + $0x60] sm:$0xff]
    %v1358 = vld [vmem:[#allocation6 + $0x68] sm:$0xff]
    %v1359 = vld [vmem:[#allocation6 + $0x70] sm:$0xff]
    %v1360 = vld [vmem:[#allocation6 + $0x78] sm:$0xff]
    %v1361 = vld [vmem:[#allocation6 + $0x80] sm:$0xff]
    %v1362 = vld [vmem:[#allocation6 + $0x88] sm:$0xff]
    %v1363 = vld [vmem:[#allocation6 + $0x90] sm:$0xff]
    %v1364 = vld [vmem:[#allocation6 + $0x98] sm:$0xff]
    %v1365 = vld [vmem:[#allocation6 + $0xa0] sm:$0xff]
    %v1366 = vld [vmem:[#allocation6 + $0xa8] sm:$0xff]
    %v1367 = vld [vmem:[#allocation6 + $0xb0] sm:$0xff]
    %v1368 = vld [vmem:[#allocation6 + $0xb8] sm:$0xff]
    %v1369 = vld [vmem:[#allocation6 + $0xc0] sm:$0xff]
    %v1370 = vld [vmem:[#allocation6 + $0xc8] sm:$0xff]
    %v1371 = vld [vmem:[#allocation6 + $0xd0] sm:$0xff]
    %v1372 = vld [vmem:[#allocation6 + $0xd8] sm:$0xff]
    %v1373 = vld [vmem:[#allocation6 + $0xe0] sm:$0xff]
    %v1374 = vld [vmem:[#allocation6 + $0xe8] sm:$0xff]
    %v1375 = vld [vmem:[#allocation6 + $0xf0] sm:$0xff]
    %v1376 = vld [vmem:[#allocation6 + $0xf8] sm:$0xff]
    %v1377 = vld [vmem:[#allocation6 + $0x100] sm:$0xff]
    %v1378 = vld [vmem:[#allocation6 + $0x108] sm:$0xff]
    %v1379 = vld [vmem:[#allocation6 + $0x110] sm:$0xff]
    %v1380 = vld [vmem:[#allocation6 + $0x118] sm:$0xff]
    %v1381 = vld [vmem:[#allocation6 + $0x120] sm:$0xff]
    %v1382 = vld [vmem:[#allocation6 + $0x128] sm:$0xff]
    %v1383 = vld [vmem:[#allocation6 + $0x130] sm:$0xff]
    %v1384 = vld [vmem:[#allocation6 + $0x138] sm:$0xff]
    %v1385 = vld [vmem:[#allocation6 + $0x140] sm:$0xff]
    %v1386 = vld [vmem:[#allocation6 + $0x148] sm:$0xff]
    %v1387 = vld [vmem:[#allocation6 + $0x150] sm:$0xff]
    %v1388 = vld [vmem:[#allocation6 + $0x158] sm:$0xff]
    %v1389 = vld [vmem:[#allocation6 + $0x160] sm:$0xff]
    %v1390 = vld [vmem:[#allocation6 + $0x168] sm:$0xff]
    %v1391 = vld [vmem:[#allocation6 + $0x170] sm:$0xff]
    %v1392 = vld [vmem:[#allocation6 + $0x178] sm:$0xff]
    %v1393 = vld [vmem:[#allocation6 + $0x180] sm:$0xff]
    %v1394 = vld [vmem:[#allocation6 + $0x188] sm:$0xff]
    %v1395 = vld [vmem:[#allocation6 + $0x190] sm:$0xff]
    %v1396 = vld [vmem:[#allocation6 + $0x198] sm:$0xff]
    %v1397 = vld [vmem:[#allocation6 + $0x1a0] sm:$0xff]
    %v1398 = vld [vmem:[#allocation6 + $0x1a8] sm:$0xff]
    %v1399 = vld [vmem:[#allocation6 + $0x1b0] sm:$0xff]
    %v1400 = vld [vmem:[#allocation6 + $0x1b8] sm:$0xff]
    %v1401 = vld [vmem:[#allocation6 + $0x1c0] sm:$0xff]
    %v1402 = vld [vmem:[#allocation6 + $0x1c8] sm:$0xff]
    %v1403 = vld [vmem:[#allocation6 + $0x1d0] sm:$0xff]
    %v1404 = vld [vmem:[#allocation6 + $0x1d8] sm:$0xff]
    %v1405 = vld [vmem:[#allocation6 + $0x1e0] sm:$0xff]
    %v1406 = vld [vmem:[#allocation6 + $0x1e8] sm:$0xff]
    %v1407 = vld [vmem:[#allocation6 + $0x1f0] sm:$0xff]
    %v1408 = vld [vmem:[#allocation6 + $0x1f8] sm:$0xff]
    %v1409 = vld [vmem:[#allocation6 + $0x200] sm:$0xff]
    %v1410 = vld [vmem:[#allocation6 + $0x208] sm:$0xff]
    %v1411 = vld [vmem:[#allocation6 + $0x210] sm:$0xff]
    %v1412 = vld [vmem:[#allocation6 + $0x218] sm:$0xff]
    %v1413 = vld [vmem:[#allocation6 + $0x220] sm:$0xff]
    %v1414 = vld [vmem:[#allocation6 + $0x228] sm:$0xff]
    %v1415 = vld [vmem:[#allocation6 + $0x230] sm:$0xff]
    %v1416 = vld [vmem:[#allocation6 + $0x238] sm:$0xff]
    %v1417 = vld [vmem:[#allocation6 + $0x240] sm:$0xff]
    %v1418 = vld [vmem:[#allocation6 + $0x248] sm:$0xff]
    %v1419 = vld [vmem:[#allocation6 + $0x250] sm:$0xff]
    %v1420 = vld [vmem:[#allocation6 + $0x258] sm:$0xff]
    %v1421 = vld [vmem:[#allocation6 + $0x260] sm:$0xff]
    %v1422 = vld [vmem:[#allocation6 + $0x268] sm:$0xff]
    %v1423 = vld [vmem:[#allocation6 + $0x270] sm:$0xff]
    %v1424 = vld [vmem:[#allocation6 + $0x278] sm:$0xff]
    %v1425 = vld [vmem:[#allocation6 + $0x280] sm:$0xff]
    %v1426 = vld [vmem:[#allocation6 + $0x288] sm:$0xff]
    %v1427 = vld [vmem:[#allocation6 + $0x290] sm:$0xff]
    %v1428 = vld [vmem:[#allocation6 + $0x298] sm:$0xff]
    %v1429 = vld [vmem:[#allocation6 + $0x2a0] sm:$0xff]
    %v1430 = vld [vmem:[#allocation6 + $0x2a8] sm:$0xff]
    %v1431 = vld [vmem:[#allocation6 + $0x2b0] sm:$0xff]
    %v1432 = vld [vmem:[#allocation6 + $0x2b8] sm:$0xff]
    %v1433 = vld [vmem:[#allocation6 + $0x2c0] sm:$0xff]
    %v1434 = vld [vmem:[#allocation6 + $0x2c8] sm:$0xff]
    %v1435 = vld [vmem:[#allocation6 + $0x2d0] sm:$0xff]
    %v1436 = vld [vmem:[#allocation6 + $0x2d8] sm:$0xff]
    %v1437 = vld [vmem:[#allocation6 + $0x2e0] sm:$0xff]
    %v1438 = vld [vmem:[#allocation6 + $0x2e8] sm:$0xff]
    %v1439 = vld [vmem:[#allocation6 + $0x2f0] sm:$0xff]
    %v1440 = vld [vmem:[#allocation6 + $0x2f8] sm:$0xff]
    %v1441 = vld [vmem:[#allocation6 + $0x300] sm:$0xff]
    %v1442 = vld [vmem:[#allocation6 + $0x308] sm:$0xff]
    %v1443 = vld [vmem:[#allocation6 + $0x310] sm:$0xff]
    %v1444 = vld [vmem:[#allocation6 + $0x318] sm:$0xff]
    %v1445 = vld [vmem:[#allocation6 + $0x320] sm:$0xff]
    %v1446 = vld [vmem:[#allocation6 + $0x328] sm:$0xff]
    %v1447 = vld [vmem:[#allocation6 + $0x330] sm:$0xff]
    %v1448 = vld [vmem:[#allocation6 + $0x338] sm:$0xff]
    %v1449 = vld [vmem:[#allocation6 + $0x340] sm:$0xff]
    %v1450 = vld [vmem:[#allocation6 + $0x348] sm:$0xff]
    %v1451 = vld [vmem:[#allocation6 + $0x350] sm:$0xff]
    %v1452 = vld [vmem:[#allocation6 + $0x358] sm:$0xff]
    %v1453 = vld [vmem:[#allocation6 + $0x360] sm:$0xff]
    %v1454 = vld [vmem:[#allocation6 + $0x368] sm:$0xff]
    %v1455 = vld [vmem:[#allocation6 + $0x370] sm:$0xff]
    %v1456 = vld [vmem:[#allocation6 + $0x378] sm:$0xff]
    %v1457 = vld [vmem:[#allocation6 + $0x380] sm:$0xff]
    %v1458 = vld [vmem:[#allocation6 + $0x388] sm:$0xff]
    %v1459 = vld [vmem:[#allocation6 + $0x390] sm:$0xff]
    %v1460 = vld [vmem:[#allocation6 + $0x398] sm:$0xff]
    %v1461 = vld [vmem:[#allocation6 + $0x3a0] sm:$0xff]
    %v1462 = vld [vmem:[#allocation6 + $0x3a8] sm:$0xff]
    %v1463 = vld [vmem:[#allocation6 + $0x3b0] sm:$0xff]
    %v1464 = vld [vmem:[#allocation6 + $0x3b8] sm:$0xff]
    %v1465 = vld [vmem:[#allocation6 + $0x3c0] sm:$0xff]
    %v1466 = vld [vmem:[#allocation6 + $0x3c8] sm:$0xff]
    %v1467 = vld [vmem:[#allocation6 + $0x3d0] sm:$0xff]
    %v1468 = vld [vmem:[#allocation6 + $0x3d8] sm:$0xff]
    %v1469 = vld [vmem:[#allocation6 + $0x3e0] sm:$0xff]
    %v1470 = vld [vmem:[#allocation6 + $0x3e8] sm:$0xff]
    %v1471 = vld [vmem:[#allocation6 + $0x3f0] sm:$0xff]
    %v1472 = vld [vmem:[#allocation6 + $0x3f8] sm:$0xff]
    %v1473 = vld [vmem:[#allocation6 + $0x400] sm:$0xff]
    %v1474 = vld [vmem:[#allocation6 + $0x408] sm:$0xff]
    %v1475 = vld [vmem:[#allocation6 + $0x410] sm:$0xff]
    %v1476 = vld [vmem:[#allocation6 + $0x418] sm:$0xff]
    %v1477 = vld [vmem:[#allocation6 + $0x420] sm:$0xff]
    %v1478 = vld [vmem:[#allocation6 + $0x428] sm:$0xff]
    %v1479 = vld [vmem:[#allocation6 + $0x430] sm:$0xff]
    %v1480 = vld [vmem:[#allocation6 + $0x438] sm:$0xff]
    %v1481 = vld [vmem:[#allocation6 + $0x440] sm:$0xff]
    %v1482 = vld [vmem:[#allocation6 + $0x448] sm:$0xff]
    %v1483 = vld [vmem:[#allocation6 + $0x450] sm:$0xff]
    %v1484 = vld [vmem:[#allocation6 + $0x458] sm:$0xff]
    %v1485 = vld [vmem:[#allocation6 + $0x460] sm:$0xff]
    %v1486 = vld [vmem:[#allocation6 + $0x468] sm:$0xff]
    %v1487 = vld [vmem:[#allocation6 + $0x470] sm:$0xff]
    %v1488 = vld [vmem:[#allocation6 + $0x478] sm:$0xff]
    %v1489 = vunpack.c.0.s8 %v1345
    %v1490 = vunpack.c.0.s8 %v1346
    %v1491 = vunpack.c.0.s8 %v1347
    %v1492 = vunpack.c.0.s8 %v1348
    %v1493 = vunpack.c.0.s8 %v1349
    %v1494 = vunpack.c.0.s8 %v1350
    %v1495 = vunpack.c.1.s8 %v1345
    %v1496 = vunpack.c.1.s8 %v1346
    %v1497 = vunpack.c.1.s8 %v1347
    %v1498 = vunpack.c.1.s8 %v1348
    %v1499 = vunpack.c.1.s8 %v1349
    %v1500 = vunpack.c.1.s8 %v1350
    %v1501 = vunpack.c.2.s8 %v1345
    %v1502 = vunpack.c.2.s8 %v1346
    %v1503 = vunpack.c.2.s8 %v1347
    %v1504 = vunpack.c.2.s8 %v1348
    %v1505 = vunpack.c.2.s8 %v1349
    %v1506 = vunpack.c.2.s8 %v1350
    %v1507 = vunpack.c.3.s8 %v1345
    %v1508 = vunpack.c.3.s8 %v1346
    %v1509 = vunpack.c.3.s8 %v1347
    %v1510 = vunpack.c.3.s8 %v1348
    %v1511 = vunpack.c.3.s8 %v1349
    %v1512 = vunpack.c.3.s8 %v1350
    %v1513 = vunpack.c.0.s8 %v1351
    %v1514 = vunpack.c.0.s8 %v1352
    %v1515 = vunpack.c.0.s8 %v1353
    %v1516 = vunpack.c.0.s8 %v1354
    %v1517 = vunpack.c.0.s8 %v1355
    %v1518 = vunpack.c.0.s8 %v1356
    %v1519 = vunpack.c.1.s8 %v1351
    %v1520 = vunpack.c.1.s8 %v1352
    %v1521 = vunpack.c.1.s8 %v1353
    %v1522 = vunpack.c.1.s8 %v1354
    %v1523 = vunpack.c.1.s8 %v1355
    %v1524 = vunpack.c.1.s8 %v1356
    %v1525 = vunpack.c.2.s8 %v1351
    %v1526 = vunpack.c.2.s8 %v1352
    %v1527 = vunpack.c.2.s8 %v1353
    %v1528 = vunpack.c.2.s8 %v1354
    %v1529 = vunpack.c.2.s8 %v1355
    %v1530 = vunpack.c.2.s8 %v1356
    %v1531 = vunpack.c.3.s8 %v1351
    %v1532 = vunpack.c.3.s8 %v1352
    %v1533 = vunpack.c.3.s8 %v1353
    %v1534 = vunpack.c.3.s8 %v1354
    %v1535 = vunpack.c.3.s8 %v1355
    %v1536 = vunpack.c.3.s8 %v1356
    %v1537 = vunpack.c.0.s8 %v1357
    %v1538 = vunpack.c.0.s8 %v1358
    %v1539 = vunpack.c.0.s8 %v1359
    %v1540 = vunpack.c.0.s8 %v1360
    %v1541 = vunpack.c.0.s8 %v1361
    %v1542 = vunpack.c.0.s8 %v1362
    %v1543 = vunpack.c.1.s8 %v1357
    %v1544 = vunpack.c.1.s8 %v1358
    %v1545 = vunpack.c.1.s8 %v1359
    %v1546 = vunpack.c.1.s8 %v1360
    %v1547 = vunpack.c.1.s8 %v1361
    %v1548 = vunpack.c.1.s8 %v1362
    %v1549 = vunpack.c.2.s8 %v1357
    %v1550 = vunpack.c.2.s8 %v1358
    %v1551 = vunpack.c.2.s8 %v1359
    %v1552 = vunpack.c.2.s8 %v1360
    %v1553 = vunpack.c.2.s8 %v1361
    %v1554 = vunpack.c.2.s8 %v1362
    %v1555 = vunpack.c.3.s8 %v1357
    %v1556 = vunpack.c.3.s8 %v1358
    %v1557 = vunpack.c.3.s8 %v1359
    %v1558 = vunpack.c.3.s8 %v1360
    %v1559 = vunpack.c.3.s8 %v1361
    %v1560 = vunpack.c.3.s8 %v1362
    %v1561 = vunpack.c.0.s8 %v1363
    %v1562 = vunpack.c.0.s8 %v1364
    %v1563 = vunpack.c.0.s8 %v1365
    %v1564 = vunpack.c.0.s8 %v1366
    %v1565 = vunpack.c.0.s8 %v1367
    %v1566 = vunpack.c.0.s8 %v1368
    %v1567 = vunpack.c.1.s8 %v1363
    %v1568 = vunpack.c.1.s8 %v1364
    %v1569 = vunpack.c.1.s8 %v1365
    %v1570 = vunpack.c.1.s8 %v1366
    %v1571 = vunpack.c.1.s8 %v1367
    %v1572 = vunpack.c.1.s8 %v1368
    %v1573 = vunpack.c.2.s8 %v1363
    %v1574 = vunpack.c.2.s8 %v1364
    %v1575 = vunpack.c.2.s8 %v1365
    %v1576 = vunpack.c.2.s8 %v1366
    %v1577 = vunpack.c.2.s8 %v1367
    %v1578 = vunpack.c.2.s8 %v1368
    %v1579 = vunpack.c.3.s8 %v1363
    %v1580 = vunpack.c.3.s8 %v1364
    %v1581 = vunpack.c.3.s8 %v1365
    %v1582 = vunpack.c.3.s8 %v1366
    %v1583 = vunpack.c.3.s8 %v1367
    %v1584 = vunpack.c.3.s8 %v1368
    %v1585 = vunpack.c.0.s8 %v1369
    %v1586 = vunpack.c.0.s8 %v1370
    %v1587 = vunpack.c.0.s8 %v1371
    %v1588 = vunpack.c.0.s8 %v1372
    %v1589 = vunpack.c.0.s8 %v1373
    %v1590 = vunpack.c.0.s8 %v1374
    %v1591 = vunpack.c.1.s8 %v1369
    %v1592 = vunpack.c.1.s8 %v1370
    %v1593 = vunpack.c.1.s8 %v1371
    %v1594 = vunpack.c.1.s8 %v1372
    %v1595 = vunpack.c.1.s8 %v1373
    %v1596 = vunpack.c.1.s8 %v1374
    %v1597 = vunpack.c.2.s8 %v1369
    %v1598 = vunpack.c.2.s8 %v1370
    %v1599 = vunpack.c.2.s8 %v1371
    %v1600 = vunpack.c.2.s8 %v1372
    %v1601 = vunpack.c.2.s8 %v1373
    %v1602 = vunpack.c.2.s8 %v1374
    %v1603 = vunpack.c.3.s8 %v1369
    %v1604 = vunpack.c.3.s8 %v1370
    %v1605 = vunpack.c.3.s8 %v1371
    %v1606 = vunpack.c.3.s8 %v1372
    %v1607 = vunpack.c.3.s8 %v1373
    %v1608 = vunpack.c.3.s8 %v1374
    %v1609 = vunpack.c.0.s8 %v1375
    %v1610 = vunpack.c.0.s8 %v1376
    %v1611 = vunpack.c.0.s8 %v1377
    %v1612 = vunpack.c.0.s8 %v1378
    %v1613 = vunpack.c.0.s8 %v1379
    %v1614 = vunpack.c.0.s8 %v1380
    %v1615 = vunpack.c.1.s8 %v1375
    %v1616 = vunpack.c.1.s8 %v1376
    %v1617 = vunpack.c.1.s8 %v1377
    %v1618 = vunpack.c.1.s8 %v1378
    %v1619 = vunpack.c.1.s8 %v1379
    %v1620 = vunpack.c.1.s8 %v1380
    %v1621 = vunpack.c.2.s8 %v1375
    %v1622 = vunpack.c.2.s8 %v1376
    %v1623 = vunpack.c.2.s8 %v1377
    %v1624 = vunpack.c.2.s8 %v1378
    %v1625 = vunpack.c.2.s8 %v1379
    %v1626 = vunpack.c.2.s8 %v1380
    %v1627 = vunpack.c.3.s8 %v1375
    %v1628 = vunpack.c.3.s8 %v1376
    %v1629 = vunpack.c.3.s8 %v1377
    %v1630 = vunpack.c.3.s8 %v1378
    %v1631 = vunpack.c.3.s8 %v1379
    %v1632 = vunpack.c.3.s8 %v1380
    %v1633 = vunpack.c.0.s8 %v1381
    %v1634 = vunpack.c.0.s8 %v1382
    %v1635 = vunpack.c.0.s8 %v1383
    %v1636 = vunpack.c.0.s8 %v1384
    %v1637 = vunpack.c.0.s8 %v1385
    %v1638 = vunpack.c.0.s8 %v1386
    %v1639 = vunpack.c.1.s8 %v1381
    %v1640 = vunpack.c.1.s8 %v1382
    %v1641 = vunpack.c.1.s8 %v1383
    %v1642 = vunpack.c.1.s8 %v1384
    %v1643 = vunpack.c.1.s8 %v1385
    %v1644 = vunpack.c.1.s8 %v1386
    %v1645 = vunpack.c.2.s8 %v1381
    %v1646 = vunpack.c.2.s8 %v1382
    %v1647 = vunpack.c.2.s8 %v1383
    %v1648 = vunpack.c.2.s8 %v1384
    %v1649 = vunpack.c.2.s8 %v1385
    %v1650 = vunpack.c.2.s8 %v1386
    %v1651 = vunpack.c.3.s8 %v1381
    %v1652 = vunpack.c.3.s8 %v1382
    %v1653 = vunpack.c.3.s8 %v1383
    %v1654 = vunpack.c.3.s8 %v1384
    %v1655 = vunpack.c.3.s8 %v1385
    %v1656 = vunpack.c.3.s8 %v1386
    %v1657 = vunpack.c.0.s8 %v1387
    %v1658 = vunpack.c.0.s8 %v1388
    %v1659 = vunpack.c.0.s8 %v1389
    %v1660 = vunpack.c.0.s8 %v1390
    %v1661 = vunpack.c.0.s8 %v1391
    %v1662 = vunpack.c.0.s8 %v1392
    %v1663 = vunpack.c.1.s8 %v1387
    %v1664 = vunpack.c.1.s8 %v1388
    %v1665 = vunpack.c.1.s8 %v1389
    %v1666 = vunpack.c.1.s8 %v1390
    %v1667 = vunpack.c.1.s8 %v1391
    %v1668 = vunpack.c.1.s8 %v1392
    %v1669 = vunpack.c.2.s8 %v1387
    %v1670 = vunpack.c.2.s8 %v1388
    %v1671 = vunpack.c.2.s8 %v1389
    %v1672 = vunpack.c.2.s8 %v1390
    %v1673 = vunpack.c.2.s8 %v1391
    %v1674 = vunpack.c.2.s8 %v1392
    %v1675 = vunpack.c.3.s8 %v1387
    %v1676 = vunpack.c.3.s8 %v1388
    %v1677 = vunpack.c.3.s8 %v1389
    %v1678 = vunpack.c.3.s8 %v1390
    %v1679 = vunpack.c.3.s8 %v1391
    %v1680 = vunpack.c.3.s8 %v1392
    %v1681 = vunpack.c.0.s8 %v1393
    %v1682 = vunpack.c.0.s8 %v1394
    %v1683 = vunpack.c.0.s8 %v1395
    %v1684 = vunpack.c.0.s8 %v1396
    %v1685 = vunpack.c.0.s8 %v1397
    %v1686 = vunpack.c.0.s8 %v1398
    %v1687 = vunpack.c.1.s8 %v1393
    %v1688 = vunpack.c.1.s8 %v1394
    %v1689 = vunpack.c.1.s8 %v1395
    %v1690 = vunpack.c.1.s8 %v1396
    %v1691 = vunpack.c.1.s8 %v1397
    %v1692 = vunpack.c.1.s8 %v1398
    %v1693 = vunpack.c.2.s8 %v1393
    %v1694 = vunpack.c.2.s8 %v1394
    %v1695 = vunpack.c.2.s8 %v1395
    %v1696 = vunpack.c.2.s8 %v1396
    %v1697 = vunpack.c.2.s8 %v1397
    %v1698 = vunpack.c.2.s8 %v1398
    %v1699 = vunpack.c.3.s8 %v1393
    %v1700 = vunpack.c.3.s8 %v1394
    %v1701 = vunpack.c.3.s8 %v1395
    %v1702 = vunpack.c.3.s8 %v1396
    %v1703 = vunpack.c.3.s8 %v1397
    %v1704 = vunpack.c.3.s8 %v1398
    %v1705 = vunpack.c.0.s8 %v1399
    %v1706 = vunpack.c.0.s8 %v1400
    %v1707 = vunpack.c.0.s8 %v1401
    %v1708 = vunpack.c.0.s8 %v1402
    %v1709 = vunpack.c.0.s8 %v1403
    %v1710 = vunpack.c.0.s8 %v1404
    %v1711 = vunpack.c.1.s8 %v1399
    %v1712 = vunpack.c.1.s8 %v1400
    %v1713 = vunpack.c.1.s8 %v1401
    %v1714 = vunpack.c.1.s8 %v1402
    %v1715 = vunpack.c.1.s8 %v1403
    %v1716 = vunpack.c.1.s8 %v1404
    %v1717 = vunpack.c.2.s8 %v1399
    %v1718 = vunpack.c.2.s8 %v1400
    %v1719 = vunpack.c.2.s8 %v1401
    %v1720 = vunpack.c.2.s8 %v1402
    %v1721 = vunpack.c.2.s8 %v1403
    %v1722 = vunpack.c.2.s8 %v1404
    %v1723 = vunpack.c.3.s8 %v1399
    %v1724 = vunpack.c.3.s8 %v1400
    %v1725 = vunpack.c.3.s8 %v1401
    %v1726 = vunpack.c.3.s8 %v1402
    %v1727 = vunpack.c.3.s8 %v1403
    %v1728 = vunpack.c.3.s8 %v1404
    %v1729 = vunpack.c.0.s8 %v1405
    %v1730 = vunpack.c.0.s8 %v1406
    %v1731 = vunpack.c.0.s8 %v1407
    %v1732 = vunpack.c.0.s8 %v1408
    %v1733 = vunpack.c.0.s8 %v1409
    %v1734 = vunpack.c.0.s8 %v1410
    %v1735 = vunpack.c.1.s8 %v1405
    %v1736 = vunpack.c.1.s8 %v1406
    %v1737 = vunpack.c.1.s8 %v1407
    %v1738 = vunpack.c.1.s8 %v1408
    %v1739 = vunpack.c.1.s8 %v1409
    %v1740 = vunpack.c.1.s8 %v1410
    %v1741 = vunpack.c.2.s8 %v1405
    %v1742 = vunpack.c.2.s8 %v1406
    %v1743 = vunpack.c.2.s8 %v1407
    %v1744 = vunpack.c.2.s8 %v1408
    %v1745 = vunpack.c.2.s8 %v1409
    %v1746 = vunpack.c.2.s8 %v1410
    %v1747 = vunpack.c.3.s8 %v1405
    %v1748 = vunpack.c.3.s8 %v1406
    %v1749 = vunpack.c.3.s8 %v1407
    %v1750 = vunpack.c.3.s8 %v1408
    %v1751 = vunpack.c.3.s8 %v1409
    %v1752 = vunpack.c.3.s8 %v1410
    %v1753 = vunpack.c.0.s8 %v1411
    %v1754 = vunpack.c.0.s8 %v1412
    %v1755 = vunpack.c.0.s8 %v1413
    %v1756 = vunpack.c.0.s8 %v1414
    %v1757 = vunpack.c.0.s8 %v1415
    %v1758 = vunpack.c.0.s8 %v1416
    %v1759 = vunpack.c.1.s8 %v1411
    %v1760 = vunpack.c.1.s8 %v1412
    %v1761 = vunpack.c.1.s8 %v1413
    %v1762 = vunpack.c.1.s8 %v1414
    %v1763 = vunpack.c.1.s8 %v1415
    %v1764 = vunpack.c.1.s8 %v1416
    %v1765 = vunpack.c.2.s8 %v1411
    %v1766 = vunpack.c.2.s8 %v1412
    %v1767 = vunpack.c.2.s8 %v1413
    %v1768 = vunpack.c.2.s8 %v1414
    %v1769 = vunpack.c.2.s8 %v1415
    %v1770 = vunpack.c.2.s8 %v1416
    %v1771 = vunpack.c.3.s8 %v1411
    %v1772 = vunpack.c.3.s8 %v1412
    %v1773 = vunpack.c.3.s8 %v1413
    %v1774 = vunpack.c.3.s8 %v1414
    %v1775 = vunpack.c.3.s8 %v1415
    %v1776 = vunpack.c.3.s8 %v1416
    %v1777 = vunpack.c.0.s8 %v1417
    %v1778 = vunpack.c.0.s8 %v1418
    %v1779 = vunpack.c.0.s8 %v1419
    %v1780 = vunpack.c.0.s8 %v1420
    %v1781 = vunpack.c.0.s8 %v1421
    %v1782 = vunpack.c.0.s8 %v1422
    %v1783 = vunpack.c.1.s8 %v1417
    %v1784 = vunpack.c.1.s8 %v1418
    %v1785 = vunpack.c.1.s8 %v1419
    %v1786 = vunpack.c.1.s8 %v1420
    %v1787 = vunpack.c.1.s8 %v1421
    %v1788 = vunpack.c.1.s8 %v1422
    %v1789 = vunpack.c.2.s8 %v1417
    %v1790 = vunpack.c.2.s8 %v1418
    %v1791 = vunpack.c.2.s8 %v1419
    %v1792 = vunpack.c.2.s8 %v1420
    %v1793 = vunpack.c.2.s8 %v1421
    %v1794 = vunpack.c.2.s8 %v1422
    %v1795 = vunpack.c.3.s8 %v1417
    %v1796 = vunpack.c.3.s8 %v1418
    %v1797 = vunpack.c.3.s8 %v1419
    %v1798 = vunpack.c.3.s8 %v1420
    %v1799 = vunpack.c.3.s8 %v1421
    %v1800 = vunpack.c.3.s8 %v1422
    %v1801 = vunpack.c.0.s8 %v1423
    %v1802 = vunpack.c.0.s8 %v1424
    %v1803 = vunpack.c.0.s8 %v1425
    %v1804 = vunpack.c.0.s8 %v1426
    %v1805 = vunpack.c.0.s8 %v1427
    %v1806 = vunpack.c.0.s8 %v1428
    %v1807 = vunpack.c.1.s8 %v1423
    %v1808 = vunpack.c.1.s8 %v1424
    %v1809 = vunpack.c.1.s8 %v1425
    %v1810 = vunpack.c.1.s8 %v1426
    %v1811 = vunpack.c.1.s8 %v1427
    %v1812 = vunpack.c.1.s8 %v1428
    %v1813 = vunpack.c.2.s8 %v1423
    %v1814 = vunpack.c.2.s8 %v1424
    %v1815 = vunpack.c.2.s8 %v1425
    %v1816 = vunpack.c.2.s8 %v1426
    %v1817 = vunpack.c.2.s8 %v1427
    %v1818 = vunpack.c.2.s8 %v1428
    %v1819 = vunpack.c.3.s8 %v1423
    %v1820 = vunpack.c.3.s8 %v1424
    %v1821 = vunpack.c.3.s8 %v1425
    %v1822 = vunpack.c.3.s8 %v1426
    %v1823 = vunpack.c.3.s8 %v1427
    %v1824 = vunpack.c.3.s8 %v1428
    %v1825 = vunpack.c.0.s8 %v1429
    %v1826 = vunpack.c.0.s8 %v1430
    %v1827 = vunpack.c.0.s8 %v1431
    %v1828 = vunpack.c.0.s8 %v1432
    %v1829 = vunpack.c.0.s8 %v1433
    %v1830 = vunpack.c.0.s8 %v1434
    %v1831 = vunpack.c.1.s8 %v1429
    %v1832 = vunpack.c.1.s8 %v1430
    %v1833 = vunpack.c.1.s8 %v1431
    %v1834 = vunpack.c.1.s8 %v1432
    %v1835 = vunpack.c.1.s8 %v1433
    %v1836 = vunpack.c.1.s8 %v1434
    %v1837 = vunpack.c.2.s8 %v1429
    %v1838 = vunpack.c.2.s8 %v1430
    %v1839 = vunpack.c.2.s8 %v1431
    %v1840 = vunpack.c.2.s8 %v1432
    %v1841 = vunpack.c.2.s8 %v1433
    %v1842 = vunpack.c.2.s8 %v1434
    %v1843 = vunpack.c.3.s8 %v1429
    %v1844 = vunpack.c.3.s8 %v1430
    %v1845 = vunpack.c.3.s8 %v1431
    %v1846 = vunpack.c.3.s8 %v1432
    %v1847 = vunpack.c.3.s8 %v1433
    %v1848 = vunpack.c.3.s8 %v1434
    %v1849 = vunpack.c.0.s8 %v1435
    %v1850 = vunpack.c.0.s8 %v1436
    %v1851 = vunpack.c.0.s8 %v1437
    %v1852 = vunpack.c.0.s8 %v1438
    %v1853 = vunpack.c.0.s8 %v1439
    %v1854 = vunpack.c.0.s8 %v1440
    %v1855 = vunpack.c.1.s8 %v1435
    %v1856 = vunpack.c.1.s8 %v1436
    %v1857 = vunpack.c.1.s8 %v1437
    %v1858 = vunpack.c.1.s8 %v1438
    %v1859 = vunpack.c.1.s8 %v1439
    %v1860 = vunpack.c.1.s8 %v1440
    %v1861 = vunpack.c.2.s8 %v1435
    %v1862 = vunpack.c.2.s8 %v1436
    %v1863 = vunpack.c.2.s8 %v1437
    %v1864 = vunpack.c.2.s8 %v1438
    %v1865 = vunpack.c.2.s8 %v1439
    %v1866 = vunpack.c.2.s8 %v1440
    %v1867 = vunpack.c.3.s8 %v1435
    %v1868 = vunpack.c.3.s8 %v1436
    %v1869 = vunpack.c.3.s8 %v1437
    %v1870 = vunpack.c.3.s8 %v1438
    %v1871 = vunpack.c.3.s8 %v1439
    %v1872 = vunpack.c.3.s8 %v1440
    %v1873 = vunpack.c.0.s8 %v1441
    %v1874 = vunpack.c.0.s8 %v1442
    %v1875 = vunpack.c.0.s8 %v1443
    %v1876 = vunpack.c.0.s8 %v1444
    %v1877 = vunpack.c.0.s8 %v1445
    %v1878 = vunpack.c.0.s8 %v1446
    %v1879 = vunpack.c.1.s8 %v1441
    %v1880 = vunpack.c.1.s8 %v1442
    %v1881 = vunpack.c.1.s8 %v1443
    %v1882 = vunpack.c.1.s8 %v1444
    %v1883 = vunpack.c.1.s8 %v1445
    %v1884 = vunpack.c.1.s8 %v1446
    %v1885 = vunpack.c.2.s8 %v1441
    %v1886 = vunpack.c.2.s8 %v1442
    %v1887 = vunpack.c.2.s8 %v1443
    %v1888 = vunpack.c.2.s8 %v1444
    %v1889 = vunpack.c.2.s8 %v1445
    %v1890 = vunpack.c.2.s8 %v1446
    %v1891 = vunpack.c.3.s8 %v1441
    %v1892 = vunpack.c.3.s8 %v1442
    %v1893 = vunpack.c.3.s8 %v1443
    %v1894 = vunpack.c.3.s8 %v1444
    %v1895 = vunpack.c.3.s8 %v1445
    %v1896 = vunpack.c.3.s8 %v1446
    %v1897 = vunpack.c.0.s8 %v1447
    %v1898 = vunpack.c.0.s8 %v1448
    %v1899 = vunpack.c.0.s8 %v1449
    %v1900 = vunpack.c.0.s8 %v1450
    %v1901 = vunpack.c.0.s8 %v1451
    %v1902 = vunpack.c.0.s8 %v1452
    %v1903 = vunpack.c.1.s8 %v1447
    %v1904 = vunpack.c.1.s8 %v1448
    %v1905 = vunpack.c.1.s8 %v1449
    %v1906 = vunpack.c.1.s8 %v1450
    %v1907 = vunpack.c.1.s8 %v1451
    %v1908 = vunpack.c.1.s8 %v1452
    %v1909 = vunpack.c.2.s8 %v1447
    %v1910 = vunpack.c.2.s8 %v1448
    %v1911 = vunpack.c.2.s8 %v1449
    %v1912 = vunpack.c.2.s8 %v1450
    %v1913 = vunpack.c.2.s8 %v1451
    %v1914 = vunpack.c.2.s8 %v1452
    %v1915 = vunpack.c.3.s8 %v1447
    %v1916 = vunpack.c.3.s8 %v1448
    %v1917 = vunpack.c.3.s8 %v1449
    %v1918 = vunpack.c.3.s8 %v1450
    %v1919 = vunpack.c.3.s8 %v1451
    %v1920 = vunpack.c.3.s8 %v1452
    %v1921 = vunpack.c.0.s8 %v1453
    %v1922 = vunpack.c.0.s8 %v1454
    %v1923 = vunpack.c.0.s8 %v1455
    %v1924 = vunpack.c.0.s8 %v1456
    %v1925 = vunpack.c.0.s8 %v1457
    %v1926 = vunpack.c.0.s8 %v1458
    %v1927 = vunpack.c.1.s8 %v1453
    %v1928 = vunpack.c.1.s8 %v1454
    %v1929 = vunpack.c.1.s8 %v1455
    %v1930 = vunpack.c.1.s8 %v1456
    %v1931 = vunpack.c.1.s8 %v1457
    %v1932 = vunpack.c.1.s8 %v1458
    %v1933 = vunpack.c.2.s8 %v1453
    %v1934 = vunpack.c.2.s8 %v1454
    %v1935 = vunpack.c.2.s8 %v1455
    %v1936 = vunpack.c.2.s8 %v1456
    %v1937 = vunpack.c.2.s8 %v1457
    %v1938 = vunpack.c.2.s8 %v1458
    %v1939 = vunpack.c.3.s8 %v1453
    %v1940 = vunpack.c.3.s8 %v1454
    %v1941 = vunpack.c.3.s8 %v1455
    %v1942 = vunpack.c.3.s8 %v1456
    %v1943 = vunpack.c.3.s8 %v1457
    %v1944 = vunpack.c.3.s8 %v1458
    %v1945 = vunpack.c.0.s8 %v1459
    %v1946 = vunpack.c.0.s8 %v1460
    %v1947 = vunpack.c.0.s8 %v1461
    %v1948 = vunpack.c.0.s8 %v1462
    %v1949 = vunpack.c.0.s8 %v1463
    %v1950 = vunpack.c.0.s8 %v1464
    %v1951 = vunpack.c.1.s8 %v1459
    %v1952 = vunpack.c.1.s8 %v1460
    %v1953 = vunpack.c.1.s8 %v1461
    %v1954 = vunpack.c.1.s8 %v1462
    %v1955 = vunpack.c.1.s8 %v1463
    %v1956 = vunpack.c.1.s8 %v1464
    %v1957 = vunpack.c.2.s8 %v1459
    %v1958 = vunpack.c.2.s8 %v1460
    %v1959 = vunpack.c.2.s8 %v1461
    %v1960 = vunpack.c.2.s8 %v1462
    %v1961 = vunpack.c.2.s8 %v1463
    %v1962 = vunpack.c.2.s8 %v1464
    %v1963 = vunpack.c.3.s8 %v1459
    %v1964 = vunpack.c.3.s8 %v1460
    %v1965 = vunpack.c.3.s8 %v1461
    %v1966 = vunpack.c.3.s8 %v1462
    %v1967 = vunpack.c.3.s8 %v1463
    %v1968 = vunpack.c.3.s8 %v1464
    %v1969 = vunpack.c.0.s8 %v1465
    %v1970 = vunpack.c.0.s8 %v1466
    %v1971 = vunpack.c.0.s8 %v1467
    %v1972 = vunpack.c.0.s8 %v1468
    %v1973 = vunpack.c.0.s8 %v1469
    %v1974 = vunpack.c.0.s8 %v1470
    %v1975 = vunpack.c.1.s8 %v1465
    %v1976 = vunpack.c.1.s8 %v1466
    %v1977 = vunpack.c.1.s8 %v1467
    %v1978 = vunpack.c.1.s8 %v1468
    %v1979 = vunpack.c.1.s8 %v1469
    %v1980 = vunpack.c.1.s8 %v1470
    %v1981 = vunpack.c.2.s8 %v1465
    %v1982 = vunpack.c.2.s8 %v1466
    %v1983 = vunpack.c.2.s8 %v1467
    %v1984 = vunpack.c.2.s8 %v1468
    %v1985 = vunpack.c.2.s8 %v1469
    %v1986 = vunpack.c.2.s8 %v1470
    %v1987 = vunpack.c.3.s8 %v1465
    %v1988 = vunpack.c.3.s8 %v1466
    %v1989 = vunpack.c.3.s8 %v1467
    %v1990 = vunpack.c.3.s8 %v1468
    %v1991 = vunpack.c.3.s8 %v1469
    %v1992 = vunpack.c.3.s8 %v1470
    %v1993 = vunpack.c.0.s8 %v1471
    %v1994 = vunpack.c.0.s8 %v1472
    %v1995 = vunpack.c.0.s8 %v1473
    %v1996 = vunpack.c.0.s8 %v1474
    %v1997 = vunpack.c.0.s8 %v1475
    %v1998 = vunpack.c.0.s8 %v1476
    %v1999 = vunpack.c.1.s8 %v1471
    %v2000 = vunpack.c.1.s8 %v1472
    %v2001 = vunpack.c.1.s8 %v1473
    %v2002 = vunpack.c.1.s8 %v1474
    %v2003 = vunpack.c.1.s8 %v1475
    %v2004 = vunpack.c.1.s8 %v1476
    %v2005 = vunpack.c.2.s8 %v1471
    %v2006 = vunpack.c.2.s8 %v1472
    %v2007 = vunpack.c.2.s8 %v1473
    %v2008 = vunpack.c.2.s8 %v1474
    %v2009 = vunpack.c.2.s8 %v1475
    %v2010 = vunpack.c.2.s8 %v1476
    %v2011 = vunpack.c.3.s8 %v1471
    %v2012 = vunpack.c.3.s8 %v1472
    %v2013 = vunpack.c.3.s8 %v1473
    %v2014 = vunpack.c.3.s8 %v1474
    %v2015 = vunpack.c.3.s8 %v1475
    %v2016 = vunpack.c.3.s8 %v1476
    %v2017 = vunpack.c.0.s8 %v1477
    %v2018 = vunpack.c.0.s8 %v1478
    %v2019 = vunpack.c.0.s8 %v1479
    %v2020 = vunpack.c.0.s8 %v1480
    %v2021 = vunpack.c.0.s8 %v1481
    %v2022 = vunpack.c.0.s8 %v1482
    %v2023 = vunpack.c.1.s8 %v1477
    %v2024 = vunpack.c.1.s8 %v1478
    %v2025 = vunpack.c.1.s8 %v1479
    %v2026 = vunpack.c.1.s8 %v1480
    %v2027 = vunpack.c.1.s8 %v1481
    %v2028 = vunpack.c.1.s8 %v1482
    %v2029 = vunpack.c.2.s8 %v1477
    %v2030 = vunpack.c.2.s8 %v1478
    %v2031 = vunpack.c.2.s8 %v1479
    %v2032 = vunpack.c.2.s8 %v1480
    %v2033 = vunpack.c.2.s8 %v1481
    %v2034 = vunpack.c.2.s8 %v1482
    %v2035 = vunpack.c.3.s8 %v1477
    %v2036 = vunpack.c.3.s8 %v1478
    %v2037 = vunpack.c.3.s8 %v1479
    %v2038 = vunpack.c.3.s8 %v1480
    %v2039 = vunpack.c.3.s8 %v1481
    %v2040 = vunpack.c.3.s8 %v1482
    %v2041 = vunpack.c.0.s8 %v1483
    %v2042 = vunpack.c.0.s8 %v1484
    %v2043 = vunpack.c.0.s8 %v1485
    %v2044 = vunpack.c.0.s8 %v1486
    %v2045 = vunpack.c.0.s8 %v1487
    %v2046 = vunpack.c.0.s8 %v1488
    %v2047 = vunpack.c.1.s8 %v1483
    %v2048 = vunpack.c.1.s8 %v1484
    %v2049 = vunpack.c.1.s8 %v1485
    %v2050 = vunpack.c.1.s8 %v1486
    %v2051 = vunpack.c.1.s8 %v1487
    %v2052 = vunpack.c.1.s8 %v1488
    %v2053 = vunpack.c.2.s8 %v1483
    %v2054 = vunpack.c.2.s8 %v1484
    %v2055 = vunpack.c.2.s8 %v1485
    %v2056 = vunpack.c.2.s8 %v1486
    %v2057 = vunpack.c.2.s8 %v1487
    %v2058 = vunpack.c.2.s8 %v1488
    %v2059 = vunpack.c.3.s8 %v1483
    %v2060 = vunpack.c.3.s8 %v1484
    %v2061 = vunpack.c.3.s8 %v1485
    %v2062 = vunpack.c.3.s8 %v1486
    %v2063 = vunpack.c.3.s8 %v1487
    %v2064 = vunpack.c.3.s8 %v1488
    %v2065 = vcvt.s32.f32 %v1489
    %v2066 = vcvt.s32.f32 %v1490
    %v2067 = vcvt.s32.f32 %v1491
    %v2068 = vcvt.s32.f32 %v1492
    %v2069 = vcvt.s32.f32 %v1493
    %v2070 = vcvt.s32.f32 %v1494
    %v2071 = vcvt.s32.f32 %v1495
    %v2072 = vcvt.s32.f32 %v1496
    %v2073 = vcvt.s32.f32 %v1497
    %v2074 = vcvt.s32.f32 %v1498
    %v2075 = vcvt.s32.f32 %v1499
    %v2076 = vcvt.s32.f32 %v1500
    %v2077 = vcvt.s32.f32 %v1501
    %v2078 = vcvt.s32.f32 %v1502
    %v2079 = vcvt.s32.f32 %v1503
    %v2080 = vcvt.s32.f32 %v1504
    %v2081 = vcvt.s32.f32 %v1505
    %v2082 = vcvt.s32.f32 %v1506
    %v2083 = vcvt.s32.f32 %v1507
    %v2084 = vcvt.s32.f32 %v1508
    %v2085 = vcvt.s32.f32 %v1509
    %v2086 = vcvt.s32.f32 %v1510
    %v2087 = vcvt.s32.f32 %v1511
    %v2088 = vcvt.s32.f32 %v1512
    %v2089 = vcvt.s32.f32 %v1513
    %v2090 = vcvt.s32.f32 %v1514
    %v2091 = vcvt.s32.f32 %v1515
    %v2092 = vcvt.s32.f32 %v1516
    %v2093 = vcvt.s32.f32 %v1517
    %v2094 = vcvt.s32.f32 %v1518
    %v2095 = vcvt.s32.f32 %v1519
    %v2096 = vcvt.s32.f32 %v1520
    %v2097 = vcvt.s32.f32 %v1521
    %v2098 = vcvt.s32.f32 %v1522
    %v2099 = vcvt.s32.f32 %v1523
    %v2100 = vcvt.s32.f32 %v1524
    %v2101 = vcvt.s32.f32 %v1525
    %v2102 = vcvt.s32.f32 %v1526
    %v2103 = vcvt.s32.f32 %v1527
    %v2104 = vcvt.s32.f32 %v1528
    %v2105 = vcvt.s32.f32 %v1529
    %v2106 = vcvt.s32.f32 %v1530
    %v2107 = vcvt.s32.f32 %v1531
    %v2108 = vcvt.s32.f32 %v1532
    %v2109 = vcvt.s32.f32 %v1533
    %v2110 = vcvt.s32.f32 %v1534
    %v2111 = vcvt.s32.f32 %v1535
    %v2112 = vcvt.s32.f32 %v1536
    %v2113 = vcvt.s32.f32 %v1537
    %v2114 = vcvt.s32.f32 %v1538
    %v2115 = vcvt.s32.f32 %v1539
    %v2116 = vcvt.s32.f32 %v1540
    %v2117 = vcvt.s32.f32 %v1541
    %v2118 = vcvt.s32.f32 %v1542
    %v2119 = vcvt.s32.f32 %v1543
    %v2120 = vcvt.s32.f32 %v1544
    %v2121 = vcvt.s32.f32 %v1545
    %v2122 = vcvt.s32.f32 %v1546
    %v2123 = vcvt.s32.f32 %v1547
    %v2124 = vcvt.s32.f32 %v1548
    %v2125 = vcvt.s32.f32 %v1549
    %v2126 = vcvt.s32.f32 %v1550
    %v2127 = vcvt.s32.f32 %v1551
    %v2128 = vcvt.s32.f32 %v1552
    %v2129 = vcvt.s32.f32 %v1553
    %v2130 = vcvt.s32.f32 %v1554
    %v2131 = vcvt.s32.f32 %v1555
    %v2132 = vcvt.s32.f32 %v1556
    %v2133 = vcvt.s32.f32 %v1557
    %v2134 = vcvt.s32.f32 %v1558
    %v2135 = vcvt.s32.f32 %v1559
    %v2136 = vcvt.s32.f32 %v1560
    %v2137 = vcvt.s32.f32 %v1561
    %v2138 = vcvt.s32.f32 %v1562
    %v2139 = vcvt.s32.f32 %v1563
    %v2140 = vcvt.s32.f32 %v1564
    %v2141 = vcvt.s32.f32 %v1565
    %v2142 = vcvt.s32.f32 %v1566
    %v2143 = vcvt.s32.f32 %v1567
    %v2144 = vcvt.s32.f32 %v1568
    %v2145 = vcvt.s32.f32 %v1569
    %v2146 = vcvt.s32.f32 %v1570
    %v2147 = vcvt.s32.f32 %v1571
    %v2148 = vcvt.s32.f32 %v1572
    %v2149 = vcvt.s32.f32 %v1573
    %v2150 = vcvt.s32.f32 %v1574
    %v2151 = vcvt.s32.f32 %v1575
    %v2152 = vcvt.s32.f32 %v1576
    %v2153 = vcvt.s32.f32 %v1577
    %v2154 = vcvt.s32.f32 %v1578
    %v2155 = vcvt.s32.f32 %v1579
    %v2156 = vcvt.s32.f32 %v1580
    %v2157 = vcvt.s32.f32 %v1581
    %v2158 = vcvt.s32.f32 %v1582
    %v2159 = vcvt.s32.f32 %v1583
    %v2160 = vcvt.s32.f32 %v1584
    %v2161 = vcvt.s32.f32 %v1585
    %v2162 = vcvt.s32.f32 %v1586
    %v2163 = vcvt.s32.f32 %v1587
    %v2164 = vcvt.s32.f32 %v1588
    %v2165 = vcvt.s32.f32 %v1589
    %v2166 = vcvt.s32.f32 %v1590
    %v2167 = vcvt.s32.f32 %v1591
    %v2168 = vcvt.s32.f32 %v1592
    %v2169 = vcvt.s32.f32 %v1593
    %v2170 = vcvt.s32.f32 %v1594
    %v2171 = vcvt.s32.f32 %v1595
    %v2172 = vcvt.s32.f32 %v1596
    %v2173 = vcvt.s32.f32 %v1597
    %v2174 = vcvt.s32.f32 %v1598
    %v2175 = vcvt.s32.f32 %v1599
    %v2176 = vcvt.s32.f32 %v1600
    %v2177 = vcvt.s32.f32 %v1601
    %v2178 = vcvt.s32.f32 %v1602
    %v2179 = vcvt.s32.f32 %v1603
    %v2180 = vcvt.s32.f32 %v1604
    %v2181 = vcvt.s32.f32 %v1605
    %v2182 = vcvt.s32.f32 %v1606
    %v2183 = vcvt.s32.f32 %v1607
    %v2184 = vcvt.s32.f32 %v1608
    %v2185 = vcvt.s32.f32 %v1609
    %v2186 = vcvt.s32.f32 %v1610
    %v2187 = vcvt.s32.f32 %v1611
    %v2188 = vcvt.s32.f32 %v1612
    %v2189 = vcvt.s32.f32 %v1613
    %v2190 = vcvt.s32.f32 %v1614
    %v2191 = vcvt.s32.f32 %v1615
    %v2192 = vcvt.s32.f32 %v1616
    %v2193 = vcvt.s32.f32 %v1617
    %v2194 = vcvt.s32.f32 %v1618
    %v2195 = vcvt.s32.f32 %v1619
    %v2196 = vcvt.s32.f32 %v1620
    %v2197 = vcvt.s32.f32 %v1621
    %v2198 = vcvt.s32.f32 %v1622
    %v2199 = vcvt.s32.f32 %v1623
    %v2200 = vcvt.s32.f32 %v1624
    %v2201 = vcvt.s32.f32 %v1625
    %v2202 = vcvt.s32.f32 %v1626
    %v2203 = vcvt.s32.f32 %v1627
    %v2204 = vcvt.s32.f32 %v1628
    %v2205 = vcvt.s32.f32 %v1629
    %v2206 = vcvt.s32.f32 %v1630
    %v2207 = vcvt.s32.f32 %v1631
    %v2208 = vcvt.s32.f32 %v1632
    %v2209 = vcvt.s32.f32 %v1633
    %v2210 = vcvt.s32.f32 %v1634
    %v2211 = vcvt.s32.f32 %v1635
    %v2212 = vcvt.s32.f32 %v1636
    %v2213 = vcvt.s32.f32 %v1637
    %v2214 = vcvt.s32.f32 %v1638
    %v2215 = vcvt.s32.f32 %v1639
    %v2216 = vcvt.s32.f32 %v1640
    %v2217 = vcvt.s32.f32 %v1641
    %v2218 = vcvt.s32.f32 %v1642
    %v2219 = vcvt.s32.f32 %v1643
    %v2220 = vcvt.s32.f32 %v1644
    %v2221 = vcvt.s32.f32 %v1645
    %v2222 = vcvt.s32.f32 %v1646
    %v2223 = vcvt.s32.f32 %v1647
    %v2224 = vcvt.s32.f32 %v1648
    %v2225 = vcvt.s32.f32 %v1649
    %v2226 = vcvt.s32.f32 %v1650
    %v2227 = vcvt.s32.f32 %v1651
    %v2228 = vcvt.s32.f32 %v1652
    %v2229 = vcvt.s32.f32 %v1653
    %v2230 = vcvt.s32.f32 %v1654
    %v2231 = vcvt.s32.f32 %v1655
    %v2232 = vcvt.s32.f32 %v1656
    %v2233 = vcvt.s32.f32 %v1657
    %v2234 = vcvt.s32.f32 %v1658
    %v2235 = vcvt.s32.f32 %v1659
    %v2236 = vcvt.s32.f32 %v1660
    %v2237 = vcvt.s32.f32 %v1661
    %v2238 = vcvt.s32.f32 %v1662
    %v2239 = vcvt.s32.f32 %v1663
    %v2240 = vcvt.s32.f32 %v1664
    %v2241 = vcvt.s32.f32 %v1665
    %v2242 = vcvt.s32.f32 %v1666
    %v2243 = vcvt.s32.f32 %v1667
    %v2244 = vcvt.s32.f32 %v1668
    %v2245 = vcvt.s32.f32 %v1669
    %v2246 = vcvt.s32.f32 %v1670
    %v2247 = vcvt.s32.f32 %v1671
    %v2248 = vcvt.s32.f32 %v1672
    %v2249 = vcvt.s32.f32 %v1673
    %v2250 = vcvt.s32.f32 %v1674
    %v2251 = vcvt.s32.f32 %v1675
    %v2252 = vcvt.s32.f32 %v1676
    %v2253 = vcvt.s32.f32 %v1677
    %v2254 = vcvt.s32.f32 %v1678
    %v2255 = vcvt.s32.f32 %v1679
    %v2256 = vcvt.s32.f32 %v1680
    %v2257 = vcvt.s32.f32 %v1681
    %v2258 = vcvt.s32.f32 %v1682
    %v2259 = vcvt.s32.f32 %v1683
    %v2260 = vcvt.s32.f32 %v1684
    %v2261 = vcvt.s32.f32 %v1685
    %v2262 = vcvt.s32.f32 %v1686
    %v2263 = vcvt.s32.f32 %v1687
    %v2264 = vcvt.s32.f32 %v1688
    %v2265 = vcvt.s32.f32 %v1689
    %v2266 = vcvt.s32.f32 %v1690
    %v2267 = vcvt.s32.f32 %v1691
    %v2268 = vcvt.s32.f32 %v1692
    %v2269 = vcvt.s32.f32 %v1693
    %v2270 = vcvt.s32.f32 %v1694
    %v2271 = vcvt.s32.f32 %v1695
    %v2272 = vcvt.s32.f32 %v1696
    %v2273 = vcvt.s32.f32 %v1697
    %v2274 = vcvt.s32.f32 %v1698
    %v2275 = vcvt.s32.f32 %v1699
    %v2276 = vcvt.s32.f32 %v1700
    %v2277 = vcvt.s32.f32 %v1701
    %v2278 = vcvt.s32.f32 %v1702
    %v2279 = vcvt.s32.f32 %v1703
    %v2280 = vcvt.s32.f32 %v1704
    %v2281 = vcvt.s32.f32 %v1705
    %v2282 = vcvt.s32.f32 %v1706
    %v2283 = vcvt.s32.f32 %v1707
    %v2284 = vcvt.s32.f32 %v1708
    %v2285 = vcvt.s32.f32 %v1709
    %v2286 = vcvt.s32.f32 %v1710
    %v2287 = vcvt.s32.f32 %v1711
    %v2288 = vcvt.s32.f32 %v1712
    %v2289 = vcvt.s32.f32 %v1713
    %v2290 = vcvt.s32.f32 %v1714
    %v2291 = vcvt.s32.f32 %v1715
    %v2292 = vcvt.s32.f32 %v1716
    %v2293 = vcvt.s32.f32 %v1717
    %v2294 = vcvt.s32.f32 %v1718
    %v2295 = vcvt.s32.f32 %v1719
    %v2296 = vcvt.s32.f32 %v1720
    %v2297 = vcvt.s32.f32 %v1721
    %v2298 = vcvt.s32.f32 %v1722
    %v2299 = vcvt.s32.f32 %v1723
    %v2300 = vcvt.s32.f32 %v1724
    %v2301 = vcvt.s32.f32 %v1725
    %v2302 = vcvt.s32.f32 %v1726
    %v2303 = vcvt.s32.f32 %v1727
    %v2304 = vcvt.s32.f32 %v1728
    %v2305 = vcvt.s32.f32 %v1729
    %v2306 = vcvt.s32.f32 %v1730
    %v2307 = vcvt.s32.f32 %v1731
    %v2308 = vcvt.s32.f32 %v1732
    %v2309 = vcvt.s32.f32 %v1733
    %v2310 = vcvt.s32.f32 %v1734
    %v2311 = vcvt.s32.f32 %v1735
    %v2312 = vcvt.s32.f32 %v1736
    %v2313 = vcvt.s32.f32 %v1737
    %v2314 = vcvt.s32.f32 %v1738
    %v2315 = vcvt.s32.f32 %v1739
    %v2316 = vcvt.s32.f32 %v1740
    %v2317 = vcvt.s32.f32 %v1741
    %v2318 = vcvt.s32.f32 %v1742
    %v2319 = vcvt.s32.f32 %v1743
    %v2320 = vcvt.s32.f32 %v1744
    %v2321 = vcvt.s32.f32 %v1745
    %v2322 = vcvt.s32.f32 %v1746
    %v2323 = vcvt.s32.f32 %v1747
    %v2324 = vcvt.s32.f32 %v1748
    %v2325 = vcvt.s32.f32 %v1749
    %v2326 = vcvt.s32.f32 %v1750
    %v2327 = vcvt.s32.f32 %v1751
    %v2328 = vcvt.s32.f32 %v1752
    %v2329 = vcvt.s32.f32 %v1753
    %v2330 = vcvt.s32.f32 %v1754
    %v2331 = vcvt.s32.f32 %v1755
    %v2332 = vcvt.s32.f32 %v1756
    %v2333 = vcvt.s32.f32 %v1757
    %v2334 = vcvt.s32.f32 %v1758
    %v2335 = vcvt.s32.f32 %v1759
    %v2336 = vcvt.s32.f32 %v1760
    %v2337 = vcvt.s32.f32 %v1761
    %v2338 = vcvt.s32.f32 %v1762
    %v2339 = vcvt.s32.f32 %v1763
    %v2340 = vcvt.s32.f32 %v1764
    %v2341 = vcvt.s32.f32 %v1765
    %v2342 = vcvt.s32.f32 %v1766
    %v2343 = vcvt.s32.f32 %v1767
    %v2344 = vcvt.s32.f32 %v1768
    %v2345 = vcvt.s32.f32 %v1769
    %v2346 = vcvt.s32.f32 %v1770
    %v2347 = vcvt.s32.f32 %v1771
    %v2348 = vcvt.s32.f32 %v1772
    %v2349 = vcvt.s32.f32 %v1773
    %v2350 = vcvt.s32.f32 %v1774
    %v2351 = vcvt.s32.f32 %v1775
    %v2352 = vcvt.s32.f32 %v1776
    %v2353 = vcvt.s32.f32 %v1777
    %v2354 = vcvt.s32.f32 %v1778
    %v2355 = vcvt.s32.f32 %v1779
    %v2356 = vcvt.s32.f32 %v1780
    %v2357 = vcvt.s32.f32 %v1781
    %v2358 = vcvt.s32.f32 %v1782
    %v2359 = vcvt.s32.f32 %v1783
    %v2360 = vcvt.s32.f32 %v1784
    %v2361 = vcvt.s32.f32 %v1785
    %v2362 = vcvt.s32.f32 %v1786
    %v2363 = vcvt.s32.f32 %v1787
    %v2364 = vcvt.s32.f32 %v1788
    %v2365 = vcvt.s32.f32 %v1789
    %v2366 = vcvt.s32.f32 %v1790
    %v2367 = vcvt.s32.f32 %v1791
    %v2368 = vcvt.s32.f32 %v1792
    %v2369 = vcvt.s32.f32 %v1793
    %v2370 = vcvt.s32.f32 %v1794
    %v2371 = vcvt.s32.f32 %v1795
    %v2372 = vcvt.s32.f32 %v1796
    %v2373 = vcvt.s32.f32 %v1797
    %v2374 = vcvt.s32.f32 %v1798
    %v2375 = vcvt.s32.f32 %v1799
    %v2376 = vcvt.s32.f32 %v1800
    %v2377 = vcvt.s32.f32 %v1801
    %v2378 = vcvt.s32.f32 %v1802
    %v2379 = vcvt.s32.f32 %v1803
    %v2380 = vcvt.s32.f32 %v1804
    %v2381 = vcvt.s32.f32 %v1805
    %v2382 = vcvt.s32.f32 %v1806
    %v2383 = vcvt.s32.f32 %v1807
    %v2384 = vcvt.s32.f32 %v1808
    %v2385 = vcvt.s32.f32 %v1809
    %v2386 = vcvt.s32.f32 %v1810
    %v2387 = vcvt.s32.f32 %v1811
    %v2388 = vcvt.s32.f32 %v1812
    %v2389 = vcvt.s32.f32 %v1813
    %v2390 = vcvt.s32.f32 %v1814
    %v2391 = vcvt.s32.f32 %v1815
    %v2392 = vcvt.s32.f32 %v1816
    %v2393 = vcvt.s32.f32 %v1817
    %v2394 = vcvt.s32.f32 %v1818
    %v2395 = vcvt.s32.f32 %v1819
    %v2396 = vcvt.s32.f32 %v1820
    %v2397 = vcvt.s32.f32 %v1821
    %v2398 = vcvt.s32.f32 %v1822
    %v2399 = vcvt.s32.f32 %v1823
    %v2400 = vcvt.s32.f32 %v1824
    %v2401 = vcvt.s32.f32 %v1825
    %v2402 = vcvt.s32.f32 %v1826
    %v2403 = vcvt.s32.f32 %v1827
    %v2404 = vcvt.s32.f32 %v1828
    %v2405 = vcvt.s32.f32 %v1829
    %v2406 = vcvt.s32.f32 %v1830
    %v2407 = vcvt.s32.f32 %v1831
    %v2408 = vcvt.s32.f32 %v1832
    %v2409 = vcvt.s32.f32 %v1833
    %v2410 = vcvt.s32.f32 %v1834
    %v2411 = vcvt.s32.f32 %v1835
    %v2412 = vcvt.s32.f32 %v1836
    %v2413 = vcvt.s32.f32 %v1837
    %v2414 = vcvt.s32.f32 %v1838
    %v2415 = vcvt.s32.f32 %v1839
    %v2416 = vcvt.s32.f32 %v1840
    %v2417 = vcvt.s32.f32 %v1841
    %v2418 = vcvt.s32.f32 %v1842
    %v2419 = vcvt.s32.f32 %v1843
    %v2420 = vcvt.s32.f32 %v1844
    %v2421 = vcvt.s32.f32 %v1845
    %v2422 = vcvt.s32.f32 %v1846
    %v2423 = vcvt.s32.f32 %v1847
    %v2424 = vcvt.s32.f32 %v1848
    %v2425 = vcvt.s32.f32 %v1849
    %v2426 = vcvt.s32.f32 %v1850
    %v2427 = vcvt.s32.f32 %v1851
    %v2428 = vcvt.s32.f32 %v1852
    %v2429 = vcvt.s32.f32 %v1853
    %v2430 = vcvt.s32.f32 %v1854
    %v2431 = vcvt.s32.f32 %v1855
    %v2432 = vcvt.s32.f32 %v1856
    %v2433 = vcvt.s32.f32 %v1857
    %v2434 = vcvt.s32.f32 %v1858
    %v2435 = vcvt.s32.f32 %v1859
    %v2436 = vcvt.s32.f32 %v1860
    %v2437 = vcvt.s32.f32 %v1861
    %v2438 = vcvt.s32.f32 %v1862
    %v2439 = vcvt.s32.f32 %v1863
    %v2440 = vcvt.s32.f32 %v1864
    %v2441 = vcvt.s32.f32 %v1865
    %v2442 = vcvt.s32.f32 %v1866
    %v2443 = vcvt.s32.f32 %v1867
    %v2444 = vcvt.s32.f32 %v1868
    %v2445 = vcvt.s32.f32 %v1869
    %v2446 = vcvt.s32.f32 %v1870
    %v2447 = vcvt.s32.f32 %v1871
    %v2448 = vcvt.s32.f32 %v1872
    %v2449 = vcvt.s32.f32 %v1873
    %v2450 = vcvt.s32.f32 %v1874
    %v2451 = vcvt.s32.f32 %v1875
    %v2452 = vcvt.s32.f32 %v1876
    %v2453 = vcvt.s32.f32 %v1877
    %v2454 = vcvt.s32.f32 %v1878
    %v2455 = vcvt.s32.f32 %v1879
    %v2456 = vcvt.s32.f32 %v1880
    %v2457 = vcvt.s32.f32 %v1881
    %v2458 = vcvt.s32.f32 %v1882
    %v2459 = vcvt.s32.f32 %v1883
    %v2460 = vcvt.s32.f32 %v1884
    %v2461 = vcvt.s32.f32 %v1885
    %v2462 = vcvt.s32.f32 %v1886
    %v2463 = vcvt.s32.f32 %v1887
    %v2464 = vcvt.s32.f32 %v1888
    %v2465 = vcvt.s32.f32 %v1889
    %v2466 = vcvt.s32.f32 %v1890
    %v2467 = vcvt.s32.f32 %v1891
    %v2468 = vcvt.s32.f32 %v1892
    %v2469 = vcvt.s32.f32 %v1893
    %v2470 = vcvt.s32.f32 %v1894
    %v2471 = vcvt.s32.f32 %v1895
    %v2472 = vcvt.s32.f32 %v1896
    %v2473 = vcvt.s32.f32 %v1897
    %v2474 = vcvt.s32.f32 %v1898
    %v2475 = vcvt.s32.f32 %v1899
    %v2476 = vcvt.s32.f32 %v1900
    %v2477 = vcvt.s32.f32 %v1901
    %v2478 = vcvt.s32.f32 %v1902
    %v2479 = vcvt.s32.f32 %v1903
    %v2480 = vcvt.s32.f32 %v1904
    %v2481 = vcvt.s32.f32 %v1905
    %v2482 = vcvt.s32.f32 %v1906
    %v2483 = vcvt.s32.f32 %v1907
    %v2484 = vcvt.s32.f32 %v1908
    %v2485 = vcvt.s32.f32 %v1909
    %v2486 = vcvt.s32.f32 %v1910
    %v2487 = vcvt.s32.f32 %v1911
    %v2488 = vcvt.s32.f32 %v1912
    %v2489 = vcvt.s32.f32 %v1913
    %v2490 = vcvt.s32.f32 %v1914
    %v2491 = vcvt.s32.f32 %v1915
    %v2492 = vcvt.s32.f32 %v1916
    %v2493 = vcvt.s32.f32 %v1917
    %v2494 = vcvt.s32.f32 %v1918
    %v2495 = vcvt.s32.f32 %v1919
    %v2496 = vcvt.s32.f32 %v1920
    %v2497 = vcvt.s32.f32 %v1921
    %v2498 = vcvt.s32.f32 %v1922
    %v2499 = vcvt.s32.f32 %v1923
    %v2500 = vcvt.s32.f32 %v1924
    %v2501 = vcvt.s32.f32 %v1925
    %v2502 = vcvt.s32.f32 %v1926
    %v2503 = vcvt.s32.f32 %v1927
    %v2504 = vcvt.s32.f32 %v1928
    %v2505 = vcvt.s32.f32 %v1929
    %v2506 = vcvt.s32.f32 %v1930
    %v2507 = vcvt.s32.f32 %v1931
    %v2508 = vcvt.s32.f32 %v1932
    %v2509 = vcvt.s32.f32 %v1933
    %v2510 = vcvt.s32.f32 %v1934
    %v2511 = vcvt.s32.f32 %v1935
    %v2512 = vcvt.s32.f32 %v1936
    %v2513 = vcvt.s32.f32 %v1937
    %v2514 = vcvt.s32.f32 %v1938
    %v2515 = vcvt.s32.f32 %v1939
    %v2516 = vcvt.s32.f32 %v1940
    %v2517 = vcvt.s32.f32 %v1941
    %v2518 = vcvt.s32.f32 %v1942
    %v2519 = vcvt.s32.f32 %v1943
    %v2520 = vcvt.s32.f32 %v1944
    %v2521 = vcvt.s32.f32 %v1945
    %v2522 = vcvt.s32.f32 %v1946
    %v2523 = vcvt.s32.f32 %v1947
    %v2524 = vcvt.s32.f32 %v1948
    %v2525 = vcvt.s32.f32 %v1949
    %v2526 = vcvt.s32.f32 %v1950
    %v2527 = vcvt.s32.f32 %v1951
    %v2528 = vcvt.s32.f32 %v1952
    %v2529 = vcvt.s32.f32 %v1953
    %v2530 = vcvt.s32.f32 %v1954
    %v2531 = vcvt.s32.f32 %v1955
    %v2532 = vcvt.s32.f32 %v1956
    %v2533 = vcvt.s32.f32 %v1957
    %v2534 = vcvt.s32.f32 %v1958
    %v2535 = vcvt.s32.f32 %v1959
    %v2536 = vcvt.s32.f32 %v1960
    %v2537 = vcvt.s32.f32 %v1961
    %v2538 = vcvt.s32.f32 %v1962
    %v2539 = vcvt.s32.f32 %v1963
    %v2540 = vcvt.s32.f32 %v1964
    %v2541 = vcvt.s32.f32 %v1965
    %v2542 = vcvt.s32.f32 %v1966
    %v2543 = vcvt.s32.f32 %v1967
    %v2544 = vcvt.s32.f32 %v1968
    %v2545 = vcvt.s32.f32 %v1969
    %v2546 = vcvt.s32.f32 %v1970
    %v2547 = vcvt.s32.f32 %v1971
    %v2548 = vcvt.s32.f32 %v1972
    %v2549 = vcvt.s32.f32 %v1973
    %v2550 = vcvt.s32.f32 %v1974
    %v2551 = vcvt.s32.f32 %v1975
    %v2552 = vcvt.s32.f32 %v1976
    %v2553 = vcvt.s32.f32 %v1977
    %v2554 = vcvt.s32.f32 %v1978
    %v2555 = vcvt.s32.f32 %v1979
    %v2556 = vcvt.s32.f32 %v1980
    %v2557 = vcvt.s32.f32 %v1981
    %v2558 = vcvt.s32.f32 %v1982
    %v2559 = vcvt.s32.f32 %v1983
    %v2560 = vcvt.s32.f32 %v1984
    %v2561 = vcvt.s32.f32 %v1985
    %v2562 = vcvt.s32.f32 %v1986
    %v2563 = vcvt.s32.f32 %v1987
    %v2564 = vcvt.s32.f32 %v1988
    %v2565 = vcvt.s32.f32 %v1989
    %v2566 = vcvt.s32.f32 %v1990
    %v2567 = vcvt.s32.f32 %v1991
    %v2568 = vcvt.s32.f32 %v1992
    %v2569 = vcvt.s32.f32 %v1993
    %v2570 = vcvt.s32.f32 %v1994
    %v2571 = vcvt.s32.f32 %v1995
    %v2572 = vcvt.s32.f32 %v1996
    %v2573 = vcvt.s32.f32 %v1997
    %v2574 = vcvt.s32.f32 %v1998
    %v2575 = vcvt.s32.f32 %v1999
    %v2576 = vcvt.s32.f32 %v2000
    %v2577 = vcvt.s32.f32 %v2001
    %v2578 = vcvt.s32.f32 %v2002
    %v2579 = vcvt.s32.f32 %v2003
    %v2580 = vcvt.s32.f32 %v2004
    %v2581 = vcvt.s32.f32 %v2005
    %v2582 = vcvt.s32.f32 %v2006
    %v2583 = vcvt.s32.f32 %v2007
    %v2584 = vcvt.s32.f32 %v2008
    %v2585 = vcvt.s32.f32 %v2009
    %v2586 = vcvt.s32.f32 %v2010
    %v2587 = vcvt.s32.f32 %v2011
    %v2588 = vcvt.s32.f32 %v2012
    %v2589 = vcvt.s32.f32 %v2013
    %v2590 = vcvt.s32.f32 %v2014
    %v2591 = vcvt.s32.f32 %v2015
    %v2592 = vcvt.s32.f32 %v2016
    %v2593 = vcvt.s32.f32 %v2017
    %v2594 = vcvt.s32.f32 %v2018
    %v2595 = vcvt.s32.f32 %v2019
    %v2596 = vcvt.s32.f32 %v2020
    %v2597 = vcvt.s32.f32 %v2021
    %v2598 = vcvt.s32.f32 %v2022
    %v2599 = vcvt.s32.f32 %v2023
    %v2600 = vcvt.s32.f32 %v2024
    %v2601 = vcvt.s32.f32 %v2025
    %v2602 = vcvt.s32.f32 %v2026
    %v2603 = vcvt.s32.f32 %v2027
    %v2604 = vcvt.s32.f32 %v2028
    %v2605 = vcvt.s32.f32 %v2029
    %v2606 = vcvt.s32.f32 %v2030
    %v2607 = vcvt.s32.f32 %v2031
    %v2608 = vcvt.s32.f32 %v2032
    %v2609 = vcvt.s32.f32 %v2033
    %v2610 = vcvt.s32.f32 %v2034
    %v2611 = vcvt.s32.f32 %v2035
    %v2612 = vcvt.s32.f32 %v2036
    %v2613 = vcvt.s32.f32 %v2037
    %v2614 = vcvt.s32.f32 %v2038
    %v2615 = vcvt.s32.f32 %v2039
    %v2616 = vcvt.s32.f32 %v2040
    %v2617 = vcvt.s32.f32 %v2041
    %v2618 = vcvt.s32.f32 %v2042
    %v2619 = vcvt.s32.f32 %v2043
    %v2620 = vcvt.s32.f32 %v2044
    %v2621 = vcvt.s32.f32 %v2045
    %v2622 = vcvt.s32.f32 %v2046
    %v2623 = vcvt.s32.f32 %v2047
    %v2624 = vcvt.s32.f32 %v2048
    %v2625 = vcvt.s32.f32 %v2049
    %v2626 = vcvt.s32.f32 %v2050
    %v2627 = vcvt.s32.f32 %v2051
    %v2628 = vcvt.s32.f32 %v2052
    %v2629 = vcvt.s32.f32 %v2053
    %v2630 = vcvt.s32.f32 %v2054
    %v2631 = vcvt.s32.f32 %v2055
    %v2632 = vcvt.s32.f32 %v2056
    %v2633 = vcvt.s32.f32 %v2057
    %v2634 = vcvt.s32.f32 %v2058
    %v2635 = vcvt.s32.f32 %v2059
    %v2636 = vcvt.s32.f32 %v2060
    %v2637 = vcvt.s32.f32 %v2061
    %v2638 = vcvt.s32.f32 %v2062
    %v2639 = vcvt.s32.f32 %v2063
    %v2640 = vcvt.s32.f32 %v2064
    %v2641 = vpack.c.bf16 %v2071, %v2065
    %v2642 = vpack.c.bf16 %v2072, %v2066
    %v2643 = vpack.c.bf16 %v2073, %v2067
    %v2644 = vpack.c.bf16 %v2074, %v2068
    %v2645 = vpack.c.bf16 %v2075, %v2069
    %v2646 = vpack.c.bf16 %v2076, %v2070
    %v2647 = vpack.c.bf16 %v2083, %v2077
    %v2648 = vpack.c.bf16 %v2084, %v2078
    %v2649 = vpack.c.bf16 %v2085, %v2079
    %v2650 = vpack.c.bf16 %v2086, %v2080
    %v2651 = vpack.c.bf16 %v2087, %v2081
    %v2652 = vpack.c.bf16 %v2088, %v2082
    %v2653 = vpack.c.bf16 %v2095, %v2089
    %v2654 = vpack.c.bf16 %v2096, %v2090
    %v2655 = vpack.c.bf16 %v2097, %v2091
    %v2656 = vpack.c.bf16 %v2098, %v2092
    %v2657 = vpack.c.bf16 %v2099, %v2093
    %v2658 = vpack.c.bf16 %v2100, %v2094
    %v2659 = vpack.c.bf16 %v2107, %v2101
    %v2660 = vpack.c.bf16 %v2108, %v2102
    %v2661 = vpack.c.bf16 %v2109, %v2103
    %v2662 = vpack.c.bf16 %v2110, %v2104
    %v2663 = vpack.c.bf16 %v2111, %v2105
    %v2664 = vpack.c.bf16 %v2112, %v2106
    %v2665 = vpack.c.bf16 %v2119, %v2113
    %v2666 = vpack.c.bf16 %v2120, %v2114
    %v2667 = vpack.c.bf16 %v2121, %v2115
    %v2668 = vpack.c.bf16 %v2122, %v2116
    %v2669 = vpack.c.bf16 %v2123, %v2117
    %v2670 = vpack.c.bf16 %v2124, %v2118
    %v2671 = vpack.c.bf16 %v2131, %v2125
    %v2672 = vpack.c.bf16 %v2132, %v2126
    %v2673 = vpack.c.bf16 %v2133, %v2127
    %v2674 = vpack.c.bf16 %v2134, %v2128
    %v2675 = vpack.c.bf16 %v2135, %v2129
    %v2676 = vpack.c.bf16 %v2136, %v2130
    %v2677 = vpack.c.bf16 %v2143, %v2137
    %v2678 = vpack.c.bf16 %v2144, %v2138
    %v2679 = vpack.c.bf16 %v2145, %v2139
    %v2680 = vpack.c.bf16 %v2146, %v2140
    %v2681 = vpack.c.bf16 %v2147, %v2141
    %v2682 = vpack.c.bf16 %v2148, %v2142
    %v2683 = vpack.c.bf16 %v2155, %v2149
    %v2684 = vpack.c.bf16 %v2156, %v2150
    %v2685 = vpack.c.bf16 %v2157, %v2151
    %v2686 = vpack.c.bf16 %v2158, %v2152
    %v2687 = vpack.c.bf16 %v2159, %v2153
    %v2688 = vpack.c.bf16 %v2160, %v2154
    %v2689 = vpack.c.bf16 %v2167, %v2161
    %v2690 = vpack.c.bf16 %v2168, %v2162
    %v2691 = vpack.c.bf16 %v2169, %v2163
    %v2692 = vpack.c.bf16 %v2170, %v2164
    %v2693 = vpack.c.bf16 %v2171, %v2165
    %v2694 = vpack.c.bf16 %v2172, %v2166
    %v2695 = vpack.c.bf16 %v2179, %v2173
    %v2696 = vpack.c.bf16 %v2180, %v2174
    %v2697 = vpack.c.bf16 %v2181, %v2175
    %v2698 = vpack.c.bf16 %v2182, %v2176
    %v2699 = vpack.c.bf16 %v2183, %v2177
    %v2700 = vpack.c.bf16 %v2184, %v2178
    %v2701 = vpack.c.bf16 %v2191, %v2185
    %v2702 = vpack.c.bf16 %v2192, %v2186
    %v2703 = vpack.c.bf16 %v2193, %v2187
    %v2704 = vpack.c.bf16 %v2194, %v2188
    %v2705 = vpack.c.bf16 %v2195, %v2189
    %v2706 = vpack.c.bf16 %v2196, %v2190
    %v2707 = vpack.c.bf16 %v2203, %v2197
    %v2708 = vpack.c.bf16 %v2204, %v2198
    %v2709 = vpack.c.bf16 %v2205, %v2199
    %v2710 = vpack.c.bf16 %v2206, %v2200
    %v2711 = vpack.c.bf16 %v2207, %v2201
    %v2712 = vpack.c.bf16 %v2208, %v2202
    %v2713 = vpack.c.bf16 %v2215, %v2209
    %v2714 = vpack.c.bf16 %v2216, %v2210
    %v2715 = vpack.c.bf16 %v2217, %v2211
    %v2716 = vpack.c.bf16 %v2218, %v2212
    %v2717 = vpack.c.bf16 %v2219, %v2213
    %v2718 = vpack.c.bf16 %v2220, %v2214
    %v2719 = vpack.c.bf16 %v2227, %v2221
    %v2720 = vpack.c.bf16 %v2228, %v2222
    %v2721 = vpack.c.bf16 %v2229, %v2223
    %v2722 = vpack.c.bf16 %v2230, %v2224
    %v2723 = vpack.c.bf16 %v2231, %v2225
    %v2724 = vpack.c.bf16 %v2232, %v2226
    %v2725 = vpack.c.bf16 %v2239, %v2233
    %v2726 = vpack.c.bf16 %v2240, %v2234
    %v2727 = vpack.c.bf16 %v2241, %v2235
    %v2728 = vpack.c.bf16 %v2242, %v2236
    %v2729 = vpack.c.bf16 %v2243, %v2237
    %v2730 = vpack.c.bf16 %v2244, %v2238
    %v2731 = vpack.c.bf16 %v2251, %v2245
    %v2732 = vpack.c.bf16 %v2252, %v2246
    %v2733 = vpack.c.bf16 %v2253, %v2247
    %v2734 = vpack.c.bf16 %v2254, %v2248
    %v2735 = vpack.c.bf16 %v2255, %v2249
    %v2736 = vpack.c.bf16 %v2256, %v2250
    %v2737 = vpack.c.bf16 %v2263, %v2257
    %v2738 = vpack.c.bf16 %v2264, %v2258
    %v2739 = vpack.c.bf16 %v2265, %v2259
    %v2740 = vpack.c.bf16 %v2266, %v2260
    %v2741 = vpack.c.bf16 %v2267, %v2261
    %v2742 = vpack.c.bf16 %v2268, %v2262
    %v2743 = vpack.c.bf16 %v2275, %v2269
    %v2744 = vpack.c.bf16 %v2276, %v2270
    %v2745 = vpack.c.bf16 %v2277, %v2271
    %v2746 = vpack.c.bf16 %v2278, %v2272
    %v2747 = vpack.c.bf16 %v2279, %v2273
    %v2748 = vpack.c.bf16 %v2280, %v2274
    %v2749 = vpack.c.bf16 %v2287, %v2281
    %v2750 = vpack.c.bf16 %v2288, %v2282
    %v2751 = vpack.c.bf16 %v2289, %v2283
    %v2752 = vpack.c.bf16 %v2290, %v2284
    %v2753 = vpack.c.bf16 %v2291, %v2285
    %v2754 = vpack.c.bf16 %v2292, %v2286
    %v2755 = vpack.c.bf16 %v2299, %v2293
    %v2756 = vpack.c.bf16 %v2300, %v2294
    %v2757 = vpack.c.bf16 %v2301, %v2295
    %v2758 = vpack.c.bf16 %v2302, %v2296
    %v2759 = vpack.c.bf16 %v2303, %v2297
    %v2760 = vpack.c.bf16 %v2304, %v2298
    %v2761 = vpack.c.bf16 %v2311, %v2305
    %v2762 = vpack.c.bf16 %v2312, %v2306
    %v2763 = vpack.c.bf16 %v2313, %v2307
    %v2764 = vpack.c.bf16 %v2314, %v2308
    %v2765 = vpack.c.bf16 %v2315, %v2309
    %v2766 = vpack.c.bf16 %v2316, %v2310
    %v2767 = vpack.c.bf16 %v2323, %v2317
    %v2768 = vpack.c.bf16 %v2324, %v2318
    %v2769 = vpack.c.bf16 %v2325, %v2319
    %v2770 = vpack.c.bf16 %v2326, %v2320
    %v2771 = vpack.c.bf16 %v2327, %v2321
    %v2772 = vpack.c.bf16 %v2328, %v2322
    %v2773 = vpack.c.bf16 %v2335, %v2329
    %v2774 = vpack.c.bf16 %v2336, %v2330
    %v2775 = vpack.c.bf16 %v2337, %v2331
    %v2776 = vpack.c.bf16 %v2338, %v2332
    %v2777 = vpack.c.bf16 %v2339, %v2333
    %v2778 = vpack.c.bf16 %v2340, %v2334
    %v2779 = vpack.c.bf16 %v2347, %v2341
    %v2780 = vpack.c.bf16 %v2348, %v2342
    %v2781 = vpack.c.bf16 %v2349, %v2343
    %v2782 = vpack.c.bf16 %v2350, %v2344
    %v2783 = vpack.c.bf16 %v2351, %v2345
    %v2784 = vpack.c.bf16 %v2352, %v2346
    %v2785 = vpack.c.bf16 %v2359, %v2353
    %v2786 = vpack.c.bf16 %v2360, %v2354
    %v2787 = vpack.c.bf16 %v2361, %v2355
    %v2788 = vpack.c.bf16 %v2362, %v2356
    %v2789 = vpack.c.bf16 %v2363, %v2357
    %v2790 = vpack.c.bf16 %v2364, %v2358
    %v2791 = vpack.c.bf16 %v2371, %v2365
    %v2792 = vpack.c.bf16 %v2372, %v2366
    %v2793 = vpack.c.bf16 %v2373, %v2367
    %v2794 = vpack.c.bf16 %v2374, %v2368
    %v2795 = vpack.c.bf16 %v2375, %v2369
    %v2796 = vpack.c.bf16 %v2376, %v2370
    %v2797 = vpack.c.bf16 %v2383, %v2377
    %v2798 = vpack.c.bf16 %v2384, %v2378
    %v2799 = vpack.c.bf16 %v2385, %v2379
    %v2800 = vpack.c.bf16 %v2386, %v2380
    %v2801 = vpack.c.bf16 %v2387, %v2381
    %v2802 = vpack.c.bf16 %v2388, %v2382
    %v2803 = vpack.c.bf16 %v2395, %v2389
    %v2804 = vpack.c.bf16 %v2396, %v2390
    %v2805 = vpack.c.bf16 %v2397, %v2391
    %v2806 = vpack.c.bf16 %v2398, %v2392
    %v2807 = vpack.c.bf16 %v2399, %v2393
    %v2808 = vpack.c.bf16 %v2400, %v2394
    %v2809 = vpack.c.bf16 %v2407, %v2401
    %v2810 = vpack.c.bf16 %v2408, %v2402
    %v2811 = vpack.c.bf16 %v2409, %v2403
    %v2812 = vpack.c.bf16 %v2410, %v2404
    %v2813 = vpack.c.bf16 %v2411, %v2405
    %v2814 = vpack.c.bf16 %v2412, %v2406
    %v2815 = vpack.c.bf16 %v2419, %v2413
    %v2816 = vpack.c.bf16 %v2420, %v2414
    %v2817 = vpack.c.bf16 %v2421, %v2415
    %v2818 = vpack.c.bf16 %v2422, %v2416
    %v2819 = vpack.c.bf16 %v2423, %v2417
    %v2820 = vpack.c.bf16 %v2424, %v2418
    %v2821 = vpack.c.bf16 %v2431, %v2425
    %v2822 = vpack.c.bf16 %v2432, %v2426
    %v2823 = vpack.c.bf16 %v2433, %v2427
    %v2824 = vpack.c.bf16 %v2434, %v2428
    %v2825 = vpack.c.bf16 %v2435, %v2429
    %v2826 = vpack.c.bf16 %v2436, %v2430
    %v2827 = vpack.c.bf16 %v2443, %v2437
    %v2828 = vpack.c.bf16 %v2444, %v2438
    %v2829 = vpack.c.bf16 %v2445, %v2439
    %v2830 = vpack.c.bf16 %v2446, %v2440
    %v2831 = vpack.c.bf16 %v2447, %v2441
    %v2832 = vpack.c.bf16 %v2448, %v2442
    %v2833 = vpack.c.bf16 %v2455, %v2449
    %v2834 = vpack.c.bf16 %v2456, %v2450
    %v2835 = vpack.c.bf16 %v2457, %v2451
    %v2836 = vpack.c.bf16 %v2458, %v2452
    %v2837 = vpack.c.bf16 %v2459, %v2453
    %v2838 = vpack.c.bf16 %v2460, %v2454
    %v2839 = vpack.c.bf16 %v2467, %v2461
    %v2840 = vpack.c.bf16 %v2468, %v2462
    %v2841 = vpack.c.bf16 %v2469, %v2463
    %v2842 = vpack.c.bf16 %v2470, %v2464
    %v2843 = vpack.c.bf16 %v2471, %v2465
    %v2844 = vpack.c.bf16 %v2472, %v2466
    %v2845 = vpack.c.bf16 %v2479, %v2473
    %v2846 = vpack.c.bf16 %v2480, %v2474
    %v2847 = vpack.c.bf16 %v2481, %v2475
    %v2848 = vpack.c.bf16 %v2482, %v2476
    %v2849 = vpack.c.bf16 %v2483, %v2477
    %v2850 = vpack.c.bf16 %v2484, %v2478
    %v2851 = vpack.c.bf16 %v2491, %v2485
    %v2852 = vpack.c.bf16 %v2492, %v2486
    %v2853 = vpack.c.bf16 %v2493, %v2487
    %v2854 = vpack.c.bf16 %v2494, %v2488
    %v2855 = vpack.c.bf16 %v2495, %v2489
    %v2856 = vpack.c.bf16 %v2496, %v2490
    %v2857 = vpack.c.bf16 %v2503, %v2497
    %v2858 = vpack.c.bf16 %v2504, %v2498
    %v2859 = vpack.c.bf16 %v2505, %v2499
    %v2860 = vpack.c.bf16 %v2506, %v2500
    %v2861 = vpack.c.bf16 %v2507, %v2501
    %v2862 = vpack.c.bf16 %v2508, %v2502
    %v2863 = vpack.c.bf16 %v2515, %v2509
    %v2864 = vpack.c.bf16 %v2516, %v2510
    %v2865 = vpack.c.bf16 %v2517, %v2511
    %v2866 = vpack.c.bf16 %v2518, %v2512
    %v2867 = vpack.c.bf16 %v2519, %v2513
    %v2868 = vpack.c.bf16 %v2520, %v2514
    %v2869 = vpack.c.bf16 %v2527, %v2521
    %v2870 = vpack.c.bf16 %v2528, %v2522
    %v2871 = vpack.c.bf16 %v2529, %v2523
    %v2872 = vpack.c.bf16 %v2530, %v2524
    %v2873 = vpack.c.bf16 %v2531, %v2525
    %v2874 = vpack.c.bf16 %v2532, %v2526
    %v2875 = vpack.c.bf16 %v2539, %v2533
    %v2876 = vpack.c.bf16 %v2540, %v2534
    %v2877 = vpack.c.bf16 %v2541, %v2535
    %v2878 = vpack.c.bf16 %v2542, %v2536
    %v2879 = vpack.c.bf16 %v2543, %v2537
    %v2880 = vpack.c.bf16 %v2544, %v2538
    %v2881 = vpack.c.bf16 %v2551, %v2545
    %v2882 = vpack.c.bf16 %v2552, %v2546
    %v2883 = vpack.c.bf16 %v2553, %v2547
    %v2884 = vpack.c.bf16 %v2554, %v2548
    %v2885 = vpack.c.bf16 %v2555, %v2549
    %v2886 = vpack.c.bf16 %v2556, %v2550
    %v2887 = vpack.c.bf16 %v2563, %v2557
    %v2888 = vpack.c.bf16 %v2564, %v2558
    %v2889 = vpack.c.bf16 %v2565, %v2559
    %v2890 = vpack.c.bf16 %v2566, %v2560
    %v2891 = vpack.c.bf16 %v2567, %v2561
    %v2892 = vpack.c.bf16 %v2568, %v2562
    %v2893 = vpack.c.bf16 %v2575, %v2569
    %v2894 = vpack.c.bf16 %v2576, %v2570
    %v2895 = vpack.c.bf16 %v2577, %v2571
    %v2896 = vpack.c.bf16 %v2578, %v2572
    %v2897 = vpack.c.bf16 %v2579, %v2573
    %v2898 = vpack.c.bf16 %v2580, %v2574
    %v2899 = vpack.c.bf16 %v2587, %v2581
    %v2900 = vpack.c.bf16 %v2588, %v2582
    %v2901 = vpack.c.bf16 %v2589, %v2583
    %v2902 = vpack.c.bf16 %v2590, %v2584
    %v2903 = vpack.c.bf16 %v2591, %v2585
    %v2904 = vpack.c.bf16 %v2592, %v2586
    %v2905 = vpack.c.bf16 %v2599, %v2593
    %v2906 = vpack.c.bf16 %v2600, %v2594
    %v2907 = vpack.c.bf16 %v2601, %v2595
    %v2908 = vpack.c.bf16 %v2602, %v2596
    %v2909 = vpack.c.bf16 %v2603, %v2597
    %v2910 = vpack.c.bf16 %v2604, %v2598
    %v2911 = vpack.c.bf16 %v2611, %v2605
    %v2912 = vpack.c.bf16 %v2612, %v2606
    %v2913 = vpack.c.bf16 %v2613, %v2607
    %v2914 = vpack.c.bf16 %v2614, %v2608
    %v2915 = vpack.c.bf16 %v2615, %v2609
    %v2916 = vpack.c.bf16 %v2616, %v2610
    %v2917 = vpack.c.bf16 %v2623, %v2617
    %v2918 = vpack.c.bf16 %v2624, %v2618
    %v2919 = vpack.c.bf16 %v2625, %v2619
    %v2920 = vpack.c.bf16 %v2626, %v2620
    %v2921 = vpack.c.bf16 %v2627, %v2621
    %v2922 = vpack.c.bf16 %v2628, %v2622
    %v2923 = vpack.c.bf16 %v2635, %v2629
    %v2924 = vpack.c.bf16 %v2636, %v2630
    %v2925 = vpack.c.bf16 %v2637, %v2631
    %v2926 = vpack.c.bf16 %v2638, %v2632
    %v2927 = vpack.c.bf16 %v2639, %v2633
    %v2928 = vpack.c.bf16 %v2640, %v2634
    %v2929 = vpack.c.bf16 %v1339, %v1333
    %v2930 = vpack.c.bf16 %v1340, %v1334
    %v2931 = vpack.c.bf16 %v1341, %v1335
    %v2932 = vpack.c.bf16 %v1342, %v1336
    %v2933 = vpack.c.bf16 %v1343, %v1337
    %v2934 = vpack.c.bf16 %v1344, %v1338
    %2935 = vmatpush.bf16.msra.mxu0 %v2683
    %2936 = vmatpush.bf16.msra.mxu0 %v2677
    %2937 = vmatpush.bf16.msra.mxu0 %v2671
    %2938 = vmatpush.bf16.msra.mxu0 %v2665
    %2939 = vmatpush.bf16.msra.mxu0 %v2659
    %2940 = vmatpush.bf16.msra.mxu0 %v2653
    %2941 = vmatpush.bf16.msra.mxu0 %v2647
    %2942 = vmatpush.bf16.msra.mxu0 %v2641
    %2943 = vmatmul.bf16.gmra.mxu0 %v2929
    %v2944 = vpop.f32.mrf.mxu0
    %v2945 = vadd.f32 0.0, %v2944
    %v2946 = vpop.f32.mrf.mxu0
    %v2947 = vadd.f32 0.0, %v2946
    %2948 = vdwg.mxu0
    %2949 = vmatpush.bf16.msra.mxu0 %v2731
    %2950 = vmatpush.bf16.msra.mxu0 %v2725
    %2951 = vmatpush.bf16.msra.mxu0 %v2719
    %2952 = vmatpush.bf16.msra.mxu0 %v2713
    %2953 = vmatpush.bf16.msra.mxu0 %v2707
    %2954 = vmatpush.bf16.msra.mxu0 %v2701
    %2955 = vmatpush.bf16.msra.mxu0 %v2695
    %2956 = vmatpush.bf16.msra.mxu0 %v2689
    %2957 = vmatmul.bf16.gmra.mxu0 %v2930
    %v2958 = vpop.f32.mrf.mxu0
    %v2959 = vadd.f32 %v2945, %v2958
    %v2960 = vpop.f32.mrf.mxu0
    %v2961 = vadd.f32 %v2947, %v2960
    %2962 = vdwg.mxu0
    %2963 = vmatpush.bf16.msra.mxu0 %v2779
    %2964 = vmatpush.bf16.msra.mxu0 %v2773
    %2965 = vmatpush.bf16.msra.mxu0 %v2767
    %2966 = vmatpush.bf16.msra.mxu0 %v2761
    %2967 = vmatpush.bf16.msra.mxu0 %v2755
    %2968 = vmatpush.bf16.msra.mxu0 %v2749
    %2969 = vmatpush.bf16.msra.mxu0 %v2743
    %2970 = vmatpush.bf16.msra.mxu0 %v2737
    %2971 = vmatmul.bf16.gmra.mxu0 %v2931
    %v2972 = vpop.f32.mrf.mxu0
    %v2973 = vadd.f32 %v2959, %v2972
    %v2974 = vpop.f32.mrf.mxu0
    %v2975 = vadd.f32 %v2961, %v2974
    %2976 = vdwg.mxu0
    %2977 = vmatpush.bf16.msra.mxu0 %v2827
    %2978 = vmatpush.bf16.msra.mxu0 %v2821
    %2979 = vmatpush.bf16.msra.mxu0 %v2815
    %2980 = vmatpush.bf16.msra.mxu0 %v2809
    %2981 = vmatpush.bf16.msra.mxu0 %v2803
    %2982 = vmatpush.bf16.msra.mxu0 %v2797
    %2983 = vmatpush.bf16.msra.mxu0 %v2791
    %2984 = vmatpush.bf16.msra.mxu0 %v2785
    %2985 = vmatmul.bf16.gmra.mxu0 %v2932
    %v2986 = vpop.f32.mrf.mxu0
    %v2987 = vadd.f32 %v2973, %v2986
    %v2988 = vpop.f32.mrf.mxu0
    %v2989 = vadd.f32 %v2975, %v2988
    %2990 = vdwg.mxu0
    %2991 = vmatpush.bf16.msra.mxu0 %v2875
    %2992 = vmatpush.bf16.msra.mxu0 %v2869
    %2993 = vmatpush.bf16.msra.mxu0 %v2863
    %2994 = vmatpush.bf16.msra.mxu0 %v2857
    %2995 = vmatpush.bf16.msra.mxu0 %v2851
    %2996 = vmatpush.bf16.msra.mxu0 %v2845
    %2997 = vmatpush.bf16.msra.mxu0 %v2839
    %2998 = vmatpush.bf16.msra.mxu0 %v2833
    %2999 = vmatmul.bf16.gmra.mxu0 %v2933
    %v3000 = vpop.f32.mrf.mxu0
    %v3001 = vadd.f32 %v2987, %v3000
    %v3002 = vpop.f32.mrf.mxu0
    %v3003 = vadd.f32 %v2989, %v3002
    %3004 = vdwg.mxu0
    %3005 = vmatpush.bf16.msra.mxu0 %v2923
    %3006 = vmatpush.bf16.msra.mxu0 %v2917
    %3007 = vmatpush.bf16.msra.mxu0 %v2911
    %3008 = vmatpush.bf16.msra.mxu0 %v2905
    %3009 = vmatpush.bf16.msra.mxu0 %v2899
    %3010 = vmatpush.bf16.msra.mxu0 %v2893
    %3011 = vmatpush.bf16.msra.mxu0 %v2887
    %3012 = vmatpush.bf16.msra.mxu0 %v2881
    %3013 = vmatmul.bf16.gmra.mxu0 %v2934
    %v3014 = vpop.f32.mrf.mxu0
    %v3015 = vadd.f32 %v3001, %v3014
    %v3016 = vpop.f32.mrf.mxu0
    %v3017 = vadd.f32 %v3003, %v3016
    %3018 = vdwg.mxu0
    %3019 = vmatpush.bf16.msra.mxu0 %v2684
    %3020 = vmatpush.bf16.msra.mxu0 %v2678
    %3021 = vmatpush.bf16.msra.mxu0 %v2672
    %3022 = vmatpush.bf16.msra.mxu0 %v2666
    %3023 = vmatpush.bf16.msra.mxu0 %v2660
    %3024 = vmatpush.bf16.msra.mxu0 %v2654
    %3025 = vmatpush.bf16.msra.mxu0 %v2648
    %3026 = vmatpush.bf16.msra.mxu0 %v2642
    %3027 = vmatmul.bf16.gmra.mxu0 %v2929
    %v3028 = vpop.f32.mrf.mxu0
    %v3029 = vadd.f32 0.0, %v3028
    %v3030 = vpop.f32.mrf.mxu0
    %v3031 = vadd.f32 0.0, %v3030
    %3032 = vdwg.mxu0
    %3033 = vmatpush.bf16.msra.mxu0 %v2732
    %3034 = vmatpush.bf16.msra.mxu0 %v2726
    %3035 = vmatpush.bf16.msra.mxu0 %v2720
    %3036 = vmatpush.bf16.msra.mxu0 %v2714
    %3037 = vmatpush.bf16.msra.mxu0 %v2708
    %3038 = vmatpush.bf16.msra.mxu0 %v2702
    %3039 = vmatpush.bf16.msra.mxu0 %v2696
    %3040 = vmatpush.bf16.msra.mxu0 %v2690
    %3041 = vmatmul.bf16.gmra.mxu0 %v2930
    %v3042 = vpop.f32.mrf.mxu0
    %v3043 = vadd.f32 %v3029, %v3042
    %v3044 = vpop.f32.mrf.mxu0
    %v3045 = vadd.f32 %v3031, %v3044
    %3046 = vdwg.mxu0
    %3047 = vmatpush.bf16.msra.mxu0 %v2780
    %3048 = vmatpush.bf16.msra.mxu0 %v2774
    %3049 = vmatpush.bf16.msra.mxu0 %v2768
    %3050 = vmatpush.bf16.msra.mxu0 %v2762
    %3051 = vmatpush.bf16.msra.mxu0 %v2756
    %3052 = vmatpush.bf16.msra.mxu0 %v2750
    %3053 = vmatpush.bf16.msra.mxu0 %v2744
    %3054 = vmatpush.bf16.msra.mxu0 %v2738
    %3055 = vmatmul.bf16.gmra.mxu0 %v2931
    %v3056 = vpop.f32.mrf.mxu0
    %v3057 = vadd.f32 %v3043, %v3056
    %v3058 = vpop.f32.mrf.mxu0
    %v3059 = vadd.f32 %v3045, %v3058
    %3060 = vdwg.mxu0
    %3061 = vmatpush.bf16.msra.mxu0 %v2828
    %3062 = vmatpush.bf16.msra.mxu0 %v2822
    %3063 = vmatpush.bf16.msra.mxu0 %v2816
    %3064 = vmatpush.bf16.msra.mxu0 %v2810
    %3065 = vmatpush.bf16.msra.mxu0 %v2804
    %3066 = vmatpush.bf16.msra.mxu0 %v2798
    %3067 = vmatpush.bf16.msra.mxu0 %v2792
    %3068 = vmatpush.bf16.msra.mxu0 %v2786
    %3069 = vmatmul.bf16.gmra.mxu0 %v2932
    %v3070 = vpop.f32.mrf.mxu0
    %v3071 = vadd.f32 %v3057, %v3070
    %v3072 = vpop.f32.mrf.mxu0
    %v3073 = vadd.f32 %v3059, %v3072
    %3074 = vdwg.mxu0
    %3075 = vmatpush.bf16.msra.mxu0 %v2876
    %3076 = vmatpush.bf16.msra.mxu0 %v2870
    %3077 = vmatpush.bf16.msra.mxu0 %v2864
    %3078 = vmatpush.bf16.msra.mxu0 %v2858
    %3079 = vmatpush.bf16.msra.mxu0 %v2852
    %3080 = vmatpush.bf16.msra.mxu0 %v2846
    %3081 = vmatpush.bf16.msra.mxu0 %v2840
    %3082 = vmatpush.bf16.msra.mxu0 %v2834
    %3083 = vmatmul.bf16.gmra.mxu0 %v2933
    %v3084 = vpop.f32.mrf.mxu0
    %v3085 = vadd.f32 %v3071, %v3084
    %v3086 = vpop.f32.mrf.mxu0
    %v3087 = vadd.f32 %v3073, %v3086
    %3088 = vdwg.mxu0
    %3089 = vmatpush.bf16.msra.mxu0 %v2924
    %3090 = vmatpush.bf16.msra.mxu0 %v2918
    %3091 = vmatpush.bf16.msra.mxu0 %v2912
    %3092 = vmatpush.bf16.msra.mxu0 %v2906
    %3093 = vmatpush.bf16.msra.mxu0 %v2900
    %3094 = vmatpush.bf16.msra.mxu0 %v2894
    %3095 = vmatpush.bf16.msra.mxu0 %v2888
    %3096 = vmatpush.bf16.msra.mxu0 %v2882
    %3097 = vmatmul.bf16.gmra.mxu0 %v2934
    %v3098 = vpop.f32.mrf.mxu0
    %v3099 = vadd.f32 %v3085, %v3098
    %v3100 = vpop.f32.mrf.mxu0
    %v3101 = vadd.f32 %v3087, %v3100
    %3102 = vdwg.mxu0
    %3103 = vmatpush.bf16.msra.mxu0 %v2685
    %3104 = vmatpush.bf16.msra.mxu0 %v2679
    %3105 = vmatpush.bf16.msra.mxu0 %v2673
    %3106 = vmatpush.bf16.msra.mxu0 %v2667
    %3107 = vmatpush.bf16.msra.mxu0 %v2661
    %3108 = vmatpush.bf16.msra.mxu0 %v2655
    %3109 = vmatpush.bf16.msra.mxu0 %v2649
    %3110 = vmatpush.bf16.msra.mxu0 %v2643
    %3111 = vmatmul.bf16.gmra.mxu0 %v2929
    %v3112 = vpop.f32.mrf.mxu0
    %v3113 = vadd.f32 0.0, %v3112
    %v3114 = vpop.f32.mrf.mxu0
    %v3115 = vadd.f32 0.0, %v3114
    %3116 = vdwg.mxu0
    %3117 = vmatpush.bf16.msra.mxu0 %v2733
    %3118 = vmatpush.bf16.msra.mxu0 %v2727
    %3119 = vmatpush.bf16.msra.mxu0 %v2721
    %3120 = vmatpush.bf16.msra.mxu0 %v2715
    %3121 = vmatpush.bf16.msra.mxu0 %v2709
    %3122 = vmatpush.bf16.msra.mxu0 %v2703
    %3123 = vmatpush.bf16.msra.mxu0 %v2697
    %3124 = vmatpush.bf16.msra.mxu0 %v2691
    %3125 = vmatmul.bf16.gmra.mxu0 %v2930
    %v3126 = vpop.f32.mrf.mxu0
    %v3127 = vadd.f32 %v3113, %v3126
    %v3128 = vpop.f32.mrf.mxu0
    %v3129 = vadd.f32 %v3115, %v3128
    %3130 = vdwg.mxu0
    %3131 = vmatpush.bf16.msra.mxu0 %v2781
    %3132 = vmatpush.bf16.msra.mxu0 %v2775
    %3133 = vmatpush.bf16.msra.mxu0 %v2769
    %3134 = vmatpush.bf16.msra.mxu0 %v2763
    %3135 = vmatpush.bf16.msra.mxu0 %v2757
    %3136 = vmatpush.bf16.msra.mxu0 %v2751
    %3137 = vmatpush.bf16.msra.mxu0 %v2745
    %3138 = vmatpush.bf16.msra.mxu0 %v2739
    %3139 = vmatmul.bf16.gmra.mxu0 %v2931
    %v3140 = vpop.f32.mrf.mxu0
    %v3141 = vadd.f32 %v3127, %v3140
    %v3142 = vpop.f32.mrf.mxu0
    %v3143 = vadd.f32 %v3129, %v3142
    %3144 = vdwg.mxu0
    %3145 = vmatpush.bf16.msra.mxu0 %v2829
    %3146 = vmatpush.bf16.msra.mxu0 %v2823
    %3147 = vmatpush.bf16.msra.mxu0 %v2817
    %3148 = vmatpush.bf16.msra.mxu0 %v2811
    %3149 = vmatpush.bf16.msra.mxu0 %v2805
    %3150 = vmatpush.bf16.msra.mxu0 %v2799
    %3151 = vmatpush.bf16.msra.mxu0 %v2793
    %3152 = vmatpush.bf16.msra.mxu0 %v2787
    %3153 = vmatmul.bf16.gmra.mxu0 %v2932
    %v3154 = vpop.f32.mrf.mxu0
    %v3155 = vadd.f32 %v3141, %v3154
    %v3156 = vpop.f32.mrf.mxu0
    %v3157 = vadd.f32 %v3143, %v3156
    %3158 = vdwg.mxu0
    %3159 = vmatpush.bf16.msra.mxu0 %v2877
    %3160 = vmatpush.bf16.msra.mxu0 %v2871
    %3161 = vmatpush.bf16.msra.mxu0 %v2865
    %3162 = vmatpush.bf16.msra.mxu0 %v2859
    %3163 = vmatpush.bf16.msra.mxu0 %v2853
    %3164 = vmatpush.bf16.msra.mxu0 %v2847
    %3165 = vmatpush.bf16.msra.mxu0 %v2841
    %3166 = vmatpush.bf16.msra.mxu0 %v2835
    %3167 = vmatmul.bf16.gmra.mxu0 %v2933
    %v3168 = vpop.f32.mrf.mxu0
    %v3169 = vadd.f32 %v3155, %v3168
    %v3170 = vpop.f32.mrf.mxu0
    %v3171 = vadd.f32 %v3157, %v3170
    %3172 = vdwg.mxu0
    %3173 = vmatpush.bf16.msra.mxu0 %v2925
    %3174 = vmatpush.bf16.msra.mxu0 %v2919
    %3175 = vmatpush.bf16.msra.mxu0 %v2913
    %3176 = vmatpush.bf16.msra.mxu0 %v2907
    %3177 = vmatpush.bf16.msra.mxu0 %v2901
    %3178 = vmatpush.bf16.msra.mxu0 %v2895
    %3179 = vmatpush.bf16.msra.mxu0 %v2889
    %3180 = vmatpush.bf16.msra.mxu0 %v2883
    %3181 = vmatmul.bf16.gmra.mxu0 %v2934
    %v3182 = vpop.f32.mrf.mxu0
    %v3183 = vadd.f32 %v3169, %v3182
    %v3184 = vpop.f32.mrf.mxu0
    %v3185 = vadd.f32 %v3171, %v3184
    %3186 = vdwg.mxu0
    %3187 = vmatpush.bf16.msra.mxu0 %v2686
    %3188 = vmatpush.bf16.msra.mxu0 %v2680
    %3189 = vmatpush.bf16.msra.mxu0 %v2674
    %3190 = vmatpush.bf16.msra.mxu0 %v2668
    %3191 = vmatpush.bf16.msra.mxu0 %v2662
    %3192 = vmatpush.bf16.msra.mxu0 %v2656
    %3193 = vmatpush.bf16.msra.mxu0 %v2650
    %3194 = vmatpush.bf16.msra.mxu0 %v2644
    %3195 = vmatmul.bf16.gmra.mxu0 %v2929
    %v3196 = vpop.f32.mrf.mxu0
    %v3197 = vadd.f32 0.0, %v3196
    %v3198 = vpop.f32.mrf.mxu0
    %v3199 = vadd.f32 0.0, %v3198
    %3200 = vdwg.mxu0
    %3201 = vmatpush.bf16.msra.mxu0 %v2734
    %3202 = vmatpush.bf16.msra.mxu0 %v2728
    %3203 = vmatpush.bf16.msra.mxu0 %v2722
    %3204 = vmatpush.bf16.msra.mxu0 %v2716
    %3205 = vmatpush.bf16.msra.mxu0 %v2710
    %3206 = vmatpush.bf16.msra.mxu0 %v2704
    %3207 = vmatpush.bf16.msra.mxu0 %v2698
    %3208 = vmatpush.bf16.msra.mxu0 %v2692
    %3209 = vmatmul.bf16.gmra.mxu0 %v2930
    %v3210 = vpop.f32.mrf.mxu0
    %v3211 = vadd.f32 %v3197, %v3210
    %v3212 = vpop.f32.mrf.mxu0
    %v3213 = vadd.f32 %v3199, %v3212
    %3214 = vdwg.mxu0
    %3215 = vmatpush.bf16.msra.mxu0 %v2782
    %3216 = vmatpush.bf16.msra.mxu0 %v2776
    %3217 = vmatpush.bf16.msra.mxu0 %v2770
    %3218 = vmatpush.bf16.msra.mxu0 %v2764
    %3219 = vmatpush.bf16.msra.mxu0 %v2758
    %3220 = vmatpush.bf16.msra.mxu0 %v2752
    %3221 = vmatpush.bf16.msra.mxu0 %v2746
    %3222 = vmatpush.bf16.msra.mxu0 %v2740
    %3223 = vmatmul.bf16.gmra.mxu0 %v2931
    %v3224 = vpop.f32.mrf.mxu0
    %v3225 = vadd.f32 %v3211, %v3224
    %v3226 = vpop.f32.mrf.mxu0
    %v3227 = vadd.f32 %v3213, %v3226
    %3228 = vdwg.mxu0
    %3229 = vmatpush.bf16.msra.mxu0 %v2830
    %3230 = vmatpush.bf16.msra.mxu0 %v2824
    %3231 = vmatpush.bf16.msra.mxu0 %v2818
    %3232 = vmatpush.bf16.msra.mxu0 %v2812
    %3233 = vmatpush.bf16.msra.mxu0 %v2806
    %3234 = vmatpush.bf16.msra.mxu0 %v2800
    %3235 = vmatpush.bf16.msra.mxu0 %v2794
    %3236 = vmatpush.bf16.msra.mxu0 %v2788
    %3237 = vmatmul.bf16.gmra.mxu0 %v2932
    %v3238 = vpop.f32.mrf.mxu0
    %v3239 = vadd.f32 %v3225, %v3238
    %v3240 = vpop.f32.mrf.mxu0
    %v3241 = vadd.f32 %v3227, %v3240
    %3242 = vdwg.mxu0
    %3243 = vmatpush.bf16.msra.mxu0 %v2878
    %3244 = vmatpush.bf16.msra.mxu0 %v2872
    %3245 = vmatpush.bf16.msra.mxu0 %v2866
    %3246 = vmatpush.bf16.msra.mxu0 %v2860
    %3247 = vmatpush.bf16.msra.mxu0 %v2854
    %3248 = vmatpush.bf16.msra.mxu0 %v2848
    %3249 = vmatpush.bf16.msra.mxu0 %v2842
    %3250 = vmatpush.bf16.msra.mxu0 %v2836
    %3251 = vmatmul.bf16.gmra.mxu0 %v2933
    %v3252 = vpop.f32.mrf.mxu0
    %v3253 = vadd.f32 %v3239, %v3252
    %v3254 = vpop.f32.mrf.mxu0
    %v3255 = vadd.f32 %v3241, %v3254
    %3256 = vdwg.mxu0
    %3257 = vmatpush.bf16.msra.mxu0 %v2926
    %3258 = vmatpush.bf16.msra.mxu0 %v2920
    %3259 = vmatpush.bf16.msra.mxu0 %v2914
    %3260 = vmatpush.bf16.msra.mxu0 %v2908
    %3261 = vmatpush.bf16.msra.mxu0 %v2902
    %3262 = vmatpush.bf16.msra.mxu0 %v2896
    %3263 = vmatpush.bf16.msra.mxu0 %v2890
    %3264 = vmatpush.bf16.msra.mxu0 %v2884
    %3265 = vmatmul.bf16.gmra.mxu0 %v2934
    %v3266 = vpop.f32.mrf.mxu0
    %v3267 = vadd.f32 %v3253, %v3266
    %v3268 = vpop.f32.mrf.mxu0
    %v3269 = vadd.f32 %v3255, %v3268
    %3270 = vdwg.mxu0
    %3271 = vmatpush.bf16.msra.mxu0 %v2687
    %3272 = vmatpush.bf16.msra.mxu0 %v2681
    %3273 = vmatpush.bf16.msra.mxu0 %v2675
    %3274 = vmatpush.bf16.msra.mxu0 %v2669
    %3275 = vmatpush.bf16.msra.mxu0 %v2663
    %3276 = vmatpush.bf16.msra.mxu0 %v2657
    %3277 = vmatpush.bf16.msra.mxu0 %v2651
    %3278 = vmatpush.bf16.msra.mxu0 %v2645
    %3279 = vmatmul.bf16.gmra.mxu0 %v2929
    %v3280 = vpop.f32.mrf.mxu0
    %v3281 = vadd.f32 0.0, %v3280
    %v3282 = vpop.f32.mrf.mxu0
    %v3283 = vadd.f32 0.0, %v3282
    %3284 = vdwg.mxu0
    %3285 = vmatpush.bf16.msra.mxu0 %v2735
    %3286 = vmatpush.bf16.msra.mxu0 %v2729
    %3287 = vmatpush.bf16.msra.mxu0 %v2723
    %3288 = vmatpush.bf16.msra.mxu0 %v2717
    %3289 = vmatpush.bf16.msra.mxu0 %v2711
    %3290 = vmatpush.bf16.msra.mxu0 %v2705
    %3291 = vmatpush.bf16.msra.mxu0 %v2699
    %3292 = vmatpush.bf16.msra.mxu0 %v2693
    %3293 = vmatmul.bf16.gmra.mxu0 %v2930
    %v3294 = vpop.f32.mrf.mxu0
    %v3295 = vadd.f32 %v3281, %v3294
    %v3296 = vpop.f32.mrf.mxu0
    %v3297 = vadd.f32 %v3283, %v3296
    %3298 = vdwg.mxu0
    %3299 = vmatpush.bf16.msra.mxu0 %v2783
    %3300 = vmatpush.bf16.msra.mxu0 %v2777
    %3301 = vmatpush.bf16.msra.mxu0 %v2771
    %3302 = vmatpush.bf16.msra.mxu0 %v2765
    %3303 = vmatpush.bf16.msra.mxu0 %v2759
    %3304 = vmatpush.bf16.msra.mxu0 %v2753
    %3305 = vmatpush.bf16.msra.mxu0 %v2747
    %3306 = vmatpush.bf16.msra.mxu0 %v2741
    %3307 = vmatmul.bf16.gmra.mxu0 %v2931
    %v3308 = vpop.f32.mrf.mxu0
    %v3309 = vadd.f32 %v3295, %v3308
    %v3310 = vpop.f32.mrf.mxu0
    %v3311 = vadd.f32 %v3297, %v3310
    %3312 = vdwg.mxu0
    %3313 = vmatpush.bf16.msra.mxu0 %v2831
    %3314 = vmatpush.bf16.msra.mxu0 %v2825
    %3315 = vmatpush.bf16.msra.mxu0 %v2819
    %3316 = vmatpush.bf16.msra.mxu0 %v2813
    %3317 = vmatpush.bf16.msra.mxu0 %v2807
    %3318 = vmatpush.bf16.msra.mxu0 %v2801
    %3319 = vmatpush.bf16.msra.mxu0 %v2795
    %3320 = vmatpush.bf16.msra.mxu0 %v2789
    %3321 = vmatmul.bf16.gmra.mxu0 %v2932
    %v3322 = vpop.f32.mrf.mxu0
    %v3323 = vadd.f32 %v3309, %v3322
    %v3324 = vpop.f32.mrf.mxu0
    %v3325 = vadd.f32 %v3311, %v3324
    %3326 = vdwg.mxu0
    %3327 = vmatpush.bf16.msra.mxu0 %v2879
    %3328 = vmatpush.bf16.msra.mxu0 %v2873
    %3329 = vmatpush.bf16.msra.mxu0 %v2867
    %3330 = vmatpush.bf16.msra.mxu0 %v2861
    %3331 = vmatpush.bf16.msra.mxu0 %v2855
    %3332 = vmatpush.bf16.msra.mxu0 %v2849
    %3333 = vmatpush.bf16.msra.mxu0 %v2843
    %3334 = vmatpush.bf16.msra.mxu0 %v2837
    %3335 = vmatmul.bf16.gmra.mxu0 %v2933
    %v3336 = vpop.f32.mrf.mxu0
    %v3337 = vadd.f32 %v3323, %v3336
    %v3338 = vpop.f32.mrf.mxu0
    %v3339 = vadd.f32 %v3325, %v3338
    %3340 = vdwg.mxu0
    %3341 = vmatpush.bf16.msra.mxu0 %v2927
    %3342 = vmatpush.bf16.msra.mxu0 %v2921
    %3343 = vmatpush.bf16.msra.mxu0 %v2915
    %3344 = vmatpush.bf16.msra.mxu0 %v2909
    %3345 = vmatpush.bf16.msra.mxu0 %v2903
    %3346 = vmatpush.bf16.msra.mxu0 %v2897
    %3347 = vmatpush.bf16.msra.mxu0 %v2891
    %3348 = vmatpush.bf16.msra.mxu0 %v2885
    %3349 = vmatmul.bf16.gmra.mxu0 %v2934
    %v3350 = vpop.f32.mrf.mxu0
    %v3351 = vadd.f32 %v3337, %v3350
    %v3352 = vpop.f32.mrf.mxu0
    %v3353 = vadd.f32 %v3339, %v3352
    %3354 = vdwg.mxu0
    %3355 = vmatpush.bf16.msra.mxu0 %v2688
    %3356 = vmatpush.bf16.msra.mxu0 %v2682
    %3357 = vmatpush.bf16.msra.mxu0 %v2676
    %3358 = vmatpush.bf16.msra.mxu0 %v2670
    %3359 = vmatpush.bf16.msra.mxu0 %v2664
    %3360 = vmatpush.bf16.msra.mxu0 %v2658
    %3361 = vmatpush.bf16.msra.mxu0 %v2652
    %3362 = vmatpush.bf16.msra.mxu0 %v2646
    %3363 = vmatmul.bf16.gmra.mxu0 %v2929
    %v3364 = vpop.f32.mrf.mxu0
    %v3365 = vadd.f32 0.0, %v3364
    %v3366 = vpop.f32.mrf.mxu0
    %v3367 = vadd.f32 0.0, %v3366
    %3368 = vdwg.mxu0
    %3369 = vmatpush.bf16.msra.mxu0 %v2736
    %3370 = vmatpush.bf16.msra.mxu0 %v2730
    %3371 = vmatpush.bf16.msra.mxu0 %v2724
    %3372 = vmatpush.bf16.msra.mxu0 %v2718
    %3373 = vmatpush.bf16.msra.mxu0 %v2712
    %3374 = vmatpush.bf16.msra.mxu0 %v2706
    %3375 = vmatpush.bf16.msra.mxu0 %v2700
    %3376 = vmatpush.bf16.msra.mxu0 %v2694
    %3377 = vmatmul.bf16.gmra.mxu0 %v2930
    %v3378 = vpop.f32.mrf.mxu0
    %v3379 = vadd.f32 %v3365, %v3378
    %v3380 = vpop.f32.mrf.mxu0
    %v3381 = vadd.f32 %v3367, %v3380
    %3382 = vdwg.mxu0
    %3383 = vmatpush.bf16.msra.mxu0 %v2784
    %3384 = vmatpush.bf16.msra.mxu0 %v2778
    %3385 = vmatpush.bf16.msra.mxu0 %v2772
    %3386 = vmatpush.bf16.msra.mxu0 %v2766
    %3387 = vmatpush.bf16.msra.mxu0 %v2760
    %3388 = vmatpush.bf16.msra.mxu0 %v2754
    %3389 = vmatpush.bf16.msra.mxu0 %v2748
    %3390 = vmatpush.bf16.msra.mxu0 %v2742
    %3391 = vmatmul.bf16.gmra.mxu0 %v2931
    %v3392 = vpop.f32.mrf.mxu0
    %v3393 = vadd.f32 %v3379, %v3392
    %v3394 = vpop.f32.mrf.mxu0
    %v3395 = vadd.f32 %v3381, %v3394
    %3396 = vdwg.mxu0
    %3397 = vmatpush.bf16.msra.mxu0 %v2832
    %3398 = vmatpush.bf16.msra.mxu0 %v2826
    %3399 = vmatpush.bf16.msra.mxu0 %v2820
    %3400 = vmatpush.bf16.msra.mxu0 %v2814
    %3401 = vmatpush.bf16.msra.mxu0 %v2808
    %3402 = vmatpush.bf16.msra.mxu0 %v2802
    %3403 = vmatpush.bf16.msra.mxu0 %v2796
    %3404 = vmatpush.bf16.msra.mxu0 %v2790
    %3405 = vmatmul.bf16.gmra.mxu0 %v2932
    %v3406 = vpop.f32.mrf.mxu0
    %v3407 = vadd.f32 %v3393, %v3406
    %v3408 = vpop.f32.mrf.mxu0
    %v3409 = vadd.f32 %v3395, %v3408
    %3410 = vdwg.mxu0
    %3411 = vmatpush.bf16.msra.mxu0 %v2880
    %3412 = vmatpush.bf16.msra.mxu0 %v2874
    %3413 = vmatpush.bf16.msra.mxu0 %v2868
    %3414 = vmatpush.bf16.msra.mxu0 %v2862
    %3415 = vmatpush.bf16.msra.mxu0 %v2856
    %3416 = vmatpush.bf16.msra.mxu0 %v2850
    %3417 = vmatpush.bf16.msra.mxu0 %v2844
    %3418 = vmatpush.bf16.msra.mxu0 %v2838
    %3419 = vmatmul.bf16.gmra.mxu0 %v2933
    %v3420 = vpop.f32.mrf.mxu0
    %v3421 = vadd.f32 %v3407, %v3420
    %v3422 = vpop.f32.mrf.mxu0
    %v3423 = vadd.f32 %v3409, %v3422
    %3424 = vdwg.mxu0
    %3425 = vmatpush.bf16.msra.mxu0 %v2928
    %3426 = vmatpush.bf16.msra.mxu0 %v2922
    %3427 = vmatpush.bf16.msra.mxu0 %v2916
    %3428 = vmatpush.bf16.msra.mxu0 %v2910
    %3429 = vmatpush.bf16.msra.mxu0 %v2904
    %3430 = vmatpush.bf16.msra.mxu0 %v2898
    %3431 = vmatpush.bf16.msra.mxu0 %v2892
    %3432 = vmatpush.bf16.msra.mxu0 %v2886
    %3433 = vmatmul.bf16.gmra.mxu0 %v2934
    %v3434 = vpop.f32.mrf.mxu0
    %v3435 = vadd.f32 %v3421, %v3434
    %v3436 = vpop.f32.mrf.mxu0
    %v3437 = vadd.f32 %v3423, %v3436
    %3438 = vdwg.mxu0
    %v3440 = vperm.slane %v93, 0
    %v3441 = vperm.slane %v93, 1
    %v3442 = vperm.slane %v93, 2
    %v3443 = vperm.slane %v93, 3
    %v3444 = vperm.slane %v93, 4
    %v3445 = vperm.slane %v93, 5
    %v3452 = vmul.f32 %v3015, %v3440
    %v3453 = vmul.f32 %v3099, %v3441
    %v3454 = vmul.f32 %v3183, %v3442
    %v3455 = vmul.f32 %v3267, %v3443
    %v3456 = vmul.f32 %v3351, %v3444
    %v3457 = vmul.f32 %v3435, %v3445
    %v3458 = vmul.f32 %v3017, %v3440
    %v3459 = vmul.f32 %v3101, %v3441
    %v3460 = vmul.f32 %v3185, %v3442
    %v3461 = vmul.f32 %v3269, %v3443
    %v3462 = vmul.f32 %v3353, %v3444
    %v3463 = vmul.f32 %v3437, %v3445
    %v3465 = vperm.slane %v97, 0
    %v3466 = vperm.slane %v97, 1
    %v3467 = vperm.slane %v97, 2
    %v3468 = vperm.slane %v97, 3
    %v3469 = vperm.slane %v97, 4
    %v3470 = vperm.slane %v97, 5
    %v3477 = vadd.f32 %v3452, %v3465
    %v3478 = vadd.f32 %v3453, %v3466
    %v3479 = vadd.f32 %v3454, %v3467
    %v3480 = vadd.f32 %v3455, %v3468
    %v3481 = vadd.f32 %v3456, %v3469
    %v3482 = vadd.f32 %v3457, %v3470
    %v3483 = vadd.f32 %v3458, %v3465
    %v3484 = vadd.f32 %v3459, %v3466
    %v3485 = vadd.f32 %v3460, %v3467
    %v3486 = vadd.f32 %v3461, %v3468
    %v3487 = vadd.f32 %v3462, %v3469
    %v3488 = vadd.f32 %v3463, %v3470
    %v3489 = vmax.f32 %v3477, 0.0
    %v3490 = vmax.f32 %v3478, 0.0
    %v3491 = vmax.f32 %v3479, 0.0
    %v3492 = vmax.f32 %v3480, 0.0
    %v3493 = vmax.f32 %v3481, 0.0
    %v3494 = vmax.f32 %v3482, 0.0
    %v3495 = vmax.f32 %v3483, 0.0
    %v3496 = vmax.f32 %v3484, 0.0
    %v3497 = vmax.f32 %v3485, 0.0
    %v3498 = vmax.f32 %v3486, 0.0
    %v3499 = vmax.f32 %v3487, 0.0
    %v3500 = vmax.f32 %v3488, 0.0
    %v3501 = vld [vmem:[%s4] sm:$0x3f]
    %v3503 = vperm.slane %v3501, 0
    %v3504 = vperm.slane %v3501, 1
    %v3505 = vperm.slane %v3501, 2
    %v3506 = vperm.slane %v3501, 3
    %v3507 = vperm.slane %v3501, 4
    %v3508 = vperm.slane %v3501, 5
    %v3515 = vmul.f32 %v3489, %v3503
    %v3516 = vmul.f32 %v3490, %v3504
    %v3517 = vmul.f32 %v3491, %v3505
    %v3518 = vmul.f32 %v3492, %v3506
    %v3519 = vmul.f32 %v3493, %v3507
    %v3520 = vmul.f32 %v3494, %v3508
    %v3521 = vmul.f32 %v3495, %v3503
    %v3522 = vmul.f32 %v3496, %v3504
    %v3523 = vmul.f32 %v3497, %v3505
    %v3524 = vmul.f32 %v3498, %v3506
    %v3525 = vmul.f32 %v3499, %v3507
    %v3526 = vmul.f32 %v3500, %v3508
    %v3527 = vadd.f32 %v3515, %v3516
    %v3528 = vadd.f32 %v3527, %v3517
    %v3529 = vadd.f32 %v3528, %v3518
    %v3530 = vadd.f32 %v3529, %v3519
    %v3531 = vadd.f32 %v3530, %v3520
    %3532 = vadd.xlane.f32.xlu0 %v3531
    %v3533 = vpop.xlane.xlu0 %3532
    %v3534 = vadd.f32 %v3521, %v3522
    %v3535 = vadd.f32 %v3534, %v3523
    %v3536 = vadd.f32 %v3535, %v3524
    %v3537 = vadd.f32 %v3536, %v3525
    %v3538 = vadd.f32 %v3537, %v3526
    %3539 = vadd.xlane.f32.xlu0 %v3538
    %v3540 = vpop.xlane.xlu0 %3539
    %v3541 = vadd.f32 %v3533, %v98
    %v3542 = vadd.f32 %v3540, %v98
    %3543 = vst [vmem:[%s6] sm:$0xff] %v3541
    %3544 = vst [vmem:[%s6 + $0x8] sm:$0xff] %v3542
    // Predicated region
    $region42: #{qnet_forward.1} parent=1 // pred_check
      _
    $region43: #{qnet_forward.1} parent=1 // pred_check_branch
      %3546 = sbr.rel (0) target = $region45
    $region44: #{qnet_forward.1} parent=1 // pred_region
      _
    $region45: #{qnet_forward.1} parent=1 // pred_fallthru
      _
    // Predicated region
    $region46: #{qnet_forward.1} parent=1 // pred_check
      _
    $region47: #{qnet_forward.1} parent=1 // pred_check_branch
      %3548 = sbr.rel (0) target = $region49
    $region48: #{qnet_forward.1} parent=1 // pred_region
      _
    $region49: #{qnet_forward.1} parent=1 // pred_fallthru
      _
    %3549 = vsyncpa [#allocation3], 1
    %3550 = vsyncpa [#allocation5], 1
    %3551 = vsyncpa [#allocation8], 1

</llo_original>
